<compile_context>
chip_gen: v7x
topology: tpu7x:2x2x1
jax: 0.10.0
libtpu: 0.0.40
codegen_flags: <defaults>
</compile_context>

<pallas_src>
import functools

import jax
import jax.numpy as jnp
import numpy as np
from jax import lax
from jax.experimental import pallas as pl
from jax.experimental.pallas import tpu as pltpu

EPS = 1e-5


def _round_up(a, b):
    return (a + b - 1) // b * b


def _cparams(block_bytes, extra_bytes=0):
    """CompilerParams with an explicit scoped-VMEM limit derived from tile sizes."""
    limit = int(2 * block_bytes + extra_bytes) + (8 << 20)   # 2x for double buffering + temps
    limit = max(32 << 20, min(limit, 64 << 20))              # stay within v7x's 64 MiB VMEM
    return pltpu.CompilerParams(
        dimension_semantics=("parallel",),                    # tiles shard across TCs (v7x)
        vmem_limit_bytes=limit)


# ----------------------------------------------------------------------------- kernels
def _conv1x1_stats_kernel(x_ref, w_ref, y_ref, st_ref):
    """y = x @ w (bf16 MXU, f32 acc) + per-tile per-channel [sum, sum_sq] for BN."""
    y = jnp.dot(x_ref[...].astype(jnp.bfloat16), w_ref[...],
                preferred_element_type=jnp.float32)           # [tm, Cout] f32
    y_ref[...] = y
    s = jnp.sum(y, axis=0, keepdims=True)                     # one-pass stats
    ss = jnp.sum(y * y, axis=0, keepdims=True)
    st_ref[...] = jnp.concatenate([s, ss], axis=0)[None]      # [1, 2, Cout]


def _shift2d(a, sh, sw, zrow, zcol):
    """b[h, w] = a[h+sh, w+sw] with zero padding outside; sh, sw in {-1, 0, 1} (static)."""
    H, W = a.shape[0], a.shape[1]
    if sh == -1:
        a = jnp.concatenate([zrow, a[:H - 1]], axis=0)
    elif sh == 1:
        a = jnp.concatenate([a[1:], zrow], axis=0)
    if sw == -1:
        a = jnp.concatenate([zcol, a[:, :W - 1]], axis=1)
    elif sw == 1:
        a = jnp.concatenate([a[:, 1:]], axis=1) if False else jnp.concatenate([a[:, 1:], zcol], axis=1)
    return a


def _bn_relu_conv3x3_stats_kernel(y1_ref, w2_ref, sc_ref, bi_ref, y2_ref, st_ref,
                                  *, H, W, C):
    """bn1+relu, then 3x3 / stride-1 / pad-1 conv as one im2col matmul (per image)."""
    sc = sc_ref[...].reshape(1, 1, C)
    bi = bi_ref[...].reshape(1, 1, C)
    a = jnp.maximum(y1_ref[0] * sc + bi, 0.0).astype(jnp.bfloat16)   # [H, W, C]

    zrow = jnp.zeros((1, W, C), jnp.bfloat16)
    zcol = jnp.zeros((H, 1, C), jnp.bfloat16)
    taps = [_shift2d(a, dh - 1, dw - 1, zrow, zcol)
            for dh in range(3) for dw in range(3)]                    # 9 x [H, W, C]
    patches = jnp.concatenate(taps, axis=-1).reshape(H * W, 9 * C)    # im2col, bf16
    y = jnp.dot(patches, w2_ref[...], preferred_element_type=jnp.float32)  # [H*W, C]
    y2_ref[0] = y
    s = jnp.sum(y, axis=0, keepdims=True)
    ss = jnp.sum(y * y, axis=0, keepdims=True)
    st_ref[...] = jnp.concatenate([s, ss], axis=0)[None]


def _bn_relu_conv1x1_stats_kernel(y_ref, w_ref, sc_ref, bi_ref, o_ref, st_ref,
                                  *, m_valid, m_total, tile_m):
    a = jnp.maximum(y_ref[...] * sc_ref[...] + bi_ref[...], 0.0)      # [tm, Cin] f32
    if m_total != m_valid:
        # Zero padded rows (BN bias would otherwise leak into the global stats).
        row = pl.program_id(0) * tile_m + lax.broadcasted_iota(jnp.int32, a.shape, 0)
        a = jnp.where(row < m_valid, a, 0.0)
    y = jnp.dot(a.astype(jnp.bfloat16), w_ref[...],
                preferred_element_type=jnp.float32)                   # [tm, Cout]
    o_ref[...] = y
    s = jnp.sum(y, axis=0, keepdims=True)
    ss = jnp.sum(y * y, axis=0, keepdims=True)
    st_ref[...] = jnp.concatenate([s, ss], axis=0)[None]


def _bn_add_relu_kernel(y_ref, x_ref, sc_ref, bi_ref, o_ref):
    o_ref[...] = jnp.maximum(y_ref[...] * sc_ref[...] + bi_ref[...] + x_ref[...], 0.0)


# ----------------------------------------------------------------------------- wrapper
def _bn_scale_bias(stats, count, gamma, beta):
    """Fold training-mode BN into per-channel scale/bias from one-pass partial sums."""
    s = jnp.sum(stats[:, 0, :], axis=0)
    ss = jnp.sum(stats[:, 1, :], axis=0)
    mean = s / count
    var = jnp.maximum(ss / count - mean * mean, 0.0)          # biased variance
    scale = gamma.reshape(1, -1) * lax.rsqrt(var + EPS)
    bias = beta.reshape(1, -1) - mean * scale
    return scale.astype(jnp.float32), bias.astype(jnp.float32)


@functools.partial(jax.jit, static_argnames=("tile_m",))
def bottleneck_forward_nhwc(x, params, *, tile_m=512):
    """Fused Bottleneck forward. x: [N, H, W, Cin] f32 -> [N, H, W, Cout] f32."""
    x = x.astype(jnp.float32)
    N, H, W, Cin = x.shape
    Cmid = params["w1"].shape[1]
    Cout = params["w3"].shape[1]
    assert Cout == Cin, "stride=1, downsample=None requires inplanes == planes*4"

    M = N * H * W
    tm = _round_up(min(tile_m, _round_up(M, 8)), 8)
    m_pad = _round_up(M, tm)
    n_tiles = m_pad // tm
    f32 = jnp.float32

    # Weights cast once to bf16 (MXU inputs); conv2 weight pre-reshaped to im2col layout.
    w1 = params["w1"].astype(jnp.bfloat16)                          # [Cin,    Cmid]
    w2 = params["w2"].reshape(9 * Cmid, Cmid).astype(jnp.bfloat16)  # [9*Cmid, Cmid]
    w3 = params["w3"].astype(jnp.bfloat16)                          # [Cmid,   Cout]

    x_flat = x.reshape(M, Cin)
    x_pad = x_flat if m_pad == M else jnp.pad(x_flat, ((0, m_pad - M), (0, 0)))

    # ---- call 1: conv1 (1x1) + BN1 partial stats, tiled over M -----------------
    blk = tm * Cin * 4 + Cin * Cmid * 2 + tm * Cmid * 4 + 2 * Cmid * 4
    y1_pad, st1 = pl.pallas_call(
        _conv1x1_stats_kernel,
        out_shape=(jax.ShapeDtypeStruct((m_pad, Cmid), f32),
                   jax.ShapeDtypeStruct((n_tiles, 2, Cmid), f32)),
        grid=(n_tiles,),
        in_specs=[pl.BlockSpec((tm, Cin), lambda i: (i, 0)),
                  pl.BlockSpec((Cin, Cmid), lambda i: (0, 0))],
        out_specs=(pl.BlockSpec((tm, Cmid), lambda i: (i, 0)),
                   pl.BlockSpec((1, 2, Cmid), lambda i: (i, 0, 0))),
        compiler_params=_cparams(blk, extra_bytes=tm * Cin * 2),
    )(x_pad, w1)
    scale1, bias1 = _bn_scale_bias(st1, M, params["g1"], params["b1"])

    # ---- call 2: bn1+relu + conv2 (3x3 via im2col) + BN2 partial stats, per image
    y1_img = (y1_pad if m_pad == M else y1_pad[:M]).reshape(N, H, W, Cmid)
    blk = 2 * H * W * Cmid * 4 + 9 * Cmid * Cmid * 2 + 4 * Cmid * 4
    extra = H * W * 9 * Cmid * 2 * 2 + H * W * Cmid * 8   # im2col taps / patches temporaries
    y2_img, st2 = pl.pallas_call(
        functools.partial(_bn_relu_conv3x3_stats_kernel, H=H, W=W, C=Cmid),
        out_shape=(jax.ShapeDtypeStruct((N, H * W, Cmid), f32),
                   jax.ShapeDtypeStruct((N, 2, Cmid), f32)),
        grid=(N,),
        in_specs=[pl.BlockSpec((1, H, W, Cmid), lambda n: (n, 0, 0, 0)),
                  pl.BlockSpec((9 * Cmid, Cmid), lambda n: (0, 0)),
                  pl.BlockSpec((1, Cmid), lambda n: (0, 0)),
                  pl.BlockSpec((1, Cmid), lambda n: (0, 0))],
        out_specs=(pl.BlockSpec((1, H * W, Cmid), lambda n: (n, 0, 0)),
                   pl.BlockSpec((1, 2, Cmid), lambda n: (n, 0, 0))),
        compiler_params=_cparams(blk, extra_bytes=extra),
    )(y1_img, w2, scale1, bias1)
    scale2, bias2 = _bn_scale_bias(st2, M, params["g2"], params["b2"])

    # ---- call 3: bn2+relu + conv3 (1x1) + BN3 partial stats, tiled over M -------
    y2_flat = y2_img.reshape(M, Cmid)
    y2_pad = y2_flat if m_pad == M else jnp.pad(y2_flat, ((0, m_pad - M), (0, 0)))
    blk = tm * Cmid * 4 + Cmid * Cout * 2 + tm * Cout * 4 + 2 * Cout * 4
    y3_pad, st3 = pl.pallas_call(
        functools.partial(_bn_relu_conv1x1_stats_kernel,
                          m_valid=M, m_total=m_pad, tile_m=tm),
        out_shape=(jax.ShapeDtypeStruct((m_pad, Cout), f32),
                   jax.ShapeDtypeStruct((n_tiles, 2, Cout), f32)),
        grid=(n_tiles,),
        in_specs=[pl.BlockSpec((tm, Cmid), lambda i: (i, 0)),
                  pl.BlockSpec((Cmid, Cout), lambda i: (0, 0)),
                  pl.BlockSpec((1, Cmid), lambda i: (0, 0)),
                  pl.BlockSpec((1, Cmid), lambda i: (0, 0))],
        out_specs=(pl.BlockSpec((tm, Cout), lambda i: (i, 0)),
                   pl.BlockSpec((1, 2, Cout), lambda i: (i, 0, 0))),
        compiler_params=_cparams(blk, extra_bytes=tm * Cmid * 2),
    )(y2_pad, w3, scale2, bias2)
    scale3, bias3 = _bn_scale_bias(st3, M, params["g3"], params["b3"])

    # ---- call 4: bn3 + residual add + relu, tiled over M ------------------------
    blk = 3 * tm * Cout * 4 + 2 * Cout * 4
    out_pad = pl.pallas_call(
        _bn_add_relu_kernel,
        out_shape=jax.ShapeDtypeStruct((m_pad, Cout), f32),
        grid=(n_tiles,),
        in_specs=[pl.BlockSpec((tm, Cout), lambda i: (i, 0)),
                  pl.BlockSpec((tm, Cout), lambda i: (i, 0)),
                  pl.BlockSpec((1, Cout), lambda i: (0, 0)),
                  pl.BlockSpec((1, Cout), lambda i: (0, 0))],
        out_specs=pl.BlockSpec((tm, Cout), lambda i: (i, 0)),
        compiler_params=_cparams(blk),
    )(y3_pad, x_pad, scale3, bias3)

    out_flat = out_pad if m_pad == M else out_pad[:M]
    return out_flat.reshape(N, H, W, Cout)


def bottleneck_pallas(x_nchw, params, *, tile_m=512):
    """NCHW wrapper for PyTorch parity. In a full network keep activations NHWC
    end-to-end and call bottleneck_forward_nhwc directly (avoids 2 HBM round trips)."""
    x = jnp.transpose(x_nchw, (0, 2, 3, 1))
    out = bottleneck_forward_nhwc(x, params, tile_m=tile_m)
    return jnp.transpose(out, (0, 3, 1, 2))


# ----------------------------------------------------------------------------- reference
def bottleneck_reference(x_nchw, params):
    """Pure-JAX f32 reference mirroring the PyTorch forward (training-mode BN)."""
    x = jnp.transpose(x_nchw, (0, 2, 3, 1)).astype(jnp.float32)

    def bn(y, g, b, relu):
        m = jnp.mean(y, axis=(0, 1, 2))
        v = jnp.mean((y - m) ** 2, axis=(0, 1, 2))
        yn = (y - m) * (g.reshape(-1) / jnp.sqrt(v + EPS)) + b.reshape(-1)
        return jnp.maximum(yn, 0.0) if relu else yn

    y = jnp.einsum("nhwc,cd->nhwd", x, params["w1"])
    y = bn(y, params["g1"], params["b1"], relu=True)
    y = lax.conv_general_dilated(
        y, params["w2"], window_strides=(1, 1), padding="SAME",
        dimension_numbers=("NHWC", "HWIO", "NHWC"))
    y = bn(y, params["g2"], params["b2"], relu=True)
    y = jnp.einsum("nhwc,cd->nhwd", y, params["w3"])
    y = bn(y, params["g3"], params["b3"], relu=False)
    y = jnp.maximum(y + x, 0.0)
    return jnp.transpose(y, (0, 3, 1, 2))


def init_params(key, inplanes, planes):
    expansion = 4
    cout = planes * expansion
    ks = jax.random.split(key, 7)
    w1 = 0.1 * jax.random.normal(ks[0], (inplanes, planes), jnp.float32)
    w2 = 0.1 * jax.random.normal(ks[1], (3, 3, planes, planes), jnp.float32)
    w3 = 0.1 * jax.random.normal(ks[2], (planes, cout), jnp.float32)
    g1 = 1.0 + 0.1 * jax.random.normal(ks[3], (1, planes), jnp.float32)
    b1 = 0.05 * jax.random.normal(ks[4], (1, planes), jnp.float32)
    g2 = jnp.ones((1, planes), jnp.float32)
    b2 = jnp.zeros((1, planes), jnp.float32)
    g3 = 1.0 + 0.1 * jax.random.normal(ks[5], (1, cout), jnp.float32)
    b3 = 0.05 * jax.random.normal(ks[6], (1, cout), jnp.float32)
    return dict(w1=w1, w2=w2, w3=w3, g1=g1, b1=b1, g2=g2, b2=b2, g3=g3, b3=b3)


if __name__ == "__main__":
    key = jax.random.PRNGKey(0)
    k_x, k_p = jax.random.split(key)

    N, inplanes, planes, H, W = 2, 16, 4, 16, 16   # inplanes == planes * 4
    x = jax.random.normal(k_x, (N, inplanes, H, W), jnp.float32)
    params = init_params(k_p, inplanes, planes)

    # tile_m=128 so the small test still exercises a 4-tile grid per 1x1 call.
    out = jax.block_until_ready(bottleneck_pallas(x, params, tile_m=128))
    ref = jax.block_until_ready(bottleneck_reference(x, params))

    assert out.shape == (N, inplanes, H, W)
    # Tolerance accounts for bf16 MXU matmuls (f32 accumulation) vs the f32 reference.
    np.testing.assert_allclose(np.asarray(out), np.asarray(ref), rtol=5e-2, atol=5e-2)
    print("KERNEL_OK")
</pallas_src>

<mosaic_0001>
module attributes {stable_mosaic.version = 11 : i64} {
  func.func @_conv1x1_stats_kernel(%arg0: i32, %arg1: memref<128x16xf32, #tpu.memory_space<vmem>>, %arg2: memref<16x4xbf16, #tpu.memory_space<vmem>>, %arg3: memref<128x4xf32, #tpu.memory_space<vmem>>, %arg4: memref<1x2x4xf32, #tpu.memory_space<vmem>>) attributes {dimension_semantics = [#tpu.dimension_semantics<parallel>], iteration_bounds = array<i64: 4>, scalar_prefetch = 0 : i64, scratch_operands = 0 : i64, tpu.core_type = #tpu.core_type<tc>, window_params = [{transform_indices = @transform_0, window_bounds = array<i64: 128, 16>}, {pipeline_mode = #tpu.pipeline_mode<synchronous>, transform_indices = @transform_1, window_bounds = array<i64: 16, 4>}, {transform_indices = @transform_2, window_bounds = array<i64: 128, 4>}, {transform_indices = @transform_3, window_bounds = array<i64: 1, 2, 4>}]} {
    %c0 = arith.constant 0 : index
    %c0_0 = arith.constant 0 : index
    %0 = vector.load %arg1[%c0, %c0_0] : memref<128x16xf32, #tpu.memory_space<vmem>>, vector<128x16xf32>
    %1 = arith.truncf %0 : vector<128x16xf32> to vector<128x16xbf16>
    %c0_1 = arith.constant 0 : index
    %c0_2 = arith.constant 0 : index
    %2 = vector.load %arg2[%c0_1, %c0_2] : memref<16x4xbf16, #tpu.memory_space<vmem>>, vector<16x4xbf16>
    %cst = arith.constant dense<0.000000e+00> : vector<128x4xf32>
    %3 = tpu.matmul %1, %2, %cst {dimension_numbers = #tpu.dot_dimension_numbers<[1], [0], [0], [1], [0, 0, 1, 1], [], []>} : vector<128x16xbf16>, vector<16x4xbf16>, vector<128x4xf32> -> vector<128x4xf32>
    %c0_3 = arith.constant 0 : index
    %c0_4 = arith.constant 0 : index
    %4 = vector.load %arg3[%c0_3, %c0_4] : memref<128x4xf32, #tpu.memory_space<vmem>>, vector<128x4xf32>
    tpu.vector_store %arg3[%c0_3, %c0_4], %3 {strides = array<i32>} : memref<128x4xf32, #tpu.memory_space<vmem>>, vector<128x4xf32>,
    %cst_5 = arith.constant dense<0.000000e+00> : vector<4xf32>
    %5 = vector.multi_reduction <add>, %3, %cst_5 [0] : vector<128x4xf32> to vector<4xf32>
    %6 = vector.shape_cast %5 : vector<4xf32> to vector<1x4xf32>
    %7 = arith.mulf %3, %3 : vector<128x4xf32>
    %cst_6 = arith.constant dense<0.000000e+00> : vector<4xf32>
    %8 = vector.multi_reduction <add>, %7, %cst_6 [0] : vector<128x4xf32> to vector<4xf32>
    %9 = vector.shape_cast %8 : vector<4xf32> to vector<1x4xf32>
    %10 = tpu.concatenate %6, %9 in 0 : vector<1x4xf32>, vector<1x4xf32> -> vector<2x4xf32>
    %11 = vector.shape_cast %10 : vector<2x4xf32> to vector<1x2x4xf32>
    %c0_7 = arith.constant 0 : index
    %c0_8 = arith.constant 0 : index
    %c0_9 = arith.constant 0 : index
    %12 = vector.load %arg4[%c0_7, %c0_8, %c0_9] : memref<1x2x4xf32, #tpu.memory_space<vmem>>, vector<1x2x4xf32>
    tpu.vector_store %arg4[%c0_7, %c0_8, %c0_9], %11 {strides = array<i32>} : memref<1x2x4xf32, #tpu.memory_space<vmem>>, vector<1x2x4xf32>,
    return
  }
  func.func @transform_0(%arg0: i32) -> (i32, i32) {
    %c0_i32 = arith.constant 0 : i32
    %c0_i32_0 = arith.constant 0 : i32
    return %arg0, %c0_i32 : i32, i32
  }
  func.func @transform_1(%arg0: i32) -> (i32, i32) {
    %c0_i32 = arith.constant 0 : i32
    %c0_i32_0 = arith.constant 0 : i32
    %c0_i32_1 = arith.constant 0 : i32
    return %c0_i32, %c0_i32_0 : i32, i32
  }
  func.func @transform_2(%arg0: i32) -> (i32, i32) {
    %c0_i32 = arith.constant 0 : i32
    %c0_i32_0 = arith.constant 0 : i32
    return %arg0, %c0_i32 : i32, i32
  }
  func.func @transform_3(%arg0: i32) -> (i32, i32, i32) {
    %c0_i32 = arith.constant 0 : i32
    %c0_i32_0 = arith.constant 0 : i32
    %c0_i32_1 = arith.constant 0 : i32
    return %arg0, %c0_i32, %c0_i32_0 : i32, i32, i32
  }
}

module attributes {stable_mosaic.version = 11 : i64} {
  func.func @_bn_relu_conv3x3_stats_kernel(%arg0: i32, %arg1: memref<1x16x16x4xf32, #tpu.memory_space<vmem>>, %arg2: memref<36x4xbf16, #tpu.memory_space<vmem>>, %arg3: memref<1x4xf32, #tpu.memory_space<vmem>>, %arg4: memref<1x4xf32, #tpu.memory_space<vmem>>, %arg5: memref<1x256x4xf32, #tpu.memory_space<vmem>>, %arg6: memref<1x2x4xf32, #tpu.memory_space<vmem>>) attributes {dimension_semantics = [#tpu.dimension_semantics<parallel>], iteration_bounds = array<i64: 2>, scalar_prefetch = 0 : i64, scratch_operands = 0 : i64, tpu.core_type = #tpu.core_type<tc>, window_params = [{transform_indices = @transform_0, window_bounds = array<i64: 1, 16, 16, 4>}, {pipeline_mode = #tpu.pipeline_mode<synchronous>, transform_indices = @transform_1, window_bounds = array<i64: 36, 4>}, {pipeline_mode = #tpu.pipeline_mode<synchronous>, transform_indices = @transform_2, window_bounds = array<i64: 1, 4>}, {pipeline_mode = #tpu.pipeline_mode<synchronous>, transform_indices = @transform_3, window_bounds = array<i64: 1, 4>}, {transform_indices = @transform_4, window_bounds = array<i64: 1, 256, 4>}, {transform_indices = @transform_5, window_bounds = array<i64: 1, 2, 4>}]} {
    %c0 = arith.constant 0 : index
    %c0_0 = arith.constant 0 : index
    %0 = vector.load %arg3[%c0, %c0_0] : memref<1x4xf32, #tpu.memory_space<vmem>>, vector<1x4xf32>
    %1 = vector.shape_cast %0 : vector<1x4xf32> to vector<1x1x4xf32>
    %c0_1 = arith.constant 0 : index
    %c0_2 = arith.constant 0 : index
    %2 = vector.load %arg4[%c0_1, %c0_2] : memref<1x4xf32, #tpu.memory_space<vmem>>, vector<1x4xf32>
    %3 = vector.shape_cast %2 : vector<1x4xf32> to vector<1x1x4xf32>
    %c0_3 = arith.constant 0 : index
    %c0_4 = arith.constant 0 : index
    %c0_5 = arith.constant 0 : index
    %c0_6 = arith.constant 0 : index
    %4 = vector.load %arg1[%c0_3, %c0_4, %c0_5, %c0_6] : memref<1x16x16x4xf32, #tpu.memory_space<vmem>>, vector<1x16x16x4xf32>
    %5 = vector.shape_cast %4 : vector<1x16x16x4xf32> to vector<16x16x4xf32>
    %6 = vector.broadcast %1 : vector<1x1x4xf32> to vector<16x16x4xf32>
    %7 = arith.mulf %5, %6 : vector<16x16x4xf32>
    %8 = vector.broadcast %3 : vector<1x1x4xf32> to vector<16x16x4xf32>
    %9 = arith.addf %7, %8 : vector<16x16x4xf32>
    %cst = arith.constant 0.000000e+00 : f32
    %10 = vector.broadcast %cst : f32 to vector<16x16x4xf32>
    %11 = arith.maximumf %9, %10 : vector<16x16x4xf32>
    %12 = arith.truncf %11 : vector<16x16x4xf32> to vector<16x16x4xbf16>
    %cst_7 = arith.constant 0.000000e+00 : bf16
    %13 = vector.broadcast %cst_7 : bf16 to vector<1x16x4xbf16>
    %cst_8 = arith.constant 0.000000e+00 : bf16
    %14 = vector.broadcast %cst_8 : bf16 to vector<16x1x4xbf16>
    %15 = vector.extract_strided_slice %12 {offsets = [0, 0, 0], sizes = [15, 16, 4], strides = [1, 1, 1]} : vector<16x16x4xbf16> to vector<15x16x4xbf16>
    %16 = tpu.concatenate %13, %15 in 0 : vector<1x16x4xbf16>, vector<15x16x4xbf16> -> vector<16x16x4xbf16>
    %17 = vector.extract_strided_slice %16 {offsets = [0, 0, 0], sizes = [16, 15, 4], strides = [1, 1, 1]} : vector<16x16x4xbf16> to vector<16x15x4xbf16>
    %18 = tpu.concatenate %14, %17 in 1 : vector<16x1x4xbf16>, vector<16x15x4xbf16> -> vector<16x16x4xbf16>
    %19 = vector.extract_strided_slice %12 {offsets = [0, 0, 0], sizes = [15, 16, 4], strides = [1, 1, 1]} : vector<16x16x4xbf16> to vector<15x16x4xbf16>
    %20 = tpu.concatenate %13, %19 in 0 : vector<1x16x4xbf16>, vector<15x16x4xbf16> -> vector<16x16x4xbf16>
    %21 = vector.extract_strided_slice %12 {offsets = [0, 0, 0], sizes = [15, 16, 4], strides = [1, 1, 1]} : vector<16x16x4xbf16> to vector<15x16x4xbf16>
    %22 = tpu.concatenate %13, %21 in 0 : vector<1x16x4xbf16>, vector<15x16x4xbf16> -> vector<16x16x4xbf16>
    %23 = vector.extract_strided_slice %22 {offsets = [0, 1, 0], sizes = [16, 15, 4], strides = [1, 1, 1]} : vector<16x16x4xbf16> to vector<16x15x4xbf16>
    %24 = tpu.concatenate %23, %14 in 1 : vector<16x15x4xbf16>, vector<16x1x4xbf16> -> vector<16x16x4xbf16>
    %25 = vector.extract_strided_slice %12 {offsets = [0, 0, 0], sizes = [16, 15, 4], strides = [1, 1, 1]} : vector<16x16x4xbf16> to vector<16x15x4xbf16>
    %26 = tpu.concatenate %14, %25 in 1 : vector<16x1x4xbf16>, vector<16x15x4xbf16> -> vector<16x16x4xbf16>
    %27 = vector.extract_strided_slice %12 {offsets = [0, 1, 0], sizes = [16, 15, 4], strides = [1, 1, 1]} : vector<16x16x4xbf16> to vector<16x15x4xbf16>
    %28 = tpu.concatenate %27, %14 in 1 : vector<16x15x4xbf16>, vector<16x1x4xbf16> -> vector<16x16x4xbf16>
    %29 = vector.extract_strided_slice %12 {offsets = [1, 0, 0], sizes = [15, 16, 4], strides = [1, 1, 1]} : vector<16x16x4xbf16> to vector<15x16x4xbf16>
    %30 = tpu.concatenate %29, %13 in 0 : vector<15x16x4xbf16>, vector<1x16x4xbf16> -> vector<16x16x4xbf16>
    %31 = vector.extract_strided_slice %30 {offsets = [0, 0, 0], sizes = [16, 15, 4], strides = [1, 1, 1]} : vector<16x16x4xbf16> to vector<16x15x4xbf16>
    %32 = tpu.concatenate %14, %31 in 1 : vector<16x1x4xbf16>, vector<16x15x4xbf16> -> vector<16x16x4xbf16>
    %33 = vector.extract_strided_slice %12 {offsets = [1, 0, 0], sizes = [15, 16, 4], strides = [1, 1, 1]} : vector<16x16x4xbf16> to vector<15x16x4xbf16>
    %34 = tpu.concatenate %33, %13 in 0 : vector<15x16x4xbf16>, vector<1x16x4xbf16> -> vector<16x16x4xbf16>
    %35 = vector.extract_strided_slice %12 {offsets = [1, 0, 0], sizes = [15, 16, 4], strides = [1, 1, 1]} : vector<16x16x4xbf16> to vector<15x16x4xbf16>
    %36 = tpu.concatenate %35, %13 in 0 : vector<15x16x4xbf16>, vector<1x16x4xbf16> -> vector<16x16x4xbf16>
    %37 = vector.extract_strided_slice %36 {offsets = [0, 1, 0], sizes = [16, 15, 4], strides = [1, 1, 1]} : vector<16x16x4xbf16> to vector<16x15x4xbf16>
    %38 = tpu.concatenate %37, %14 in 1 : vector<16x15x4xbf16>, vector<16x1x4xbf16> -> vector<16x16x4xbf16>
    %39 = tpu.concatenate %18, %20, %24, %26, %12, %28, %32, %34, %38 in 2 : vector<16x16x4xbf16>, vector<16x16x4xbf16>, vector<16x16x4xbf16>, vector<16x16x4xbf16>, vector<16x16x4xbf16>, vector<16x16x4xbf16>, vector<16x16x4xbf16>, vector<16x16x4xbf16>, vector<16x16x4xbf16> -> vector<16x16x36xbf16>
    %40 = vector.shape_cast %39 : vector<16x16x36xbf16> to vector<256x36xbf16>
    %c0_9 = arith.constant 0 : index
    %c0_10 = arith.constant 0 : index
    %41 = vector.load %arg2[%c0_9, %c0_10] : memref<36x4xbf16, #tpu.memory_space<vmem>>, vector<36x4xbf16>
    %cst_11 = arith.constant dense<0.000000e+00> : vector<256x4xf32>
    %42 = tpu.matmul %40, %41, %cst_11 {dimension_numbers = #tpu.dot_dimension_numbers<[1], [0], [0], [1], [0, 0, 1, 1], [], []>} : vector<256x36xbf16>, vector<36x4xbf16>, vector<256x4xf32> -> vector<256x4xf32>
    %c0_12 = arith.constant 0 : index
    %c0_13 = arith.constant 0 : index
    %c0_14 = arith.constant 0 : index
    %43 = vector.load %arg5[%c0_12, %c0_13, %c0_14] : memref<1x256x4xf32, #tpu.memory_space<vmem>>, vector<1x256x4xf32>
    %44 = vector.shape_cast %43 : vector<1x256x4xf32> to vector<256x4xf32>
    %45 = vector.shape_cast %42 : vector<256x4xf32> to vector<1x256x4xf32>
    tpu.vector_store %arg5[%c0_12, %c0_13, %c0_14], %45 {strides = array<i32>} : memref<1x256x4xf32, #tpu.memory_space<vmem>>, vector<1x256x4xf32>,
    %cst_15 = arith.constant dense<0.000000e+00> : vector<4xf32>
    %46 = vector.multi_reduction <add>, %42, %cst_15 [0] : vector<256x4xf32> to vector<4xf32>
    %47 = vector.shape_cast %46 : vector<4xf32> to vector<1x4xf32>
    %48 = arith.mulf %42, %42 : vector<256x4xf32>
    %cst_16 = arith.constant dense<0.000000e+00> : vector<4xf32>
    %49 = vector.multi_reduction <add>, %48, %cst_16 [0] : vector<256x4xf32> to vector<4xf32>
    %50 = vector.shape_cast %49 : vector<4xf32> to vector<1x4xf32>
    %51 = tpu.concatenate %47, %50 in 0 : vector<1x4xf32>, vector<1x4xf32> -> vector<2x4xf32>
    %52 = vector.shape_cast %51 : vector<2x4xf32> to vector<1x2x4xf32>
    %c0_17 = arith.constant 0 : index
    %c0_18 = arith.constant 0 : index
    %c0_19 = arith.constant 0 : index
    %53 = vector.load %arg6[%c0_17, %c0_18, %c0_19] : memref<1x2x4xf32, #tpu.memory_space<vmem>>, vector<1x2x4xf32>
    tpu.vector_store %arg6[%c0_17, %c0_18, %c0_19], %52 {strides = array<i32>} : memref<1x2x4xf32, #tpu.memory_space<vmem>>, vector<1x2x4xf32>,
    return
  }
  func.func @transform_0(%arg0: i32) -> (i32, i32, i32, i32) {
    %c0_i32 = arith.constant 0 : i32
    %c0_i32_0 = arith.constant 0 : i32
    %c0_i32_1 = arith.constant 0 : i32
    %c0_i32_2 = arith.constant 0 : i32
    return %arg0, %c0_i32, %c0_i32_0, %c0_i32_1 : i32, i32, i32, i32
  }
  func.func @transform_1(%arg0: i32) -> (i32, i32) {
    %c0_i32 = arith.constant 0 : i32
    %c0_i32_0 = arith.constant 0 : i32
    %c0_i32_1 = arith.constant 0 : i32
    return %c0_i32, %c0_i32_0 : i32, i32
  }
  func.func @transform_2(%arg0: i32) -> (i32, i32) {
    %c0_i32 = arith.constant 0 : i32
    %c0_i32_0 = arith.constant 0 : i32
    %c0_i32_1 = arith.constant 0 : i32
    return %c0_i32, %c0_i32_0 : i32, i32
  }
  func.func @transform_3(%arg0: i32) -> (i32, i32) {
    %c0_i32 = arith.constant 0 : i32
    %c0_i32_0 = arith.constant 0 : i32
    %c0_i32_1 = arith.constant 0 : i32
    return %c0_i32, %c0_i32_0 : i32, i32
  }
  func.func @transform_4(%arg0: i32) -> (i32, i32, i32) {
    %c0_i32 = arith.constant 0 : i32
    %c0_i32_0 = arith.constant 0 : i32
    %c0_i32_1 = arith.constant 0 : i32
    return %arg0, %c0_i32, %c0_i32_0 : i32, i32, i32
  }
  func.func @transform_5(%arg0: i32) -> (i32, i32, i32) {
    %c0_i32 = arith.constant 0 : i32
    %c0_i32_0 = arith.constant 0 : i32
    %c0_i32_1 = arith.constant 0 : i32
    return %arg0, %c0_i32, %c0_i32_0 : i32, i32, i32
  }
}

module attributes {stable_mosaic.version = 11 : i64} {
  func.func @_bn_relu_conv1x1_stats_kernel(%arg0: i32, %arg1: memref<128x4xf32, #tpu.memory_space<vmem>>, %arg2: memref<4x16xbf16, #tpu.memory_space<vmem>>, %arg3: memref<1x4xf32, #tpu.memory_space<vmem>>, %arg4: memref<1x4xf32, #tpu.memory_space<vmem>>, %arg5: memref<128x16xf32, #tpu.memory_space<vmem>>, %arg6: memref<1x2x16xf32, #tpu.memory_space<vmem>>) attributes {dimension_semantics = [#tpu.dimension_semantics<parallel>], iteration_bounds = array<i64: 4>, scalar_prefetch = 0 : i64, scratch_operands = 0 : i64, tpu.core_type = #tpu.core_type<tc>, window_params = [{transform_indices = @transform_0, window_bounds = array<i64: 128, 4>}, {pipeline_mode = #tpu.pipeline_mode<synchronous>, transform_indices = @transform_1, window_bounds = array<i64: 4, 16>}, {pipeline_mode = #tpu.pipeline_mode<synchronous>, transform_indices = @transform_2, window_bounds = array<i64: 1, 4>}, {pipeline_mode = #tpu.pipeline_mode<synchronous>, transform_indices = @transform_3, window_bounds = array<i64: 1, 4>}, {transform_indices = @transform_4, window_bounds = array<i64: 128, 16>}, {transform_indices = @transform_5, window_bounds = array<i64: 1, 2, 16>}]} {
    %c0 = arith.constant 0 : index
    %c0_0 = arith.constant 0 : index
    %0 = vector.load %arg1[%c0, %c0_0] : memref<128x4xf32, #tpu.memory_space<vmem>>, vector<128x4xf32>
    %c0_1 = arith.constant 0 : index
    %c0_2 = arith.constant 0 : index
    %1 = vector.load %arg3[%c0_1, %c0_2] : memref<1x4xf32, #tpu.memory_space<vmem>>, vector<1x4xf32>
    %2 = vector.broadcast %1 : vector<1x4xf32> to vector<128x4xf32>
    %3 = arith.mulf %0, %2 : vector<128x4xf32>
    %c0_3 = arith.constant 0 : index
    %c0_4 = arith.constant 0 : index
    %4 = vector.load %arg4[%c0_3, %c0_4] : memref<1x4xf32, #tpu.memory_space<vmem>>, vector<1x4xf32>
    %5 = vector.broadcast %4 : vector<1x4xf32> to vector<128x4xf32>
    %6 = arith.addf %3, %5 : vector<128x4xf32>
    %cst = arith.constant 0.000000e+00 : f32
    %7 = vector.broadcast %cst : f32 to vector<128x4xf32>
    %8 = arith.maximumf %6, %7 : vector<128x4xf32>
    %9 = arith.truncf %8 : vector<128x4xf32> to vector<128x4xbf16>
    %c0_5 = arith.constant 0 : index
    %c0_6 = arith.constant 0 : index
    %10 = vector.load %arg2[%c0_5, %c0_6] : memref<4x16xbf16, #tpu.memory_space<vmem>>, vector<4x16xbf16>
    %cst_7 = arith.constant dense<0.000000e+00> : vector<128x16xf32>
    %11 = tpu.matmul %9, %10, %cst_7 {dimension_numbers = #tpu.dot_dimension_numbers<[1], [0], [0], [1], [0, 0, 1, 1], [], []>} : vector<128x4xbf16>, vector<4x16xbf16>, vector<128x16xf32> -> vector<128x16xf32>
    %c0_8 = arith.constant 0 : index
    %c0_9 = arith.constant 0 : index
    %12 = vector.load %arg5[%c0_8, %c0_9] : memref<128x16xf32, #tpu.memory_space<vmem>>, vector<128x16xf32>
    tpu.vector_store %arg5[%c0_8, %c0_9], %11 {strides = array<i32>} : memref<128x16xf32, #tpu.memory_space<vmem>>, vector<128x16xf32>,
    %cst_10 = arith.constant dense<0.000000e+00> : vector<16xf32>
    %13 = vector.multi_reduction <add>, %11, %cst_10 [0] : vector<128x16xf32> to vector<16xf32>
    %14 = vector.shape_cast %13 : vector<16xf32> to vector<1x16xf32>
    %15 = arith.mulf %11, %11 : vector<128x16xf32>
    %cst_11 = arith.constant dense<0.000000e+00> : vector<16xf32>
    %16 = vector.multi_reduction <add>, %15, %cst_11 [0] : vector<128x16xf32> to vector<16xf32>
    %17 = vector.shape_cast %16 : vector<16xf32> to vector<1x16xf32>
    %18 = tpu.concatenate %14, %17 in 0 : vector<1x16xf32>, vector<1x16xf32> -> vector<2x16xf32>
    %19 = vector.shape_cast %18 : vector<2x16xf32> to vector<1x2x16xf32>
    %c0_12 = arith.constant 0 : index
    %c0_13 = arith.constant 0 : index
    %c0_14 = arith.constant 0 : index
    %20 = vector.load %arg6[%c0_12, %c0_13, %c0_14] : memref<1x2x16xf32, #tpu.memory_space<vmem>>, vector<1x2x16xf32>
    tpu.vector_store %arg6[%c0_12, %c0_13, %c0_14], %19 {strides = array<i32>} : memref<1x2x16xf32, #tpu.memory_space<vmem>>, vector<1x2x16xf32>,
    return
  }
  func.func @transform_0(%arg0: i32) -> (i32, i32) {
    %c0_i32 = arith.constant 0 : i32
    %c0_i32_0 = arith.constant 0 : i32
    return %arg0, %c0_i32 : i32, i32
  }
  func.func @transform_1(%arg0: i32) -> (i32, i32) {
    %c0_i32 = arith.constant 0 : i32
    %c0_i32_0 = arith.constant 0 : i32
    %c0_i32_1 = arith.constant 0 : i32
    return %c0_i32, %c0_i32_0 : i32, i32
  }
  func.func @transform_2(%arg0: i32) -> (i32, i32) {
    %c0_i32 = arith.constant 0 : i32
    %c0_i32_0 = arith.constant 0 : i32
    %c0_i32_1 = arith.constant 0 : i32
    return %c0_i32, %c0_i32_0 : i32, i32
  }
  func.func @transform_3(%arg0: i32) -> (i32, i32) {
    %c0_i32 = arith.constant 0 : i32
    %c0_i32_0 = arith.constant 0 : i32
    %c0_i32_1 = arith.constant 0 : i32
    return %c0_i32, %c0_i32_0 : i32, i32
  }
  func.func @transform_4(%arg0: i32) -> (i32, i32) {
    %c0_i32 = arith.constant 0 : i32
    %c0_i32_0 = arith.constant 0 : i32
    return %arg0, %c0_i32 : i32, i32
  }
  func.func @transform_5(%arg0: i32) -> (i32, i32, i32) {
    %c0_i32 = arith.constant 0 : i32
    %c0_i32_0 = arith.constant 0 : i32
    %c0_i32_1 = arith.constant 0 : i32
    return %arg0, %c0_i32, %c0_i32_0 : i32, i32, i32
  }
}

module attributes {stable_mosaic.version = 11 : i64} {
  func.func @_bn_add_relu_kernel(%arg0: i32, %arg1: memref<128x16xf32, #tpu.memory_space<vmem>>, %arg2: memref<128x16xf32, #tpu.memory_space<vmem>>, %arg3: memref<1x16xf32, #tpu.memory_space<vmem>>, %arg4: memref<1x16xf32, #tpu.memory_space<vmem>>, %arg5: memref<128x16xf32, #tpu.memory_space<vmem>>) attributes {dimension_semantics = [#tpu.dimension_semantics<parallel>], iteration_bounds = array<i64: 4>, scalar_prefetch = 0 : i64, scratch_operands = 0 : i64, tpu.core_type = #tpu.core_type<tc>, window_params = [{transform_indices = @transform_0, window_bounds = array<i64: 128, 16>}, {transform_indices = @transform_1, window_bounds = array<i64: 128, 16>}, {pipeline_mode = #tpu.pipeline_mode<synchronous>, transform_indices = @transform_2, window_bounds = array<i64: 1, 16>}, {pipeline_mode = #tpu.pipeline_mode<synchronous>, transform_indices = @transform_3, window_bounds = array<i64: 1, 16>}, {transform_indices = @transform_4, window_bounds = array<i64: 128, 16>}]} {
    %c0 = arith.constant 0 : index
    %c0_0 = arith.constant 0 : index
    %0 = vector.load %arg1[%c0, %c0_0] : memref<128x16xf32, #tpu.memory_space<vmem>>, vector<128x16xf32>
    %c0_1 = arith.constant 0 : index
    %c0_2 = arith.constant 0 : index
    %1 = vector.load %arg3[%c0_1, %c0_2] : memref<1x16xf32, #tpu.memory_space<vmem>>, vector<1x16xf32>
    %2 = vector.broadcast %1 : vector<1x16xf32> to vector<128x16xf32>
    %3 = arith.mulf %0, %2 : vector<128x16xf32>
    %c0_3 = arith.constant 0 : index
    %c0_4 = arith.constant 0 : index
    %4 = vector.load %arg4[%c0_3, %c0_4] : memref<1x16xf32, #tpu.memory_space<vmem>>, vector<1x16xf32>
    %5 = vector.broadcast %4 : vector<1x16xf32> to vector<128x16xf32>
    %6 = arith.addf %3, %5 : vector<128x16xf32>
    %c0_5 = arith.constant 0 : index
    %c0_6 = arith.constant 0 : index
    %7 = vector.load %arg2[%c0_5, %c0_6] : memref<128x16xf32, #tpu.memory_space<vmem>>, vector<128x16xf32>
    %8 = arith.addf %6, %7 : vector<128x16xf32>
    %cst = arith.constant 0.000000e+00 : f32
    %9 = vector.broadcast %cst : f32 to vector<128x16xf32>
    %10 = arith.maximumf %8, %9 : vector<128x16xf32>
    %c0_7 = arith.constant 0 : index
    %c0_8 = arith.constant 0 : index
    %11 = vector.load %arg5[%c0_7, %c0_8] : memref<128x16xf32, #tpu.memory_space<vmem>>, vector<128x16xf32>
    tpu.vector_store %arg5[%c0_7, %c0_8], %10 {strides = array<i32>} : memref<128x16xf32, #tpu.memory_space<vmem>>, vector<128x16xf32>,
    return
  }
  func.func @transform_0(%arg0: i32) -> (i32, i32) {
    %c0_i32 = arith.constant 0 : i32
    %c0_i32_0 = arith.constant 0 : i32
    return %arg0, %c0_i32 : i32, i32
  }
  func.func @transform_1(%arg0: i32) -> (i32, i32) {
    %c0_i32 = arith.constant 0 : i32
    %c0_i32_0 = arith.constant 0 : i32
    return %arg0, %c0_i32 : i32, i32
  }
  func.func @transform_2(%arg0: i32) -> (i32, i32) {
    %c0_i32 = arith.constant 0 : i32
    %c0_i32_0 = arith.constant 0 : i32
    %c0_i32_1 = arith.constant 0 : i32
    return %c0_i32, %c0_i32_0 : i32, i32
  }
  func.func @transform_3(%arg0: i32) -> (i32, i32) {
    %c0_i32 = arith.constant 0 : i32
    %c0_i32_0 = arith.constant 0 : i32
    %c0_i32_1 = arith.constant 0 : i32
    return %c0_i32, %c0_i32_0 : i32, i32
  }
  func.func @transform_4(%arg0: i32) -> (i32, i32) {
    %c0_i32 = arith.constant 0 : i32
    %c0_i32_0 = arith.constant 0 : i32
    return %arg0, %c0_i32 : i32, i32
  }
}

</mosaic_0001>

<llo_original>
// kernel: bottleneck_forward_nhwc.4
$region0: #{bottleneck_forward_nhwc.4}
  #allocation0 [shape = 'u32[]', space=smem, size = 0x4, offset = 0x4, fixed_abs, tag = 'smem constant byte address 0x4 - core index']
  #allocation1 [shape = 'u32[144,128]{1,0:T(1,128)}', space=vmem, size = 0x12000, scoped, tag = 'internal scratch']
  %s0 = inlined_call_operand.hbm [shape: f32[512,16], index: 0, kind: input, shape index: {}]
  %s1 = inlined_call_operand.vmem [shape: bf16[16,4], index: 1, kind: input, shape index: {}]
  %s2 = inlined_call_operand.vmem [shape: f32[512,4], index: 2, kind: output, shape index: {0}]
  %s3 = inlined_call_operand.vmem [shape: f32[4,2,4], index: 3, kind: output, shape index: {1}]
  %4 = xla_tuple %s2, %s3
  %s5 = sld [smem:[#allocation0]]
  $region53: #{bottleneck_forward_nhwc.4} parent=0
    _
  %s7 = ssub.s32 1, %s5
  %s8 = scalar_select 0, %s7, %s5
  $region1: #{bottleneck_forward_nhwc.4} parent=0
    #allocation2 [shape = 'u8[131072]{0}', space=vmem, size = 0x20000, scoped, tag = 'input window, operand 0']
    #allocation3 [shape = 's32[2]{0}', space=sflag, size = 0x8, scoped, tag = 'scoped memory for bottleneck_forward_nhwc.4']
    %9 = vsyncpa [#allocation3], 0
    %s10 = scalar_lea.sflag [#allocation3], 1
    %11 = vsyncpa %s10, 0
    loop: start=0, step=1, limit=6
    $region2: #{bottleneck_forward_nhwc.4} parent=1 // loop_pre_header
      _
    $region3: #{bottleneck_forward_nhwc.4} parent=1 // loop_header
      %s13 = sphi 0, %s17
      %p14 = scmp.ge.s32.totalorder %s13, 6
      %s23 = sphi 0, %s25
      %s26 = sphi 0, %s23
      %s27 = sphi 0, %s26
      %s43 = sphi 0, %s27
      %s47 = sphi 0, %s47
      %s49 = sphi 0, %s47
      %s50 = sphi 0, %s49
      %s64 = sphi 0, %s50
      %s70 = sphi 0, %s72
      %s73 = sphi 0, %s70
      %s74 = sphi 0, %s73
      %s90 = sphi 0, %s74
      %s96 = sphi 0, %s98
      %s99 = sphi 0, %s96
      %s100 = sphi 0, %s99
      %s116 = sphi 0, %s100
    $region4: #{bottleneck_forward_nhwc.4} parent=1 // loop_header_branch
      %16 = sbr.rel (%p14) target = $region8
    $region5: #{bottleneck_forward_nhwc.4} parent=1 // loop_body
      %s18 = ssub.s32 %s13, 1
      %s19 = ssub.s32 %s13, 2
      %s20 = sadd.s32 %s13, 1
      %s21 = ssub.s32 %s13, %s20
      %p22 = scmp.eq.s32.totalorder %s21, 0
      %s24 = sadd.s32 %s23, 1
      %s25 = scalar_select %p22, %s23, %s24
      %p28 = pneg %p22
      %p29 = scmp.eq.s32.totalorder %s13, 3
      %p30 = por %p28, %p29
      %p31 = scmp.ne.s32.totalorder %s23, %s26
      %p32 = scmp.eq.s32.totalorder %s13, 0
      %p33 = por %p31, %p32
      %p34 = scmp.ne.s32.totalorder %s23, %s26
      %p35 = scmp.eq.s32.totalorder %s18, 3
      %p36 = por %p34, %p35
      %p37 = scmp.ne.s32.totalorder %s26, %s27
      %p38 = scmp.eq.s32.totalorder %s18, 0
      %p39 = por %p37, %p38
      %p40 = scmp.ne.s32.totalorder %s26, %s27
      %p41 = scmp.eq.s32.totalorder %s19, 3
      %p42 = por %p40, %p41
      %p44 = scmp.ne.s32.totalorder %s27, %s43
      %p45 = scmp.eq.s32.totalorder %s19, 0
      %p46 = por %p44, %p45
      %s48 = sadd.s32 %s47, 1
      %p51 = scmp.eq.s32.totalorder %s13, 3
      %p52 = scmp.ne.s32.totalorder %s47, %s49
      %p53 = scmp.eq.s32.totalorder %s13, 0
      %p54 = por %p52, %p53
      %p55 = scmp.ne.s32.totalorder %s47, %s49
      %p56 = scmp.eq.s32.totalorder %s18, 3
      %p57 = por %p55, %p56
      %p58 = scmp.ne.s32.totalorder %s49, %s50
      %p59 = scmp.eq.s32.totalorder %s18, 0
      %p60 = por %p58, %p59
      %p61 = scmp.ne.s32.totalorder %s49, %s50
      %p62 = scmp.eq.s32.totalorder %s19, 3
      %p63 = por %p61, %p62
      %p65 = scmp.ne.s32.totalorder %s50, %s64
      %p66 = scmp.eq.s32.totalorder %s19, 0
      %p67 = por %p65, %p66
      %s68 = ssub.s32 %s13, %s20
      %p69 = scmp.eq.s32.totalorder %s68, 0
      %s71 = sadd.s32 %s70, 1
      %s72 = scalar_select %p69, %s70, %s71
      %p75 = pneg %p69
      %p76 = scmp.eq.s32.totalorder %s13, 3
      %p77 = por %p75, %p76
      %p78 = scmp.ne.s32.totalorder %s70, %s73
      %p79 = scmp.eq.s32.totalorder %s13, 0
      %p80 = por %p78, %p79
      %p81 = scmp.ne.s32.totalorder %s70, %s73
      %p82 = scmp.eq.s32.totalorder %s18, 3
      %p83 = por %p81, %p82
      %p84 = scmp.ne.s32.totalorder %s73, %s74
      %p85 = scmp.eq.s32.totalorder %s18, 0
      %p86 = por %p84, %p85
      %p87 = scmp.ne.s32.totalorder %s73, %s74
      %p88 = scmp.eq.s32.totalorder %s19, 3
      %p89 = por %p87, %p88
      %p91 = scmp.ne.s32.totalorder %s74, %s90
      %p92 = scmp.eq.s32.totalorder %s19, 0
      %p93 = por %p91, %p92
      %s94 = ssub.s32 %s13, %s20
      %p95 = scmp.eq.s32.totalorder %s94, 0
      %s97 = sadd.s32 %s96, 1
      %s98 = scalar_select %p95, %s96, %s97
      %p101 = pneg %p95
      %p102 = scmp.eq.s32.totalorder %s13, 3
      %p103 = por %p101, %p102
      %p104 = scmp.ne.s32.totalorder %s96, %s99
      %p105 = scmp.eq.s32.totalorder %s13, 0
      %p106 = por %p104, %p105
      %p107 = scmp.ne.s32.totalorder %s96, %s99
      %p108 = scmp.eq.s32.totalorder %s18, 3
      %p109 = por %p107, %p108
      %p110 = scmp.ne.s32.totalorder %s99, %s100
      %p111 = scmp.eq.s32.totalorder %s18, 0
      %p112 = por %p110, %p111
      %p113 = scmp.ne.s32.totalorder %s99, %s100
      %p114 = scmp.eq.s32.totalorder %s19, 3
      %p115 = por %p113, %p114
      %p117 = scmp.ne.s32.totalorder %s100, %s116
      %p118 = scmp.eq.s32.totalorder %s19, 0
      %p119 = por %p117, %p118
      %p120 = scmp.le.s32.totalorder 1, %s13
      %p121 = scmp.lt.s32.totalorder %s13, 5
      %p122 = pnand %p120, %p121
      %p123 = pneg %p122
      // Predicated region
      $region9: #{bottleneck_forward_nhwc.4} parent=5 // pred_check
        _
      $region10: #{bottleneck_forward_nhwc.4} parent=5 // pred_check_branch
        %125 = sbr.rel (%p122) target = $region12
      $region11: #{bottleneck_forward_nhwc.4} parent=5 // pred_region
        %s126 = ssub.s32 %s13, 1
        // Predicated region
        $region13: #{bottleneck_forward_nhwc.4} parent=11 // pred_check
          %p127 = pneg %p60
        $region14: #{bottleneck_forward_nhwc.4} parent=11 // pred_check_branch
          %129 = sbr.rel (%p127) target = $region16
        $region15: #{bottleneck_forward_nhwc.4} parent=11 // pred_region
          _
        $region16: #{bottleneck_forward_nhwc.4} parent=11 // pred_fallthru
          _
      $region12: #{bottleneck_forward_nhwc.4} parent=5 // pred_fallthru
        _
      %p130 = scmp.lt.s32.totalorder %s13, 4
      // Predicated region
      $region17: #{bottleneck_forward_nhwc.4} parent=5 // pred_check
        %p131 = pneg %p130
      $region18: #{bottleneck_forward_nhwc.4} parent=5 // pred_check_branch
        %133 = sbr.rel (%p131) target = $region20
      $region19: #{bottleneck_forward_nhwc.4} parent=5 // pred_region
        // Predicated region
        $region21: #{bottleneck_forward_nhwc.4} parent=19 // pred_check
          %p134 = pneg %p33
        $region22: #{bottleneck_forward_nhwc.4} parent=19 // pred_check_branch
          %136 = sbr.rel (%p134) target = $region24
        $region23: #{bottleneck_forward_nhwc.4} parent=19 // pred_region
          %s137 = sand.u32 %s23, 1
          %s138 = scalar_lea.sflag [#allocation3], %s137
          %s139 = sand.u32 %s23, 1
          %s140 = smul.addr %s139, 128
          %s141 = scalar_lea.vmem [#allocation2], %s140
          %s142 = smul.u32 16, %s13
          %s144 = ssub.s32 2048, 2048
          %145 = vsyncadd %s138, %s144
          %s146 = smul.addr %s142, 128
          %s147 = scalar_lea.hbm %s0, %s146
          %s148 = sshll.u32 %s141, 4
          %s149 = int_to_ptr.vmem [resolvable:$true] %s148
          %154 = dma.hbm_to_vmem [thread:$0]  %s147, 2048, %s149, %s138, 128, 128, 8
        $region24: #{bottleneck_forward_nhwc.4} parent=19 // pred_fallthru
          _
      $region20: #{bottleneck_forward_nhwc.4} parent=5 // pred_fallthru
        _
      %p155 = scmp.le.s32.totalorder 1, %s13
      %p156 = scmp.lt.s32.totalorder %s13, 5
      %p157 = pnand %p155, %p156
      %p158 = pneg %p157
      // Predicated region
      $region25: #{bottleneck_forward_nhwc.4} parent=5 // pred_check
        _
      $region26: #{bottleneck_forward_nhwc.4} parent=5 // pred_check_branch
        %160 = sbr.rel (%p157) target = $region28
      $region27: #{bottleneck_forward_nhwc.4} parent=5 // pred_region
        %s161 = ssub.s32 %s13, 1
        %s162 = sand.u32 %s26, 1
        %s163 = scalar_lea.sflag [#allocation3], %s162
        %s164 = sand.u32 %s26, 1
        %s165 = smul.addr %s164, 128
        %s166 = scalar_lea.vmem [#allocation2], %s165
        // Predicated region
        $region29: #{bottleneck_forward_nhwc.4} parent=27 // pred_check
          %p167 = pneg %p39
        $region30: #{bottleneck_forward_nhwc.4} parent=27 // pred_check_branch
          %169 = sbr.rel (%p167) target = $region32
        $region31: #{bottleneck_forward_nhwc.4} parent=27 // pred_region
          %170 = dma.done %s163, 2048
        $region32: #{bottleneck_forward_nhwc.4} parent=27 // pred_fallthru
          _
        %s171 = sand.u32 %s26, 1
        %s172 = scalar_lea.sflag [#allocation3], %s171
        %s173 = sand.u32 %s26, 1
        %s174 = smul.addr %s173, 128
        %s175 = scalar_lea.vmem [#allocation2], %s174
        %p176 = pneg %p39
        %p177 = pneg %p36
        %p178 = pneg %p60
        %p179 = pneg %p57
        %p180 = pneg %p86
        %p181 = pneg %p83
        %s182 = smul.u32 16, %s18
        %p183 = scmp.lt.s32.totalorder %s182, 63
        %s184 = scalar_select %p183, %s182, 63
        %s185 = smul.addr %s184, 8
        %s186 = scalar_lea.vmem %s2, %s185
        %p187 = pneg %p112
        %p188 = pneg %p109
        %p189 = scmp.lt.s32.totalorder %s18, 3
        %s190 = scalar_select %p189, %s18, 3
        %s191 = smul.addr %s190, 2
        %s192 = scalar_lea.vmem %s3, %s191
        %s193 = smul.u32 16, %s18
        %s194 = smul.u32 16, %s18
        %p195 = scmp.lt.s32.totalorder %s194, 63
        %s196 = scalar_select %p195, %s194, 63
        %s197 = smul.addr %s196, 8
        %s198 = scalar_lea.vmem %s2, %s197
        %s199 = smul.u32 16, %s18
        %p200 = scmp.lt.s32.totalorder %s18, 3
        %s201 = scalar_select %p200, %s18, 3
        %s202 = smul.addr %s201, 2
        %s203 = scalar_lea.vmem %s3, %s202
        %v205 = vld [vmem:[%s166] sm:$0xff]
        %v206 = vld [vmem:[%s166 + $0x8] sm:$0xff]
        %v207 = vld [vmem:[%s166 + $0x10] sm:$0xff]
        %v208 = vld [vmem:[%s166 + $0x18] sm:$0xff]
        %v209 = vld [vmem:[%s166 + $0x20] sm:$0xff]
        %v210 = vld [vmem:[%s166 + $0x28] sm:$0xff]
        %v211 = vld [vmem:[%s166 + $0x30] sm:$0xff]
        %v212 = vld [vmem:[%s166 + $0x38] sm:$0xff]
        %v213 = vld [vmem:[%s166 + $0x40] sm:$0xff]
        %v214 = vld [vmem:[%s166 + $0x48] sm:$0xff]
        %v215 = vld [vmem:[%s166 + $0x50] sm:$0xff]
        %v216 = vld [vmem:[%s166 + $0x58] sm:$0xff]
        %v217 = vld [vmem:[%s166 + $0x60] sm:$0xff]
        %v218 = vld [vmem:[%s166 + $0x68] sm:$0xff]
        %v219 = vld [vmem:[%s166 + $0x70] sm:$0xff]
        %v220 = vld [vmem:[%s166 + $0x78] sm:$0xff]
        %v221 = vpack.c.bf16 %v206, %v205
        %v222 = vpack.c.bf16 %v208, %v207
        %v223 = vpack.c.bf16 %v210, %v209
        %v224 = vpack.c.bf16 %v212, %v211
        %v225 = vpack.c.bf16 %v214, %v213
        %v226 = vpack.c.bf16 %v216, %v215
        %v227 = vpack.c.bf16 %v218, %v217
        %v228 = vpack.c.bf16 %v220, %v219
        %v229 = vld [vmem:[%s1] sm:$0xf]
        %v230 = vld [vmem:[%s1 + $0x4] sm:$0xf]
        %v233 = vunpack.c.l.b16 %v229
        %v234 = vunpack.c.l.b16 %v230
        %v235 = vpack.c.b16 %v234, %v233
        %vm237 = vcmask 130048
        %v239 = vsel %vm237, %v221, 0
        %v242 = vsel %vm237, %v222, 0
        %v245 = vsel %vm237, %v223, 0
        %v248 = vsel %vm237, %v224, 0
        %v251 = vsel %vm237, %v225, 0
        %v254 = vsel %vm237, %v226, 0
        %v257 = vsel %vm237, %v227, 0
        %v260 = vsel %vm237, %v228, 0
        %262 = vmatprep.subr.bf16.mxu0 0
        %263 = vmatpush1.bf16.msra.mxu0 %v235
        %264 = vmatprep.subr.bf16.mxu0 0
        %265 = vmatpush1.bf16.msra.mxu0 0
        %266 = vmatprep.subr.bf16.mxu0 0
        %267 = vmatpush1.bf16.msra.mxu0 0
        %268 = vmatprep.subr.bf16.mxu0 0
        %269 = vmatpush1.bf16.msra.mxu0 0
        %270 = vmatprep.subr.bf16.mxu0 0
        %271 = vmatpush1.bf16.msra.mxu0 0
        %272 = vmatprep.subr.bf16.mxu0 0
        %273 = vmatpush1.bf16.msra.mxu0 0
        %274 = vmatprep.subr.bf16.mxu0 0
        %275 = vmatpush1.bf16.msra.mxu0 0
        %276 = vmatprep.subr.bf16.mxu0 0
        %277 = vmatpush1.bf16.msra.mxu0 0
        %278 = vmatprep.subr.bf16.mxu0 0
        %279 = vmatpush1.bf16.msra.mxu0 0
        %280 = vmatprep.subr.bf16.mxu0 0
        %281 = vmatpush1.bf16.msra.mxu0 0
        %282 = vmatprep.subr.bf16.mxu0 0
        %283 = vmatpush1.bf16.msra.mxu0 0
        %284 = vmatprep.subr.bf16.mxu0 0
        %285 = vmatpush1.bf16.msra.mxu0 0
        %286 = vmatprep.subr.bf16.mxu0 0
        %287 = vmatpush1.bf16.msra.mxu0 0
        %288 = vmatprep.subr.bf16.mxu0 0
        %289 = vmatpush1.bf16.msra.mxu0 0
        %290 = vmatprep.subr.bf16.mxu0 0
        %291 = vmatpush1.bf16.msra.mxu0 0
        %292 = vmatprep.subr.bf16.mxu0 0
        %293 = vmatpush1.bf16.msra.mxu0 0
        %294 = vmatprep.mubr.bf16.mxu0 0
        %295 = vmatmul.mubr.bf16.gmra.mrb[0].mxu0 %v239
        %v296 = vpop.f32.mrb[0].mxu0
        %v297 = vadd.f32 0.0, %v296
        %v298 = vpop.f32.mrb[0].mxu0
        %v299 = vpop.f32.mrb[0].mxu0
        %v300 = vadd.f32 0.0, %v299
        %v301 = vpop.f32.mrb[0].mxu0
        %302 = vmatprep.mubr.bf16.mxu0 0
        %303 = vmatmul.mubr.bf16.gmra.mrb[0].mxu0 %v242
        %v304 = vpop.f32.mrb[0].mxu0
        %v305 = vadd.f32 0.0, %v304
        %v306 = vpop.f32.mrb[0].mxu0
        %v307 = vpop.f32.mrb[0].mxu0
        %v308 = vadd.f32 0.0, %v307
        %v309 = vpop.f32.mrb[0].mxu0
        %310 = vmatprep.mubr.bf16.mxu0 0
        %311 = vmatmul.mubr.bf16.gmra.mrb[0].mxu0 %v245
        %v312 = vpop.f32.mrb[0].mxu0
        %v313 = vadd.f32 0.0, %v312
        %v314 = vpop.f32.mrb[0].mxu0
        %v315 = vpop.f32.mrb[0].mxu0
        %v316 = vadd.f32 0.0, %v315
        %v317 = vpop.f32.mrb[0].mxu0
        %318 = vmatprep.mubr.bf16.mxu0 0
        %319 = vmatmul.mubr.bf16.gmra.mrb[0].mxu0 %v248
        %v320 = vpop.f32.mrb[0].mxu0
        %v321 = vadd.f32 0.0, %v320
        %v322 = vpop.f32.mrb[0].mxu0
        %v323 = vpop.f32.mrb[0].mxu0
        %v324 = vadd.f32 0.0, %v323
        %v325 = vpop.f32.mrb[0].mxu0
        %326 = vmatprep.mubr.bf16.mxu0 0
        %327 = vmatmul.mubr.bf16.gmra.mrb[0].mxu0 %v251
        %v328 = vpop.f32.mrb[0].mxu0
        %v329 = vadd.f32 0.0, %v328
        %v330 = vpop.f32.mrb[0].mxu0
        %v331 = vpop.f32.mrb[0].mxu0
        %v332 = vadd.f32 0.0, %v331
        %v333 = vpop.f32.mrb[0].mxu0
        %334 = vmatprep.mubr.bf16.mxu0 0
        %335 = vmatmul.mubr.bf16.gmra.mrb[0].mxu0 %v254
        %v336 = vpop.f32.mrb[0].mxu0
        %v337 = vadd.f32 0.0, %v336
        %v338 = vpop.f32.mrb[0].mxu0
        %v339 = vpop.f32.mrb[0].mxu0
        %v340 = vadd.f32 0.0, %v339
        %v341 = vpop.f32.mrb[0].mxu0
        %342 = vmatprep.mubr.bf16.mxu0 0
        %343 = vmatmul.mubr.bf16.gmra.mrb[0].mxu0 %v257
        %v344 = vpop.f32.mrb[0].mxu0
        %v345 = vadd.f32 0.0, %v344
        %v346 = vpop.f32.mrb[0].mxu0
        %v347 = vpop.f32.mrb[0].mxu0
        %v348 = vadd.f32 0.0, %v347
        %v349 = vpop.f32.mrb[0].mxu0
        %350 = vmatprep.mubr.bf16.mxu0 0
        %351 = vmatmul.mubr.bf16.gmra.mrb[0].mxu0 %v260
        %v352 = vpop.f32.mrb[0].mxu0
        %v353 = vadd.f32 0.0, %v352
        %v354 = vpop.f32.mrb[0].mxu0
        %v355 = vpop.f32.mrb[0].mxu0
        %v356 = vadd.f32 0.0, %v355
        %v357 = vpop.f32.mrb[0].mxu0
        %358 = vdwg.mxu0
        %vm359 = vcmask 31744
        %360 = vst.msk [vmem:[%s198] sm:$0xff] %vm359, %v297
        %361 = vst.msk [vmem:[%s198 + $0x8] sm:$0xff] %vm359, %v300
        %362 = vst.msk [vmem:[%s198 + $0x10] sm:$0xff] %vm359, %v305
        %363 = vst.msk [vmem:[%s198 + $0x18] sm:$0xff] %vm359, %v308
        %364 = vst.msk [vmem:[%s198 + $0x20] sm:$0xff] %vm359, %v313
        %365 = vst.msk [vmem:[%s198 + $0x28] sm:$0xff] %vm359, %v316
        %366 = vst.msk [vmem:[%s198 + $0x30] sm:$0xff] %vm359, %v321
        %367 = vst.msk [vmem:[%s198 + $0x38] sm:$0xff] %vm359, %v324
        %368 = vst.msk [vmem:[%s198 + $0x40] sm:$0xff] %vm359, %v329
        %369 = vst.msk [vmem:[%s198 + $0x48] sm:$0xff] %vm359, %v332
        %370 = vst.msk [vmem:[%s198 + $0x50] sm:$0xff] %vm359, %v337
        %371 = vst.msk [vmem:[%s198 + $0x58] sm:$0xff] %vm359, %v340
        %372 = vst.msk [vmem:[%s198 + $0x60] sm:$0xff] %vm359, %v345
        %373 = vst.msk [vmem:[%s198 + $0x68] sm:$0xff] %vm359, %v348
        %374 = vst.msk [vmem:[%s198 + $0x70] sm:$0xff] %vm359, %v353
        %375 = vst.msk [vmem:[%s198 + $0x78] sm:$0xff] %vm359, %v356
        %v376 = vsel %vm359, %v297, 0.0
        %v377 = vsel %vm359, %v300, 0.0
        %v378 = vadd.f32 %v376, %v377
        %v379 = vsel %vm359, %v305, 0.0
        %v380 = vadd.f32 %v378, %v379
        %v381 = vsel %vm359, %v308, 0.0
        %v382 = vadd.f32 %v380, %v381
        %v383 = vsel %vm359, %v313, 0.0
        %v384 = vadd.f32 %v382, %v383
        %v385 = vsel %vm359, %v316, 0.0
        %v386 = vadd.f32 %v384, %v385
        %v387 = vsel %vm359, %v321, 0.0
        %v388 = vadd.f32 %v386, %v387
        %v389 = vsel %vm359, %v324, 0.0
        %v390 = vadd.f32 %v388, %v389
        %v391 = vsel %vm359, %v329, 0.0
        %v392 = vadd.f32 %v390, %v391
        %v393 = vsel %vm359, %v332, 0.0
        %v394 = vadd.f32 %v392, %v393
        %v395 = vsel %vm359, %v337, 0.0
        %v396 = vadd.f32 %v394, %v395
        %v397 = vsel %vm359, %v340, 0.0
        %v398 = vadd.f32 %v396, %v397
        %v399 = vsel %vm359, %v345, 0.0
        %v400 = vadd.f32 %v398, %v399
        %v401 = vsel %vm359, %v348, 0.0
        %v402 = vadd.f32 %v400, %v401
        %v403 = vsel %vm359, %v353, 0.0
        %v404 = vadd.f32 %v402, %v403
        %v405 = vsel %vm359, %v356, 0.0
        %v406 = vadd.f32 %v404, %v405
        %v407 = vrot.slane %v406, 4
        %v408 = vadd.f32 %v406, %v407
        %v409 = vrot.slane %v408, 2
        %v410 = vadd.f32 %v408, %v409
        %v411 = vrot.slane %v410, 1
        %v412 = vadd.f32 %v410, %v411
        %v413 = vmul.f32 %v297, %v297
        %v414 = vmul.f32 %v300, %v300
        %v415 = vmul.f32 %v305, %v305
        %v416 = vmul.f32 %v308, %v308
        %v417 = vmul.f32 %v313, %v313
        %v418 = vmul.f32 %v316, %v316
        %v419 = vmul.f32 %v321, %v321
        %v420 = vmul.f32 %v324, %v324
        %v421 = vmul.f32 %v329, %v329
        %v422 = vmul.f32 %v332, %v332
        %v423 = vmul.f32 %v337, %v337
        %v424 = vmul.f32 %v340, %v340
        %v425 = vmul.f32 %v345, %v345
        %v426 = vmul.f32 %v348, %v348
        %v427 = vmul.f32 %v353, %v353
        %v428 = vmul.f32 %v356, %v356
        %v429 = vsel %vm359, %v413, 0.0
        %v430 = vsel %vm359, %v414, 0.0
        %v431 = vadd.f32 %v429, %v430
        %v432 = vsel %vm359, %v415, 0.0
        %v433 = vadd.f32 %v431, %v432
        %v434 = vsel %vm359, %v416, 0.0
        %v435 = vadd.f32 %v433, %v434
        %v436 = vsel %vm359, %v417, 0.0
        %v437 = vadd.f32 %v435, %v436
        %v438 = vsel %vm359, %v418, 0.0
        %v439 = vadd.f32 %v437, %v438
        %v440 = vsel %vm359, %v419, 0.0
        %v441 = vadd.f32 %v439, %v440
        %v442 = vsel %vm359, %v420, 0.0
        %v443 = vadd.f32 %v441, %v442
        %v444 = vsel %vm359, %v421, 0.0
        %v445 = vadd.f32 %v443, %v444
        %v446 = vsel %vm359, %v422, 0.0
        %v447 = vadd.f32 %v445, %v446
        %v448 = vsel %vm359, %v423, 0.0
        %v449 = vadd.f32 %v447, %v448
        %v450 = vsel %vm359, %v424, 0.0
        %v451 = vadd.f32 %v449, %v450
        %v452 = vsel %vm359, %v425, 0.0
        %v453 = vadd.f32 %v451, %v452
        %v454 = vsel %vm359, %v426, 0.0
        %v455 = vadd.f32 %v453, %v454
        %v456 = vsel %vm359, %v427, 0.0
        %v457 = vadd.f32 %v455, %v456
        %v458 = vsel %vm359, %v428, 0.0
        %v459 = vadd.f32 %v457, %v458
        %v460 = vrot.slane %v459, 4
        %v461 = vadd.f32 %v459, %v460
        %v462 = vrot.slane %v461, 2
        %v463 = vadd.f32 %v461, %v462
        %v464 = vrot.slane %v463, 1
        %v465 = vadd.f32 %v463, %v464
        %vm466 = vcmask 1040384
        %v467 = vsel %vm466, %v412, %v465
        %vm468 = vcmask 25600
        %469 = vst.msk [vmem:[%s203] sm:$0x3] %vm468, %v467
        %s470 = smul.u32 16, %s18
        %p471 = scmp.lt.s32.totalorder %s470, 63
        %s472 = scalar_select %p471, %s470, 63
        %s473 = smul.addr %s472, 8
        %s474 = scalar_lea.vmem %s2, %s473
        %p475 = scmp.lt.s32.totalorder %s18, 3
        %s476 = scalar_select %p475, %s18, 3
        %s477 = smul.addr %s476, 2
        %s478 = scalar_lea.vmem %s3, %s477
        // Predicated region
        $region33: #{bottleneck_forward_nhwc.4} parent=27 // pred_check
          %p479 = pneg %p83
        $region34: #{bottleneck_forward_nhwc.4} parent=27 // pred_check_branch
          %481 = sbr.rel (%p479) target = $region36
        $region35: #{bottleneck_forward_nhwc.4} parent=27 // pred_region
          %s482 = smul.u32 16, %s18
        $region36: #{bottleneck_forward_nhwc.4} parent=27 // pred_fallthru
          _
        // Predicated region
        $region37: #{bottleneck_forward_nhwc.4} parent=27 // pred_check
          %p483 = pneg %p109
        $region38: #{bottleneck_forward_nhwc.4} parent=27 // pred_check_branch
          %485 = sbr.rel (%p483) target = $region40
        $region39: #{bottleneck_forward_nhwc.4} parent=27 // pred_region
          _
        $region40: #{bottleneck_forward_nhwc.4} parent=27 // pred_fallthru
          _
      $region28: #{bottleneck_forward_nhwc.4} parent=5 // pred_fallthru
        _
      %p486 = scmp.le.s32.totalorder 2, %s13
      // Predicated region
      $region41: #{bottleneck_forward_nhwc.4} parent=5 // pred_check
        %p487 = pneg %p486
      $region42: #{bottleneck_forward_nhwc.4} parent=5 // pred_check_branch
        %489 = sbr.rel (%p487) target = $region44
      $region43: #{bottleneck_forward_nhwc.4} parent=5 // pred_region
        %s490 = ssub.s32 %s13, 2
        // Predicated region
        $region45: #{bottleneck_forward_nhwc.4} parent=43 // pred_check
          %p491 = pneg %p89
        $region46: #{bottleneck_forward_nhwc.4} parent=43 // pred_check_branch
          %493 = sbr.rel (%p491) target = $region48
        $region47: #{bottleneck_forward_nhwc.4} parent=43 // pred_region
          %s494 = smul.u32 16, %s19
          %p495 = scmp.lt.s32.totalorder %s494, 63
          %s496 = scalar_select %p495, %s494, 63
          %s497 = smul.addr %s496, 8
          %s498 = scalar_lea.vmem %s2, %s497
        $region48: #{bottleneck_forward_nhwc.4} parent=43 // pred_fallthru
          _
        // Predicated region
        $region49: #{bottleneck_forward_nhwc.4} parent=43 // pred_check
          %p499 = pneg %p115
        $region50: #{bottleneck_forward_nhwc.4} parent=43 // pred_check_branch
          %501 = sbr.rel (%p499) target = $region52
        $region51: #{bottleneck_forward_nhwc.4} parent=43 // pred_region
          %p502 = scmp.lt.s32.totalorder %s19, 3
          %s503 = scalar_select %p502, %s19, 3
          %s504 = smul.addr %s503, 2
          %s505 = scalar_lea.vmem %s3, %s504
        $region52: #{bottleneck_forward_nhwc.4} parent=43 // pred_fallthru
          _
      $region44: #{bottleneck_forward_nhwc.4} parent=5 // pred_fallthru
        _
    $region6: #{bottleneck_forward_nhwc.4} parent=1 // loop_footer
      %s17 = sadd.s32 1, %s13
    $region7: #{bottleneck_forward_nhwc.4} parent=1 // loop_footer_branch
      %12 = sbr.rel target = $region3
    $region8: #{bottleneck_forward_nhwc.4} parent=1 // loop_exit
      _
    %506 = vsyncpa [#allocation3], 1
    %s507 = scalar_lea.sflag [#allocation3], 1
    %508 = vsyncpa %s507, 1

// kernel: bottleneck_forward_nhwc.6
$region0: #{bottleneck_forward_nhwc.6}
  #allocation0 [shape = 'u32[]', space=smem, size = 0x4, offset = 0x4, fixed_abs, tag = 'smem constant byte address 0x4 - core index']
  #allocation1 [shape = 'u32[144,128]{1,0:T(1,128)}', space=vmem, size = 0x12000, scoped, tag = 'internal scratch']
  %s0 = inlined_call_operand.vmem [shape: f32[512,4], index: 0, kind: input, shape index: {}]
  %s1 = inlined_call_operand.vmem [shape: bf16[4,16], index: 1, kind: input, shape index: {}]
  %s2 = inlined_call_operand.vmem [shape: f32[1,4], index: 2, kind: input, shape index: {}]
  %s3 = inlined_call_operand.vmem [shape: f32[1,4], index: 3, kind: input, shape index: {}]
  %s4 = inlined_call_operand.vmem [shape: f32[512,16], index: 4, kind: output, shape index: {0}]
  %s5 = inlined_call_operand.vmem [shape: f32[4,2,16], index: 5, kind: output, shape index: {1}]
  %6 = xla_tuple %s4, %s5
  %s7 = sld [smem:[#allocation0]]
  $region57: #{bottleneck_forward_nhwc.6} parent=0
    _
  %s9 = ssub.s32 1, %s7
  %s10 = scalar_select 0, %s9, %s7
  loop: start=0, step=1, limit=6
  $region2: #{bottleneck_forward_nhwc.6} parent=0 // loop_pre_header
    _
  $region3: #{bottleneck_forward_nhwc.6} parent=0 // loop_header
    %s12 = sphi 0, %s16
    %p13 = scmp.ge.s32.totalorder %s12, 6
    %s22 = sphi 0, %s24
    %s25 = sphi 0, %s22
    %s26 = sphi 0, %s25
    %s42 = sphi 0, %s26
    %s46 = sphi 0, %s46
    %s48 = sphi 0, %s46
    %s49 = sphi 0, %s48
    %s63 = sphi 0, %s49
    %s67 = sphi 0, %s67
    %s69 = sphi 0, %s67
    %s70 = sphi 0, %s69
    %s84 = sphi 0, %s70
    %s88 = sphi 0, %s88
    %s90 = sphi 0, %s88
    %s91 = sphi 0, %s90
    %s105 = sphi 0, %s91
    %s111 = sphi 0, %s113
    %s114 = sphi 0, %s111
    %s115 = sphi 0, %s114
    %s131 = sphi 0, %s115
    %s137 = sphi 0, %s139
    %s140 = sphi 0, %s137
    %s141 = sphi 0, %s140
    %s157 = sphi 0, %s141
  $region4: #{bottleneck_forward_nhwc.6} parent=0 // loop_header_branch
    %15 = sbr.rel (%p13) target = $region8
  $region5: #{bottleneck_forward_nhwc.6} parent=0 // loop_body
    %s17 = ssub.s32 %s12, 1
    %s18 = ssub.s32 %s12, 2
    %s19 = sadd.s32 %s12, 1
    %s20 = ssub.s32 %s12, %s19
    %p21 = scmp.eq.s32.totalorder %s20, 0
    %s23 = sadd.s32 %s22, 1
    %s24 = scalar_select %p21, %s22, %s23
    %p27 = pneg %p21
    %p28 = scmp.eq.s32.totalorder %s12, 3
    %p29 = por %p27, %p28
    %p30 = scmp.ne.s32.totalorder %s22, %s25
    %p31 = scmp.eq.s32.totalorder %s12, 0
    %p32 = por %p30, %p31
    %p33 = scmp.ne.s32.totalorder %s22, %s25
    %p34 = scmp.eq.s32.totalorder %s17, 3
    %p35 = por %p33, %p34
    %p36 = scmp.ne.s32.totalorder %s25, %s26
    %p37 = scmp.eq.s32.totalorder %s17, 0
    %p38 = por %p36, %p37
    %p39 = scmp.ne.s32.totalorder %s25, %s26
    %p40 = scmp.eq.s32.totalorder %s18, 3
    %p41 = por %p39, %p40
    %p43 = scmp.ne.s32.totalorder %s26, %s42
    %p44 = scmp.eq.s32.totalorder %s18, 0
    %p45 = por %p43, %p44
    %s47 = sadd.s32 %s46, 1
    %p50 = scmp.eq.s32.totalorder %s12, 3
    %p51 = scmp.ne.s32.totalorder %s46, %s48
    %p52 = scmp.eq.s32.totalorder %s12, 0
    %p53 = por %p51, %p52
    %p54 = scmp.ne.s32.totalorder %s46, %s48
    %p55 = scmp.eq.s32.totalorder %s17, 3
    %p56 = por %p54, %p55
    %p57 = scmp.ne.s32.totalorder %s48, %s49
    %p58 = scmp.eq.s32.totalorder %s17, 0
    %p59 = por %p57, %p58
    %p60 = scmp.ne.s32.totalorder %s48, %s49
    %p61 = scmp.eq.s32.totalorder %s18, 3
    %p62 = por %p60, %p61
    %p64 = scmp.ne.s32.totalorder %s49, %s63
    %p65 = scmp.eq.s32.totalorder %s18, 0
    %p66 = por %p64, %p65
    %s68 = sadd.s32 %s67, 1
    %p71 = scmp.eq.s32.totalorder %s12, 3
    %p72 = scmp.ne.s32.totalorder %s67, %s69
    %p73 = scmp.eq.s32.totalorder %s12, 0
    %p74 = por %p72, %p73
    %p75 = scmp.ne.s32.totalorder %s67, %s69
    %p76 = scmp.eq.s32.totalorder %s17, 3
    %p77 = por %p75, %p76
    %p78 = scmp.ne.s32.totalorder %s69, %s70
    %p79 = scmp.eq.s32.totalorder %s17, 0
    %p80 = por %p78, %p79
    %p81 = scmp.ne.s32.totalorder %s69, %s70
    %p82 = scmp.eq.s32.totalorder %s18, 3
    %p83 = por %p81, %p82
    %p85 = scmp.ne.s32.totalorder %s70, %s84
    %p86 = scmp.eq.s32.totalorder %s18, 0
    %p87 = por %p85, %p86
    %s89 = sadd.s32 %s88, 1
    %p92 = scmp.eq.s32.totalorder %s12, 3
    %p93 = scmp.ne.s32.totalorder %s88, %s90
    %p94 = scmp.eq.s32.totalorder %s12, 0
    %p95 = por %p93, %p94
    %p96 = scmp.ne.s32.totalorder %s88, %s90
    %p97 = scmp.eq.s32.totalorder %s17, 3
    %p98 = por %p96, %p97
    %p99 = scmp.ne.s32.totalorder %s90, %s91
    %p100 = scmp.eq.s32.totalorder %s17, 0
    %p101 = por %p99, %p100
    %p102 = scmp.ne.s32.totalorder %s90, %s91
    %p103 = scmp.eq.s32.totalorder %s18, 3
    %p104 = por %p102, %p103
    %p106 = scmp.ne.s32.totalorder %s91, %s105
    %p107 = scmp.eq.s32.totalorder %s18, 0
    %p108 = por %p106, %p107
    %s109 = ssub.s32 %s12, %s19
    %p110 = scmp.eq.s32.totalorder %s109, 0
    %s112 = sadd.s32 %s111, 1
    %s113 = scalar_select %p110, %s111, %s112
    %p116 = pneg %p110
    %p117 = scmp.eq.s32.totalorder %s12, 3
    %p118 = por %p116, %p117
    %p119 = scmp.ne.s32.totalorder %s111, %s114
    %p120 = scmp.eq.s32.totalorder %s12, 0
    %p121 = por %p119, %p120
    %p122 = scmp.ne.s32.totalorder %s111, %s114
    %p123 = scmp.eq.s32.totalorder %s17, 3
    %p124 = por %p122, %p123
    %p125 = scmp.ne.s32.totalorder %s114, %s115
    %p126 = scmp.eq.s32.totalorder %s17, 0
    %p127 = por %p125, %p126
    %p128 = scmp.ne.s32.totalorder %s114, %s115
    %p129 = scmp.eq.s32.totalorder %s18, 3
    %p130 = por %p128, %p129
    %p132 = scmp.ne.s32.totalorder %s115, %s131
    %p133 = scmp.eq.s32.totalorder %s18, 0
    %p134 = por %p132, %p133
    %s135 = ssub.s32 %s12, %s19
    %p136 = scmp.eq.s32.totalorder %s135, 0
    %s138 = sadd.s32 %s137, 1
    %s139 = scalar_select %p136, %s137, %s138
    %p142 = pneg %p136
    %p143 = scmp.eq.s32.totalorder %s12, 3
    %p144 = por %p142, %p143
    %p145 = scmp.ne.s32.totalorder %s137, %s140
    %p146 = scmp.eq.s32.totalorder %s12, 0
    %p147 = por %p145, %p146
    %p148 = scmp.ne.s32.totalorder %s137, %s140
    %p149 = scmp.eq.s32.totalorder %s17, 3
    %p150 = por %p148, %p149
    %p151 = scmp.ne.s32.totalorder %s140, %s141
    %p152 = scmp.eq.s32.totalorder %s17, 0
    %p153 = por %p151, %p152
    %p154 = scmp.ne.s32.totalorder %s140, %s141
    %p155 = scmp.eq.s32.totalorder %s18, 3
    %p156 = por %p154, %p155
    %p158 = scmp.ne.s32.totalorder %s141, %s157
    %p159 = scmp.eq.s32.totalorder %s18, 0
    %p160 = por %p158, %p159
    %p161 = scmp.le.s32.totalorder 1, %s12
    %p162 = scmp.lt.s32.totalorder %s12, 5
    %p163 = pnand %p161, %p162
    %p164 = pneg %p163
    // Predicated region
    $region9: #{bottleneck_forward_nhwc.6} parent=5 // pred_check
      _
    $region10: #{bottleneck_forward_nhwc.6} parent=5 // pred_check_branch
      %166 = sbr.rel (%p163) target = $region12
    $region11: #{bottleneck_forward_nhwc.6} parent=5 // pred_region
      %s167 = ssub.s32 %s12, 1
      // Predicated region
      $region13: #{bottleneck_forward_nhwc.6} parent=11 // pred_check
        %p168 = pneg %p59
      $region14: #{bottleneck_forward_nhwc.6} parent=11 // pred_check_branch
        %170 = sbr.rel (%p168) target = $region16
      $region15: #{bottleneck_forward_nhwc.6} parent=11 // pred_region
        _
      $region16: #{bottleneck_forward_nhwc.6} parent=11 // pred_fallthru
        _
      // Predicated region
      $region17: #{bottleneck_forward_nhwc.6} parent=11 // pred_check
        %p171 = pneg %p80
      $region18: #{bottleneck_forward_nhwc.6} parent=11 // pred_check_branch
        %173 = sbr.rel (%p171) target = $region20
      $region19: #{bottleneck_forward_nhwc.6} parent=11 // pred_region
        _
      $region20: #{bottleneck_forward_nhwc.6} parent=11 // pred_fallthru
        _
      // Predicated region
      $region21: #{bottleneck_forward_nhwc.6} parent=11 // pred_check
        %p174 = pneg %p101
      $region22: #{bottleneck_forward_nhwc.6} parent=11 // pred_check_branch
        %176 = sbr.rel (%p174) target = $region24
      $region23: #{bottleneck_forward_nhwc.6} parent=11 // pred_region
        _
      $region24: #{bottleneck_forward_nhwc.6} parent=11 // pred_fallthru
        _
    $region12: #{bottleneck_forward_nhwc.6} parent=5 // pred_fallthru
      _
    %p177 = scmp.lt.s32.totalorder %s12, 4
    // Predicated region
    $region25: #{bottleneck_forward_nhwc.6} parent=5 // pred_check
      %p178 = pneg %p177
    $region26: #{bottleneck_forward_nhwc.6} parent=5 // pred_check_branch
      %180 = sbr.rel (%p178) target = $region28
    $region27: #{bottleneck_forward_nhwc.6} parent=5 // pred_region
      // Predicated region
      $region29: #{bottleneck_forward_nhwc.6} parent=27 // pred_check
        %p181 = pneg %p32
      $region30: #{bottleneck_forward_nhwc.6} parent=27 // pred_check_branch
        %183 = sbr.rel (%p181) target = $region32
      $region31: #{bottleneck_forward_nhwc.6} parent=27 // pred_region
        %s184 = smul.u32 16, %s12
        %p185 = scmp.lt.s32.totalorder %s184, 63
        %s186 = scalar_select %p185, %s184, 63
        %s187 = smul.addr %s186, 8
        %s188 = scalar_lea.vmem %s0, %s187
        %s189 = smul.u32 16, %s12
      $region32: #{bottleneck_forward_nhwc.6} parent=27 // pred_fallthru
        _
    $region28: #{bottleneck_forward_nhwc.6} parent=5 // pred_fallthru
      _
    %p190 = scmp.le.s32.totalorder 1, %s12
    %p191 = scmp.lt.s32.totalorder %s12, 5
    %p192 = pnand %p190, %p191
    %p193 = pneg %p192
    // Predicated region
    $region33: #{bottleneck_forward_nhwc.6} parent=5 // pred_check
      _
    $region34: #{bottleneck_forward_nhwc.6} parent=5 // pred_check_branch
      %195 = sbr.rel (%p192) target = $region36
    $region35: #{bottleneck_forward_nhwc.6} parent=5 // pred_region
      %s196 = ssub.s32 %s12, 1
      %s197 = smul.u32 16, %s17
      %p198 = scmp.lt.s32.totalorder %s197, 63
      %s199 = scalar_select %p198, %s197, 63
      %s200 = smul.addr %s199, 8
      %s201 = scalar_lea.vmem %s0, %s200
      %p202 = pneg %p38
      %p203 = pneg %p35
      %p204 = pneg %p59
      %p205 = pneg %p56
      %p206 = pneg %p80
      %p207 = pneg %p77
      %p208 = pneg %p101
      %p209 = pneg %p98
      %p210 = pneg %p127
      %p211 = pneg %p124
      %s212 = smul.u32 16, %s17
      %p213 = scmp.lt.s32.totalorder %s212, 63
      %s214 = scalar_select %p213, %s212, 63
      %s215 = smul.addr %s214, 8
      %s216 = scalar_lea.vmem %s4, %s215
      %p217 = pneg %p153
      %p218 = pneg %p150
      %p219 = scmp.lt.s32.totalorder %s17, 3
      %s220 = scalar_select %p219, %s17, 3
      %s221 = smul.addr %s220, 2
      %s222 = scalar_lea.vmem %s5, %s221
      %s223 = smul.u32 16, %s17
      %p224 = scmp.lt.s32.totalorder %s223, 63
      %s225 = scalar_select %p224, %s223, 63
      %s226 = smul.addr %s225, 8
      %s227 = scalar_lea.vmem %s0, %s226
      %s228 = smul.u32 16, %s17
      %s229 = smul.u32 16, %s17
      %p230 = scmp.lt.s32.totalorder %s229, 63
      %s231 = scalar_select %p230, %s229, 63
      %s232 = smul.addr %s231, 8
      %s233 = scalar_lea.vmem %s4, %s232
      %s234 = smul.u32 16, %s17
      %p235 = scmp.lt.s32.totalorder %s17, 3
      %s236 = scalar_select %p235, %s17, 3
      %s237 = smul.addr %s236, 2
      %s238 = scalar_lea.vmem %s5, %s237
      %v240 = vld [vmem:[%s227] sm:$0xff]
      %v241 = vld [vmem:[%s227 + $0x8] sm:$0xff]
      %v242 = vld [vmem:[%s227 + $0x10] sm:$0xff]
      %v243 = vld [vmem:[%s227 + $0x18] sm:$0xff]
      %v244 = vld [vmem:[%s227 + $0x20] sm:$0xff]
      %v245 = vld [vmem:[%s227 + $0x28] sm:$0xff]
      %v246 = vld [vmem:[%s227 + $0x30] sm:$0xff]
      %v247 = vld [vmem:[%s227 + $0x38] sm:$0xff]
      %v248 = vld [vmem:[%s227 + $0x40] sm:$0xff]
      %v249 = vld [vmem:[%s227 + $0x48] sm:$0xff]
      %v250 = vld [vmem:[%s227 + $0x50] sm:$0xff]
      %v251 = vld [vmem:[%s227 + $0x58] sm:$0xff]
      %v252 = vld [vmem:[%s227 + $0x60] sm:$0xff]
      %v253 = vld [vmem:[%s227 + $0x68] sm:$0xff]
      %v254 = vld [vmem:[%s227 + $0x70] sm:$0xff]
      %v255 = vld [vmem:[%s227 + $0x78] sm:$0xff]
      %v256 = vld [vmem:[%s2] sm:$0x1]
      %v258 = vlaneseq
      %v259 = vshrl.u32 %v258, 7
      %v260 = vsub.s32 0, %v259
      %v261 = vrot.slane %v256, %v260
      %v263 = vmul.f32 %v240, %v261
      %v264 = vmul.f32 %v241, %v261
      %v265 = vmul.f32 %v242, %v261
      %v266 = vmul.f32 %v243, %v261
      %v267 = vmul.f32 %v244, %v261
      %v268 = vmul.f32 %v245, %v261
      %v269 = vmul.f32 %v246, %v261
      %v270 = vmul.f32 %v247, %v261
      %v271 = vmul.f32 %v248, %v261
      %v272 = vmul.f32 %v249, %v261
      %v273 = vmul.f32 %v250, %v261
      %v274 = vmul.f32 %v251, %v261
      %v275 = vmul.f32 %v252, %v261
      %v276 = vmul.f32 %v253, %v261
      %v277 = vmul.f32 %v254, %v261
      %v278 = vmul.f32 %v255, %v261
      %v279 = vld [vmem:[%s3] sm:$0x1]
      %v281 = vlaneseq
      %v282 = vshrl.u32 %v281, 7
      %v283 = vsub.s32 0, %v282
      %v284 = vrot.slane %v279, %v283
      %v286 = vadd.f32 %v263, %v284
      %v287 = vadd.f32 %v264, %v284
      %v288 = vadd.f32 %v265, %v284
      %v289 = vadd.f32 %v266, %v284
      %v290 = vadd.f32 %v267, %v284
      %v291 = vadd.f32 %v268, %v284
      %v292 = vadd.f32 %v269, %v284
      %v293 = vadd.f32 %v270, %v284
      %v294 = vadd.f32 %v271, %v284
      %v295 = vadd.f32 %v272, %v284
      %v296 = vadd.f32 %v273, %v284
      %v297 = vadd.f32 %v274, %v284
      %v298 = vadd.f32 %v275, %v284
      %v299 = vadd.f32 %v276, %v284
      %v300 = vadd.f32 %v277, %v284
      %v301 = vadd.f32 %v278, %v284
      %v302 = vmax.f32 %v286, 0.0
      %v303 = vmax.f32 %v287, 0.0
      %v304 = vmax.f32 %v288, 0.0
      %v305 = vmax.f32 %v289, 0.0
      %v306 = vmax.f32 %v290, 0.0
      %v307 = vmax.f32 %v291, 0.0
      %v308 = vmax.f32 %v292, 0.0
      %v309 = vmax.f32 %v293, 0.0
      %v310 = vmax.f32 %v294, 0.0
      %v311 = vmax.f32 %v295, 0.0
      %v312 = vmax.f32 %v296, 0.0
      %v313 = vmax.f32 %v297, 0.0
      %v314 = vmax.f32 %v298, 0.0
      %v315 = vmax.f32 %v299, 0.0
      %v316 = vmax.f32 %v300, 0.0
      %v317 = vmax.f32 %v301, 0.0
      %v318 = vpack.c.bf16 %v303, %v302
      %v319 = vpack.c.bf16 %v305, %v304
      %v320 = vpack.c.bf16 %v307, %v306
      %v321 = vpack.c.bf16 %v309, %v308
      %v322 = vpack.c.bf16 %v311, %v310
      %v323 = vpack.c.bf16 %v313, %v312
      %v324 = vpack.c.bf16 %v315, %v314
      %v325 = vpack.c.bf16 %v317, %v316
      %v326 = vld [vmem:[%s1] sm:$0x3]
      %vm327 = vcmask 31744
      %v329 = vsel %vm327, %v318, 0
      %v332 = vsel %vm327, %v319, 0
      %v335 = vsel %vm327, %v320, 0
      %v338 = vsel %vm327, %v321, 0
      %v341 = vsel %vm327, %v322, 0
      %v344 = vsel %vm327, %v323, 0
      %v347 = vsel %vm327, %v324, 0
      %v350 = vsel %vm327, %v325, 0
      %vm352 = vcmask 1041408
      %v354 = vsel %vm352, %v326, 0
      %356 = vmatprep.subr.bf16.mxu0 0
      %357 = vmatpush1.bf16.msra.mxu0 %v354
      %358 = vmatprep.subr.bf16.mxu0 0
      %359 = vmatpush1.bf16.msra.mxu0 0
      %360 = vmatprep.subr.bf16.mxu0 0
      %361 = vmatpush1.bf16.msra.mxu0 0
      %362 = vmatprep.subr.bf16.mxu0 0
      %363 = vmatpush1.bf16.msra.mxu0 0
      %364 = vmatprep.subr.bf16.mxu0 0
      %365 = vmatpush1.bf16.msra.mxu0 0
      %366 = vmatprep.subr.bf16.mxu0 0
      %367 = vmatpush1.bf16.msra.mxu0 0
      %368 = vmatprep.subr.bf16.mxu0 0
      %369 = vmatpush1.bf16.msra.mxu0 0
      %370 = vmatprep.subr.bf16.mxu0 0
      %371 = vmatpush1.bf16.msra.mxu0 0
      %372 = vmatprep.subr.bf16.mxu0 0
      %373 = vmatpush1.bf16.msra.mxu0 0
      %374 = vmatprep.subr.bf16.mxu0 0
      %375 = vmatpush1.bf16.msra.mxu0 0
      %376 = vmatprep.subr.bf16.mxu0 0
      %377 = vmatpush1.bf16.msra.mxu0 0
      %378 = vmatprep.subr.bf16.mxu0 0
      %379 = vmatpush1.bf16.msra.mxu0 0
      %380 = vmatprep.subr.bf16.mxu0 0
      %381 = vmatpush1.bf16.msra.mxu0 0
      %382 = vmatprep.subr.bf16.mxu0 0
      %383 = vmatpush1.bf16.msra.mxu0 0
      %384 = vmatprep.subr.bf16.mxu0 0
      %385 = vmatpush1.bf16.msra.mxu0 0
      %386 = vmatprep.subr.bf16.mxu0 0
      %387 = vmatpush1.bf16.msra.mxu0 0
      %388 = vmatprep.mubr.bf16.mxu0 0
      %389 = vmatmul.mubr.bf16.gmra.mrb[0].mxu0 %v329
      %v390 = vpop.f32.mrb[0].mxu0
      %v391 = vadd.f32 0.0, %v390
      %v392 = vpop.f32.mrb[0].mxu0
      %v393 = vpop.f32.mrb[0].mxu0
      %v394 = vadd.f32 0.0, %v393
      %v395 = vpop.f32.mrb[0].mxu0
      %396 = vmatprep.mubr.bf16.mxu0 0
      %397 = vmatmul.mubr.bf16.gmra.mrb[0].mxu0 %v332
      %v398 = vpop.f32.mrb[0].mxu0
      %v399 = vadd.f32 0.0, %v398
      %v400 = vpop.f32.mrb[0].mxu0
      %v401 = vpop.f32.mrb[0].mxu0
      %v402 = vadd.f32 0.0, %v401
      %v403 = vpop.f32.mrb[0].mxu0
      %404 = vmatprep.mubr.bf16.mxu0 0
      %405 = vmatmul.mubr.bf16.gmra.mrb[0].mxu0 %v335
      %v406 = vpop.f32.mrb[0].mxu0
      %v407 = vadd.f32 0.0, %v406
      %v408 = vpop.f32.mrb[0].mxu0
      %v409 = vpop.f32.mrb[0].mxu0
      %v410 = vadd.f32 0.0, %v409
      %v411 = vpop.f32.mrb[0].mxu0
      %412 = vmatprep.mubr.bf16.mxu0 0
      %413 = vmatmul.mubr.bf16.gmra.mrb[0].mxu0 %v338
      %v414 = vpop.f32.mrb[0].mxu0
      %v415 = vadd.f32 0.0, %v414
      %v416 = vpop.f32.mrb[0].mxu0
      %v417 = vpop.f32.mrb[0].mxu0
      %v418 = vadd.f32 0.0, %v417
      %v419 = vpop.f32.mrb[0].mxu0
      %420 = vmatprep.mubr.bf16.mxu0 0
      %421 = vmatmul.mubr.bf16.gmra.mrb[0].mxu0 %v341
      %v422 = vpop.f32.mrb[0].mxu0
      %v423 = vadd.f32 0.0, %v422
      %v424 = vpop.f32.mrb[0].mxu0
      %v425 = vpop.f32.mrb[0].mxu0
      %v426 = vadd.f32 0.0, %v425
      %v427 = vpop.f32.mrb[0].mxu0
      %428 = vmatprep.mubr.bf16.mxu0 0
      %429 = vmatmul.mubr.bf16.gmra.mrb[0].mxu0 %v344
      %v430 = vpop.f32.mrb[0].mxu0
      %v431 = vadd.f32 0.0, %v430
      %v432 = vpop.f32.mrb[0].mxu0
      %v433 = vpop.f32.mrb[0].mxu0
      %v434 = vadd.f32 0.0, %v433
      %v435 = vpop.f32.mrb[0].mxu0
      %436 = vmatprep.mubr.bf16.mxu0 0
      %437 = vmatmul.mubr.bf16.gmra.mrb[0].mxu0 %v347
      %v438 = vpop.f32.mrb[0].mxu0
      %v439 = vadd.f32 0.0, %v438
      %v440 = vpop.f32.mrb[0].mxu0
      %v441 = vpop.f32.mrb[0].mxu0
      %v442 = vadd.f32 0.0, %v441
      %v443 = vpop.f32.mrb[0].mxu0
      %444 = vmatprep.mubr.bf16.mxu0 0
      %445 = vmatmul.mubr.bf16.gmra.mrb[0].mxu0 %v350
      %v446 = vpop.f32.mrb[0].mxu0
      %v447 = vadd.f32 0.0, %v446
      %v448 = vpop.f32.mrb[0].mxu0
      %v449 = vpop.f32.mrb[0].mxu0
      %v450 = vadd.f32 0.0, %v449
      %v451 = vpop.f32.mrb[0].mxu0
      %452 = vdwg.mxu0
      %vm453 = vcmask 130048
      %454 = vst.msk [vmem:[%s233] sm:$0xff] %vm453, %v391
      %455 = vst.msk [vmem:[%s233 + $0x8] sm:$0xff] %vm453, %v394
      %456 = vst.msk [vmem:[%s233 + $0x10] sm:$0xff] %vm453, %v399
      %457 = vst.msk [vmem:[%s233 + $0x18] sm:$0xff] %vm453, %v402
      %458 = vst.msk [vmem:[%s233 + $0x20] sm:$0xff] %vm453, %v407
      %459 = vst.msk [vmem:[%s233 + $0x28] sm:$0xff] %vm453, %v410
      %460 = vst.msk [vmem:[%s233 + $0x30] sm:$0xff] %vm453, %v415
      %461 = vst.msk [vmem:[%s233 + $0x38] sm:$0xff] %vm453, %v418
      %462 = vst.msk [vmem:[%s233 + $0x40] sm:$0xff] %vm453, %v423
      %463 = vst.msk [vmem:[%s233 + $0x48] sm:$0xff] %vm453, %v426
      %464 = vst.msk [vmem:[%s233 + $0x50] sm:$0xff] %vm453, %v431
      %465 = vst.msk [vmem:[%s233 + $0x58] sm:$0xff] %vm453, %v434
      %466 = vst.msk [vmem:[%s233 + $0x60] sm:$0xff] %vm453, %v439
      %467 = vst.msk [vmem:[%s233 + $0x68] sm:$0xff] %vm453, %v442
      %468 = vst.msk [vmem:[%s233 + $0x70] sm:$0xff] %vm453, %v447
      %469 = vst.msk [vmem:[%s233 + $0x78] sm:$0xff] %vm453, %v450
      %v470 = vsel %vm453, %v391, 0.0
      %v471 = vsel %vm453, %v394, 0.0
      %v472 = vadd.f32 %v470, %v471
      %v473 = vsel %vm453, %v399, 0.0
      %v474 = vadd.f32 %v472, %v473
      %v475 = vsel %vm453, %v402, 0.0
      %v476 = vadd.f32 %v474, %v475
      %v477 = vsel %vm453, %v407, 0.0
      %v478 = vadd.f32 %v476, %v477
      %v479 = vsel %vm453, %v410, 0.0
      %v480 = vadd.f32 %v478, %v479
      %v481 = vsel %vm453, %v415, 0.0
      %v482 = vadd.f32 %v480, %v481
      %v483 = vsel %vm453, %v418, 0.0
      %v484 = vadd.f32 %v482, %v483
      %v485 = vsel %vm453, %v423, 0.0
      %v486 = vadd.f32 %v484, %v485
      %v487 = vsel %vm453, %v426, 0.0
      %v488 = vadd.f32 %v486, %v487
      %v489 = vsel %vm453, %v431, 0.0
      %v490 = vadd.f32 %v488, %v489
      %v491 = vsel %vm453, %v434, 0.0
      %v492 = vadd.f32 %v490, %v491
      %v493 = vsel %vm453, %v439, 0.0
      %v494 = vadd.f32 %v492, %v493
      %v495 = vsel %vm453, %v442, 0.0
      %v496 = vadd.f32 %v494, %v495
      %v497 = vsel %vm453, %v447, 0.0
      %v498 = vadd.f32 %v496, %v497
      %v499 = vsel %vm453, %v450, 0.0
      %v500 = vadd.f32 %v498, %v499
      %v501 = vrot.slane %v500, 4
      %v502 = vadd.f32 %v500, %v501
      %v503 = vrot.slane %v502, 2
      %v504 = vadd.f32 %v502, %v503
      %v505 = vrot.slane %v504, 1
      %v506 = vadd.f32 %v504, %v505
      %v507 = vmul.f32 %v391, %v391
      %v508 = vmul.f32 %v394, %v394
      %v509 = vmul.f32 %v399, %v399
      %v510 = vmul.f32 %v402, %v402
      %v511 = vmul.f32 %v407, %v407
      %v512 = vmul.f32 %v410, %v410
      %v513 = vmul.f32 %v415, %v415
      %v514 = vmul.f32 %v418, %v418
      %v515 = vmul.f32 %v423, %v423
      %v516 = vmul.f32 %v426, %v426
      %v517 = vmul.f32 %v431, %v431
      %v518 = vmul.f32 %v434, %v434
      %v519 = vmul.f32 %v439, %v439
      %v520 = vmul.f32 %v442, %v442
      %v521 = vmul.f32 %v447, %v447
      %v522 = vmul.f32 %v450, %v450
      %v523 = vsel %vm453, %v507, 0.0
      %v524 = vsel %vm453, %v508, 0.0
      %v525 = vadd.f32 %v523, %v524
      %v526 = vsel %vm453, %v509, 0.0
      %v527 = vadd.f32 %v525, %v526
      %v528 = vsel %vm453, %v510, 0.0
      %v529 = vadd.f32 %v527, %v528
      %v530 = vsel %vm453, %v511, 0.0
      %v531 = vadd.f32 %v529, %v530
      %v532 = vsel %vm453, %v512, 0.0
      %v533 = vadd.f32 %v531, %v532
      %v534 = vsel %vm453, %v513, 0.0
      %v535 = vadd.f32 %v533, %v534
      %v536 = vsel %vm453, %v514, 0.0
      %v537 = vadd.f32 %v535, %v536
      %v538 = vsel %vm453, %v515, 0.0
      %v539 = vadd.f32 %v537, %v538
      %v540 = vsel %vm453, %v516, 0.0
      %v541 = vadd.f32 %v539, %v540
      %v542 = vsel %vm453, %v517, 0.0
      %v543 = vadd.f32 %v541, %v542
      %v544 = vsel %vm453, %v518, 0.0
      %v545 = vadd.f32 %v543, %v544
      %v546 = vsel %vm453, %v519, 0.0
      %v547 = vadd.f32 %v545, %v546
      %v548 = vsel %vm453, %v520, 0.0
      %v549 = vadd.f32 %v547, %v548
      %v550 = vsel %vm453, %v521, 0.0
      %v551 = vadd.f32 %v549, %v550
      %v552 = vsel %vm453, %v522, 0.0
      %v553 = vadd.f32 %v551, %v552
      %v554 = vrot.slane %v553, 4
      %v555 = vadd.f32 %v553, %v554
      %v556 = vrot.slane %v555, 2
      %v557 = vadd.f32 %v555, %v556
      %v558 = vrot.slane %v557, 1
      %v559 = vadd.f32 %v557, %v558
      %vm560 = vcmask 1040384
      %v561 = vsel %vm560, %v506, %v559
      %vm562 = vcmask 123904
      %563 = vst.msk [vmem:[%s238] sm:$0x3] %vm562, %v561
      %s564 = smul.u32 16, %s17
      %p565 = scmp.lt.s32.totalorder %s564, 63
      %s566 = scalar_select %p565, %s564, 63
      %s567 = smul.addr %s566, 8
      %s568 = scalar_lea.vmem %s4, %s567
      %p569 = scmp.lt.s32.totalorder %s17, 3
      %s570 = scalar_select %p569, %s17, 3
      %s571 = smul.addr %s570, 2
      %s572 = scalar_lea.vmem %s5, %s571
      // Predicated region
      $region37: #{bottleneck_forward_nhwc.6} parent=35 // pred_check
        %p573 = pneg %p124
      $region38: #{bottleneck_forward_nhwc.6} parent=35 // pred_check_branch
        %575 = sbr.rel (%p573) target = $region40
      $region39: #{bottleneck_forward_nhwc.6} parent=35 // pred_region
        %s576 = smul.u32 16, %s17
      $region40: #{bottleneck_forward_nhwc.6} parent=35 // pred_fallthru
        _
      // Predicated region
      $region41: #{bottleneck_forward_nhwc.6} parent=35 // pred_check
        %p577 = pneg %p150
      $region42: #{bottleneck_forward_nhwc.6} parent=35 // pred_check_branch
        %579 = sbr.rel (%p577) target = $region44
      $region43: #{bottleneck_forward_nhwc.6} parent=35 // pred_region
        _
      $region44: #{bottleneck_forward_nhwc.6} parent=35 // pred_fallthru
        _
    $region36: #{bottleneck_forward_nhwc.6} parent=5 // pred_fallthru
      _
    %p580 = scmp.le.s32.totalorder 2, %s12
    // Predicated region
    $region45: #{bottleneck_forward_nhwc.6} parent=5 // pred_check
      %p581 = pneg %p580
    $region46: #{bottleneck_forward_nhwc.6} parent=5 // pred_check_branch
      %583 = sbr.rel (%p581) target = $region48
    $region47: #{bottleneck_forward_nhwc.6} parent=5 // pred_region
      %s584 = ssub.s32 %s12, 2
      // Predicated region
      $region49: #{bottleneck_forward_nhwc.6} parent=47 // pred_check
        %p585 = pneg %p130
      $region50: #{bottleneck_forward_nhwc.6} parent=47 // pred_check_branch
        %587 = sbr.rel (%p585) target = $region52
      $region51: #{bottleneck_forward_nhwc.6} parent=47 // pred_region
        %s588 = smul.u32 16, %s18
        %p589 = scmp.lt.s32.totalorder %s588, 63
        %s590 = scalar_select %p589, %s588, 63
        %s591 = smul.addr %s590, 8
        %s592 = scalar_lea.vmem %s4, %s591
      $region52: #{bottleneck_forward_nhwc.6} parent=47 // pred_fallthru
        _
      // Predicated region
      $region53: #{bottleneck_forward_nhwc.6} parent=47 // pred_check
        %p593 = pneg %p156
      $region54: #{bottleneck_forward_nhwc.6} parent=47 // pred_check_branch
        %595 = sbr.rel (%p593) target = $region56
      $region55: #{bottleneck_forward_nhwc.6} parent=47 // pred_region
        %p596 = scmp.lt.s32.totalorder %s18, 3
        %s597 = scalar_select %p596, %s18, 3
        %s598 = smul.addr %s597, 2
        %s599 = scalar_lea.vmem %s5, %s598
      $region56: #{bottleneck_forward_nhwc.6} parent=47 // pred_fallthru
        _
    $region48: #{bottleneck_forward_nhwc.6} parent=5 // pred_fallthru
      _
  $region6: #{bottleneck_forward_nhwc.6} parent=0 // loop_footer
    %s16 = sadd.s32 1, %s12
  $region7: #{bottleneck_forward_nhwc.6} parent=0 // loop_footer_branch
    %11 = sbr.rel target = $region3
  $region8: #{bottleneck_forward_nhwc.6} parent=0 // loop_exit
    _

// kernel: bottleneck_forward_nhwc.7
$region0: #{bottleneck_forward_nhwc.7}
  #allocation0 [shape = 'u32[]', space=smem, size = 0x4, offset = 0x4, fixed_abs, tag = 'smem constant byte address 0x4 - core index']
  #allocation1 [shape = 'u32[144,128]{1,0:T(1,128)}', space=vmem, size = 0x12000, scoped, tag = 'internal scratch']
  %s0 = inlined_call_operand.vmem [shape: f32[512,16], index: 0, kind: input, shape index: {}]
  %s1 = inlined_call_operand.vmem [shape: f32[512,16], index: 1, kind: input, shape index: {}]
  %s2 = inlined_call_operand.vmem [shape: f32[1,16], index: 2, kind: input, shape index: {}]
  %s3 = inlined_call_operand.vmem [shape: f32[1,16], index: 3, kind: input, shape index: {}]
  %s4 = inlined_call_operand.hbm [shape: f32[512,16], index: 4, kind: output, shape index: {}]
  %s5 = sld [smem:[#allocation0]]
  $region49: #{bottleneck_forward_nhwc.7} parent=0
    _
  %s7 = ssub.s32 1, %s5
  %s8 = scalar_select 0, %s7, %s5
  $region1: #{bottleneck_forward_nhwc.7} parent=0
    #allocation2 [shape = 'u8[131072]{0}', space=vmem, size = 0x20000, scoped, tag = 'output window, operand 0']
    #allocation3 [shape = 's32[2]{0}', space=sflag, size = 0x8, scoped, tag = 'scoped memory for bottleneck_forward_nhwc.7']
    %9 = vsyncpa [#allocation3], 0
    %s10 = scalar_lea.sflag [#allocation3], 1
    %11 = vsyncpa %s10, 0
    loop: start=0, step=1, limit=6
    $region2: #{bottleneck_forward_nhwc.7} parent=1 // loop_pre_header
      _
    $region3: #{bottleneck_forward_nhwc.7} parent=1 // loop_header
      %s13 = sphi 0, %s17
      %p14 = scmp.ge.s32.totalorder %s13, 6
      %s23 = sphi 0, %s25
      %s26 = sphi 0, %s23
      %s27 = sphi 0, %s26
      %s43 = sphi 0, %s27
      %s49 = sphi 0, %s51
      %s52 = sphi 0, %s49
      %s53 = sphi 0, %s52
      %s69 = sphi 0, %s53
      %s73 = sphi 0, %s73
      %s75 = sphi 0, %s73
      %s76 = sphi 0, %s75
      %s90 = sphi 0, %s76
      %s94 = sphi 0, %s94
      %s96 = sphi 0, %s94
      %s97 = sphi 0, %s96
      %s111 = sphi 0, %s97
      %s117 = sphi 0, %s119
      %s120 = sphi 0, %s117
      %s121 = sphi 0, %s120
      %s137 = sphi 0, %s121
    $region4: #{bottleneck_forward_nhwc.7} parent=1 // loop_header_branch
      %16 = sbr.rel (%p14) target = $region8
    $region5: #{bottleneck_forward_nhwc.7} parent=1 // loop_body
      %s18 = ssub.s32 %s13, 1
      %s19 = ssub.s32 %s13, 2
      %s20 = sadd.s32 %s13, 1
      %s21 = ssub.s32 %s13, %s20
      %p22 = scmp.eq.s32.totalorder %s21, 0
      %s24 = sadd.s32 %s23, 1
      %s25 = scalar_select %p22, %s23, %s24
      %p28 = pneg %p22
      %p29 = scmp.eq.s32.totalorder %s13, 3
      %p30 = por %p28, %p29
      %p31 = scmp.ne.s32.totalorder %s23, %s26
      %p32 = scmp.eq.s32.totalorder %s13, 0
      %p33 = por %p31, %p32
      %p34 = scmp.ne.s32.totalorder %s23, %s26
      %p35 = scmp.eq.s32.totalorder %s18, 3
      %p36 = por %p34, %p35
      %p37 = scmp.ne.s32.totalorder %s26, %s27
      %p38 = scmp.eq.s32.totalorder %s18, 0
      %p39 = por %p37, %p38
      %p40 = scmp.ne.s32.totalorder %s26, %s27
      %p41 = scmp.eq.s32.totalorder %s19, 3
      %p42 = por %p40, %p41
      %p44 = scmp.ne.s32.totalorder %s27, %s43
      %p45 = scmp.eq.s32.totalorder %s19, 0
      %p46 = por %p44, %p45
      %s47 = ssub.s32 %s13, %s20
      %p48 = scmp.eq.s32.totalorder %s47, 0
      %s50 = sadd.s32 %s49, 1
      %s51 = scalar_select %p48, %s49, %s50
      %p54 = pneg %p48
      %p55 = scmp.eq.s32.totalorder %s13, 3
      %p56 = por %p54, %p55
      %p57 = scmp.ne.s32.totalorder %s49, %s52
      %p58 = scmp.eq.s32.totalorder %s13, 0
      %p59 = por %p57, %p58
      %p60 = scmp.ne.s32.totalorder %s49, %s52
      %p61 = scmp.eq.s32.totalorder %s18, 3
      %p62 = por %p60, %p61
      %p63 = scmp.ne.s32.totalorder %s52, %s53
      %p64 = scmp.eq.s32.totalorder %s18, 0
      %p65 = por %p63, %p64
      %p66 = scmp.ne.s32.totalorder %s52, %s53
      %p67 = scmp.eq.s32.totalorder %s19, 3
      %p68 = por %p66, %p67
      %p70 = scmp.ne.s32.totalorder %s53, %s69
      %p71 = scmp.eq.s32.totalorder %s19, 0
      %p72 = por %p70, %p71
      %s74 = sadd.s32 %s73, 1
      %p77 = scmp.eq.s32.totalorder %s13, 3
      %p78 = scmp.ne.s32.totalorder %s73, %s75
      %p79 = scmp.eq.s32.totalorder %s13, 0
      %p80 = por %p78, %p79
      %p81 = scmp.ne.s32.totalorder %s73, %s75
      %p82 = scmp.eq.s32.totalorder %s18, 3
      %p83 = por %p81, %p82
      %p84 = scmp.ne.s32.totalorder %s75, %s76
      %p85 = scmp.eq.s32.totalorder %s18, 0
      %p86 = por %p84, %p85
      %p87 = scmp.ne.s32.totalorder %s75, %s76
      %p88 = scmp.eq.s32.totalorder %s19, 3
      %p89 = por %p87, %p88
      %p91 = scmp.ne.s32.totalorder %s76, %s90
      %p92 = scmp.eq.s32.totalorder %s19, 0
      %p93 = por %p91, %p92
      %s95 = sadd.s32 %s94, 1
      %p98 = scmp.eq.s32.totalorder %s13, 3
      %p99 = scmp.ne.s32.totalorder %s94, %s96
      %p100 = scmp.eq.s32.totalorder %s13, 0
      %p101 = por %p99, %p100
      %p102 = scmp.ne.s32.totalorder %s94, %s96
      %p103 = scmp.eq.s32.totalorder %s18, 3
      %p104 = por %p102, %p103
      %p105 = scmp.ne.s32.totalorder %s96, %s97
      %p106 = scmp.eq.s32.totalorder %s18, 0
      %p107 = por %p105, %p106
      %p108 = scmp.ne.s32.totalorder %s96, %s97
      %p109 = scmp.eq.s32.totalorder %s19, 3
      %p110 = por %p108, %p109
      %p112 = scmp.ne.s32.totalorder %s97, %s111
      %p113 = scmp.eq.s32.totalorder %s19, 0
      %p114 = por %p112, %p113
      %s115 = ssub.s32 %s13, %s20
      %p116 = scmp.eq.s32.totalorder %s115, 0
      %s118 = sadd.s32 %s117, 1
      %s119 = scalar_select %p116, %s117, %s118
      %p122 = pneg %p116
      %p123 = scmp.eq.s32.totalorder %s13, 3
      %p124 = por %p122, %p123
      %p125 = scmp.ne.s32.totalorder %s117, %s120
      %p126 = scmp.eq.s32.totalorder %s13, 0
      %p127 = por %p125, %p126
      %p128 = scmp.ne.s32.totalorder %s117, %s120
      %p129 = scmp.eq.s32.totalorder %s18, 3
      %p130 = por %p128, %p129
      %p131 = scmp.ne.s32.totalorder %s120, %s121
      %p132 = scmp.eq.s32.totalorder %s18, 0
      %p133 = por %p131, %p132
      %p134 = scmp.ne.s32.totalorder %s120, %s121
      %p135 = scmp.eq.s32.totalorder %s19, 3
      %p136 = por %p134, %p135
      %p138 = scmp.ne.s32.totalorder %s121, %s137
      %p139 = scmp.eq.s32.totalorder %s19, 0
      %p140 = por %p138, %p139
      %p141 = scmp.le.s32.totalorder 1, %s13
      %p142 = scmp.lt.s32.totalorder %s13, 5
      %p143 = pnand %p141, %p142
      %p144 = pneg %p143
      // Predicated region
      $region9: #{bottleneck_forward_nhwc.7} parent=5 // pred_check
        _
      $region10: #{bottleneck_forward_nhwc.7} parent=5 // pred_check_branch
        %146 = sbr.rel (%p143) target = $region12
      $region11: #{bottleneck_forward_nhwc.7} parent=5 // pred_region
        %s147 = ssub.s32 %s13, 1
        // Predicated region
        $region13: #{bottleneck_forward_nhwc.7} parent=11 // pred_check
          %p148 = pneg %p86
        $region14: #{bottleneck_forward_nhwc.7} parent=11 // pred_check_branch
          %150 = sbr.rel (%p148) target = $region16
        $region15: #{bottleneck_forward_nhwc.7} parent=11 // pred_region
          _
        $region16: #{bottleneck_forward_nhwc.7} parent=11 // pred_fallthru
          _
        // Predicated region
        $region17: #{bottleneck_forward_nhwc.7} parent=11 // pred_check
          %p151 = pneg %p107
        $region18: #{bottleneck_forward_nhwc.7} parent=11 // pred_check_branch
          %153 = sbr.rel (%p151) target = $region20
        $region19: #{bottleneck_forward_nhwc.7} parent=11 // pred_region
          _
        $region20: #{bottleneck_forward_nhwc.7} parent=11 // pred_fallthru
          _
      $region12: #{bottleneck_forward_nhwc.7} parent=5 // pred_fallthru
        _
      %p154 = scmp.lt.s32.totalorder %s13, 4
      // Predicated region
      $region21: #{bottleneck_forward_nhwc.7} parent=5 // pred_check
        %p155 = pneg %p154
      $region22: #{bottleneck_forward_nhwc.7} parent=5 // pred_check_branch
        %157 = sbr.rel (%p155) target = $region24
      $region23: #{bottleneck_forward_nhwc.7} parent=5 // pred_region
        // Predicated region
        $region25: #{bottleneck_forward_nhwc.7} parent=23 // pred_check
          %p158 = pneg %p33
        $region26: #{bottleneck_forward_nhwc.7} parent=23 // pred_check_branch
          %160 = sbr.rel (%p158) target = $region28
        $region27: #{bottleneck_forward_nhwc.7} parent=23 // pred_region
          %s161 = smul.u32 16, %s13
          %p162 = scmp.lt.s32.totalorder %s161, 63
          %s163 = scalar_select %p162, %s161, 63
          %s164 = smul.addr %s163, 8
          %s165 = scalar_lea.vmem %s0, %s164
          %s166 = smul.u32 16, %s13
        $region28: #{bottleneck_forward_nhwc.7} parent=23 // pred_fallthru
          _
        // Predicated region
        $region29: #{bottleneck_forward_nhwc.7} parent=23 // pred_check
          %p167 = pneg %p59
        $region30: #{bottleneck_forward_nhwc.7} parent=23 // pred_check_branch
          %169 = sbr.rel (%p167) target = $region32
        $region31: #{bottleneck_forward_nhwc.7} parent=23 // pred_region
          %s170 = smul.u32 16, %s13
          %p171 = scmp.lt.s32.totalorder %s170, 63
          %s172 = scalar_select %p171, %s170, 63
          %s173 = smul.addr %s172, 8
          %s174 = scalar_lea.vmem %s1, %s173
          %s175 = smul.u32 16, %s13
        $region32: #{bottleneck_forward_nhwc.7} parent=23 // pred_fallthru
          _
      $region24: #{bottleneck_forward_nhwc.7} parent=5 // pred_fallthru
        _
      %p176 = scmp.le.s32.totalorder 1, %s13
      %p177 = scmp.lt.s32.totalorder %s13, 5
      %p178 = pnand %p176, %p177
      %p179 = pneg %p178
      // Predicated region
      $region33: #{bottleneck_forward_nhwc.7} parent=5 // pred_check
        _
      $region34: #{bottleneck_forward_nhwc.7} parent=5 // pred_check_branch
        %181 = sbr.rel (%p178) target = $region36
      $region35: #{bottleneck_forward_nhwc.7} parent=5 // pred_region
        %s182 = ssub.s32 %s13, 1
        %s183 = smul.u32 16, %s18
        %p184 = scmp.lt.s32.totalorder %s183, 63
        %s185 = scalar_select %p184, %s183, 63
        %s186 = smul.addr %s185, 8
        %s187 = scalar_lea.vmem %s0, %s186
        %p188 = pneg %p39
        %p189 = pneg %p36
        %s190 = smul.u32 16, %s18
        %p191 = scmp.lt.s32.totalorder %s190, 63
        %s192 = scalar_select %p191, %s190, 63
        %s193 = smul.addr %s192, 8
        %s194 = scalar_lea.vmem %s1, %s193
        %p195 = pneg %p65
        %p196 = pneg %p62
        %p197 = pneg %p86
        %p198 = pneg %p83
        %p199 = pneg %p107
        %p200 = pneg %p104
        %p201 = pneg %p133
        %p202 = pneg %p130
        %s203 = sand.u32 %s120, 1
        %s204 = scalar_lea.sflag [#allocation3], %s203
        %s205 = sand.u32 %s120, 1
        %s206 = smul.addr %s205, 128
        %s207 = scalar_lea.vmem [#allocation2], %s206
        %s208 = smul.u32 16, %s18
        %p209 = scmp.lt.s32.totalorder %s208, 63
        %s210 = scalar_select %p209, %s208, 63
        %s211 = smul.addr %s210, 8
        %s212 = scalar_lea.vmem %s0, %s211
        %s213 = smul.u32 16, %s18
        %s214 = smul.u32 16, %s18
        %p215 = scmp.lt.s32.totalorder %s214, 63
        %s216 = scalar_select %p215, %s214, 63
        %s217 = smul.addr %s216, 8
        %s218 = scalar_lea.vmem %s1, %s217
        %s219 = smul.u32 16, %s18
        %s220 = smul.u32 16, %s18
        %v221 = vld [vmem:[%s212] sm:$0xff]
        %v222 = vld [vmem:[%s212 + $0x8] sm:$0xff]
        %v223 = vld [vmem:[%s212 + $0x10] sm:$0xff]
        %v224 = vld [vmem:[%s212 + $0x18] sm:$0xff]
        %v225 = vld [vmem:[%s212 + $0x20] sm:$0xff]
        %v226 = vld [vmem:[%s212 + $0x28] sm:$0xff]
        %v227 = vld [vmem:[%s212 + $0x30] sm:$0xff]
        %v228 = vld [vmem:[%s212 + $0x38] sm:$0xff]
        %v229 = vld [vmem:[%s212 + $0x40] sm:$0xff]
        %v230 = vld [vmem:[%s212 + $0x48] sm:$0xff]
        %v231 = vld [vmem:[%s212 + $0x50] sm:$0xff]
        %v232 = vld [vmem:[%s212 + $0x58] sm:$0xff]
        %v233 = vld [vmem:[%s212 + $0x60] sm:$0xff]
        %v234 = vld [vmem:[%s212 + $0x68] sm:$0xff]
        %v235 = vld [vmem:[%s212 + $0x70] sm:$0xff]
        %v236 = vld [vmem:[%s212 + $0x78] sm:$0xff]
        %v237 = vld [vmem:[%s2] sm:$0x1]
        %v239 = vlaneseq
        %v240 = vshrl.u32 %v239, 7
        %v241 = vsub.s32 0, %v240
        %v242 = vrot.slane %v237, %v241
        %v244 = vmul.f32 %v221, %v242
        %v245 = vmul.f32 %v222, %v242
        %v246 = vmul.f32 %v223, %v242
        %v247 = vmul.f32 %v224, %v242
        %v248 = vmul.f32 %v225, %v242
        %v249 = vmul.f32 %v226, %v242
        %v250 = vmul.f32 %v227, %v242
        %v251 = vmul.f32 %v228, %v242
        %v252 = vmul.f32 %v229, %v242
        %v253 = vmul.f32 %v230, %v242
        %v254 = vmul.f32 %v231, %v242
        %v255 = vmul.f32 %v232, %v242
        %v256 = vmul.f32 %v233, %v242
        %v257 = vmul.f32 %v234, %v242
        %v258 = vmul.f32 %v235, %v242
        %v259 = vmul.f32 %v236, %v242
        %v260 = vld [vmem:[%s3] sm:$0x1]
        %v262 = vlaneseq
        %v263 = vshrl.u32 %v262, 7
        %v264 = vsub.s32 0, %v263
        %v265 = vrot.slane %v260, %v264
        %v267 = vadd.f32 %v244, %v265
        %v268 = vadd.f32 %v245, %v265
        %v269 = vadd.f32 %v246, %v265
        %v270 = vadd.f32 %v247, %v265
        %v271 = vadd.f32 %v248, %v265
        %v272 = vadd.f32 %v249, %v265
        %v273 = vadd.f32 %v250, %v265
        %v274 = vadd.f32 %v251, %v265
        %v275 = vadd.f32 %v252, %v265
        %v276 = vadd.f32 %v253, %v265
        %v277 = vadd.f32 %v254, %v265
        %v278 = vadd.f32 %v255, %v265
        %v279 = vadd.f32 %v256, %v265
        %v280 = vadd.f32 %v257, %v265
        %v281 = vadd.f32 %v258, %v265
        %v282 = vadd.f32 %v259, %v265
        %v283 = vld [vmem:[%s218] sm:$0xff]
        %v284 = vld [vmem:[%s218 + $0x8] sm:$0xff]
        %v285 = vld [vmem:[%s218 + $0x10] sm:$0xff]
        %v286 = vld [vmem:[%s218 + $0x18] sm:$0xff]
        %v287 = vld [vmem:[%s218 + $0x20] sm:$0xff]
        %v288 = vld [vmem:[%s218 + $0x28] sm:$0xff]
        %v289 = vld [vmem:[%s218 + $0x30] sm:$0xff]
        %v290 = vld [vmem:[%s218 + $0x38] sm:$0xff]
        %v291 = vld [vmem:[%s218 + $0x40] sm:$0xff]
        %v292 = vld [vmem:[%s218 + $0x48] sm:$0xff]
        %v293 = vld [vmem:[%s218 + $0x50] sm:$0xff]
        %v294 = vld [vmem:[%s218 + $0x58] sm:$0xff]
        %v295 = vld [vmem:[%s218 + $0x60] sm:$0xff]
        %v296 = vld [vmem:[%s218 + $0x68] sm:$0xff]
        %v297 = vld [vmem:[%s218 + $0x70] sm:$0xff]
        %v298 = vld [vmem:[%s218 + $0x78] sm:$0xff]
        %v299 = vadd.f32 %v267, %v283
        %v300 = vadd.f32 %v268, %v284
        %v301 = vadd.f32 %v269, %v285
        %v302 = vadd.f32 %v270, %v286
        %v303 = vadd.f32 %v271, %v287
        %v304 = vadd.f32 %v272, %v288
        %v305 = vadd.f32 %v273, %v289
        %v306 = vadd.f32 %v274, %v290
        %v307 = vadd.f32 %v275, %v291
        %v308 = vadd.f32 %v276, %v292
        %v309 = vadd.f32 %v277, %v293
        %v310 = vadd.f32 %v278, %v294
        %v311 = vadd.f32 %v279, %v295
        %v312 = vadd.f32 %v280, %v296
        %v313 = vadd.f32 %v281, %v297
        %v314 = vadd.f32 %v282, %v298
        %v315 = vmax.f32 %v299, 0.0
        %v316 = vmax.f32 %v300, 0.0
        %v317 = vmax.f32 %v301, 0.0
        %v318 = vmax.f32 %v302, 0.0
        %v319 = vmax.f32 %v303, 0.0
        %v320 = vmax.f32 %v304, 0.0
        %v321 = vmax.f32 %v305, 0.0
        %v322 = vmax.f32 %v306, 0.0
        %v323 = vmax.f32 %v307, 0.0
        %v324 = vmax.f32 %v308, 0.0
        %v325 = vmax.f32 %v309, 0.0
        %v326 = vmax.f32 %v310, 0.0
        %v327 = vmax.f32 %v311, 0.0
        %v328 = vmax.f32 %v312, 0.0
        %v329 = vmax.f32 %v313, 0.0
        %v330 = vmax.f32 %v314, 0.0
        %vm331 = vcmask 130048
        %332 = vst.msk [vmem:[%s207] sm:$0xff] %vm331, %v315
        %333 = vst.msk [vmem:[%s207 + $0x8] sm:$0xff] %vm331, %v316
        %334 = vst.msk [vmem:[%s207 + $0x10] sm:$0xff] %vm331, %v317
        %335 = vst.msk [vmem:[%s207 + $0x18] sm:$0xff] %vm331, %v318
        %336 = vst.msk [vmem:[%s207 + $0x20] sm:$0xff] %vm331, %v319
        %337 = vst.msk [vmem:[%s207 + $0x28] sm:$0xff] %vm331, %v320
        %338 = vst.msk [vmem:[%s207 + $0x30] sm:$0xff] %vm331, %v321
        %339 = vst.msk [vmem:[%s207 + $0x38] sm:$0xff] %vm331, %v322
        %340 = vst.msk [vmem:[%s207 + $0x40] sm:$0xff] %vm331, %v323
        %341 = vst.msk [vmem:[%s207 + $0x48] sm:$0xff] %vm331, %v324
        %342 = vst.msk [vmem:[%s207 + $0x50] sm:$0xff] %vm331, %v325
        %343 = vst.msk [vmem:[%s207 + $0x58] sm:$0xff] %vm331, %v326
        %344 = vst.msk [vmem:[%s207 + $0x60] sm:$0xff] %vm331, %v327
        %345 = vst.msk [vmem:[%s207 + $0x68] sm:$0xff] %vm331, %v328
        %346 = vst.msk [vmem:[%s207 + $0x70] sm:$0xff] %vm331, %v329
        %347 = vst.msk [vmem:[%s207 + $0x78] sm:$0xff] %vm331, %v330
        %s348 = sand.u32 %s120, 1
        %s349 = scalar_lea.sflag [#allocation3], %s348
        %s350 = sand.u32 %s120, 1
        %s351 = smul.addr %s350, 128
        %s352 = scalar_lea.vmem [#allocation2], %s351
        // Predicated region
        $region37: #{bottleneck_forward_nhwc.7} parent=35 // pred_check
          %p353 = pneg %p130
        $region38: #{bottleneck_forward_nhwc.7} parent=35 // pred_check_branch
          %355 = sbr.rel (%p353) target = $region40
        $region39: #{bottleneck_forward_nhwc.7} parent=35 // pred_region
          %s356 = smul.u32 16, %s18
          %s358 = ssub.s32 2048, 2048
          %359 = vsyncadd %s349, %s358
          %s360 = smul.addr %s356, 128
          %s361 = scalar_lea.hbm %s4, %s360
          %s362 = sshll.u32 %s352, 4
          %s363 = int_to_ptr.vmem [resolvable:$true] %s362
          %368 = dma.vmem_to_hbm [thread:$0]  %s363, 2048, %s361, %s349, 128, 128, 8
        $region40: #{bottleneck_forward_nhwc.7} parent=35 // pred_fallthru
          _
      $region36: #{bottleneck_forward_nhwc.7} parent=5 // pred_fallthru
        _
      %p369 = scmp.le.s32.totalorder 2, %s13
      // Predicated region
      $region41: #{bottleneck_forward_nhwc.7} parent=5 // pred_check
        %p370 = pneg %p369
      $region42: #{bottleneck_forward_nhwc.7} parent=5 // pred_check_branch
        %372 = sbr.rel (%p370) target = $region44
      $region43: #{bottleneck_forward_nhwc.7} parent=5 // pred_region
        %s373 = ssub.s32 %s13, 2
        // Predicated region
        $region45: #{bottleneck_forward_nhwc.7} parent=43 // pred_check
          %p374 = pneg %p136
        $region46: #{bottleneck_forward_nhwc.7} parent=43 // pred_check_branch
          %376 = sbr.rel (%p374) target = $region48
        $region47: #{bottleneck_forward_nhwc.7} parent=43 // pred_region
          %s377 = sand.u32 %s121, 1
          %s378 = scalar_lea.sflag [#allocation3], %s377
          %s379 = sand.u32 %s121, 1
          %s380 = smul.addr %s379, 128
          %s381 = scalar_lea.vmem [#allocation2], %s380
          %382 = dma.done %s378, 2048
        $region48: #{bottleneck_forward_nhwc.7} parent=43 // pred_fallthru
          _
      $region44: #{bottleneck_forward_nhwc.7} parent=5 // pred_fallthru
        _
    $region6: #{bottleneck_forward_nhwc.7} parent=1 // loop_footer
      %s17 = sadd.s32 1, %s13
    $region7: #{bottleneck_forward_nhwc.7} parent=1 // loop_footer_branch
      %12 = sbr.rel target = $region3
    $region8: #{bottleneck_forward_nhwc.7} parent=1 // loop_exit
      _
    %383 = vsyncpa [#allocation3], 1
    %s384 = scalar_lea.sflag [#allocation3], 1
    %385 = vsyncpa %s384, 1

// kernel: bottleneck_forward_nhwc.5
$region0: #{bottleneck_forward_nhwc.5}
  #allocation0 [shape = 'u32[]', space=smem, size = 0x4, offset = 0x4, fixed_abs, tag = 'smem constant byte address 0x4 - core index']
  #allocation1 [shape = 'u32[144,128]{1,0:T(1,128)}', space=vmem, size = 0x12000, scoped, tag = 'internal scratch']
  %s0 = inlined_call_operand.vmem [shape: f32[2,16,16,4], index: 0, kind: input, shape index: {}]
  %s1 = inlined_call_operand.vmem [shape: bf16[36,4], index: 1, kind: input, shape index: {}]
  %s2 = inlined_call_operand.vmem [shape: f32[1,4], index: 2, kind: input, shape index: {}]
  %s3 = inlined_call_operand.vmem [shape: f32[1,4], index: 3, kind: input, shape index: {}]
  %s4 = inlined_call_operand.vmem [shape: f32[2,256,4], index: 4, kind: output, shape index: {0}]
  %s5 = inlined_call_operand.vmem [shape: f32[2,2,4], index: 5, kind: output, shape index: {1}]
  %6 = xla_tuple %s4, %s5
  %s7 = sld [smem:[#allocation0]]
  $region57: #{bottleneck_forward_nhwc.5} parent=0
    _
  %s9 = ssub.s32 1, %s7
  %s10 = scalar_select 0, %s9, %s7
  loop: start=0, step=1, limit=4
  $region2: #{bottleneck_forward_nhwc.5} parent=0 // loop_pre_header
    _
  $region3: #{bottleneck_forward_nhwc.5} parent=0 // loop_header
    %s12 = sphi 0, %s16
    %p13 = scmp.ge.s32.totalorder %s12, 4
    %s22 = sphi 0, %s24
    %s25 = sphi 0, %s22
    %s26 = sphi 0, %s25
    %s42 = sphi 0, %s26
    %s46 = sphi 0, %s46
    %s48 = sphi 0, %s46
    %s49 = sphi 0, %s48
    %s63 = sphi 0, %s49
    %s67 = sphi 0, %s67
    %s69 = sphi 0, %s67
    %s70 = sphi 0, %s69
    %s84 = sphi 0, %s70
    %s88 = sphi 0, %s88
    %s90 = sphi 0, %s88
    %s91 = sphi 0, %s90
    %s105 = sphi 0, %s91
    %s111 = sphi 0, %s113
    %s114 = sphi 0, %s111
    %s115 = sphi 0, %s114
    %s131 = sphi 0, %s115
    %s137 = sphi 0, %s139
    %s140 = sphi 0, %s137
    %s141 = sphi 0, %s140
    %s157 = sphi 0, %s141
  $region4: #{bottleneck_forward_nhwc.5} parent=0 // loop_header_branch
    %15 = sbr.rel (%p13) target = $region8
  $region5: #{bottleneck_forward_nhwc.5} parent=0 // loop_body
    %s17 = ssub.s32 %s12, 1
    %s18 = ssub.s32 %s12, 2
    %s19 = sadd.s32 %s12, 1
    %s20 = ssub.s32 %s12, %s19
    %p21 = scmp.eq.s32.totalorder %s20, 0
    %s23 = sadd.s32 %s22, 1
    %s24 = scalar_select %p21, %s22, %s23
    %p27 = pneg %p21
    %p28 = scmp.eq.s32.totalorder %s12, 1
    %p29 = por %p27, %p28
    %p30 = scmp.ne.s32.totalorder %s22, %s25
    %p31 = scmp.eq.s32.totalorder %s12, 0
    %p32 = por %p30, %p31
    %p33 = scmp.ne.s32.totalorder %s22, %s25
    %p34 = scmp.eq.s32.totalorder %s17, 1
    %p35 = por %p33, %p34
    %p36 = scmp.ne.s32.totalorder %s25, %s26
    %p37 = scmp.eq.s32.totalorder %s17, 0
    %p38 = por %p36, %p37
    %p39 = scmp.ne.s32.totalorder %s25, %s26
    %p40 = scmp.eq.s32.totalorder %s18, 1
    %p41 = por %p39, %p40
    %p43 = scmp.ne.s32.totalorder %s26, %s42
    %p44 = scmp.eq.s32.totalorder %s18, 0
    %p45 = por %p43, %p44
    %s47 = sadd.s32 %s46, 1
    %p50 = scmp.eq.s32.totalorder %s12, 1
    %p51 = scmp.ne.s32.totalorder %s46, %s48
    %p52 = scmp.eq.s32.totalorder %s12, 0
    %p53 = por %p51, %p52
    %p54 = scmp.ne.s32.totalorder %s46, %s48
    %p55 = scmp.eq.s32.totalorder %s17, 1
    %p56 = por %p54, %p55
    %p57 = scmp.ne.s32.totalorder %s48, %s49
    %p58 = scmp.eq.s32.totalorder %s17, 0
    %p59 = por %p57, %p58
    %p60 = scmp.ne.s32.totalorder %s48, %s49
    %p61 = scmp.eq.s32.totalorder %s18, 1
    %p62 = por %p60, %p61
    %p64 = scmp.ne.s32.totalorder %s49, %s63
    %p65 = scmp.eq.s32.totalorder %s18, 0
    %p66 = por %p64, %p65
    %s68 = sadd.s32 %s67, 1
    %p71 = scmp.eq.s32.totalorder %s12, 1
    %p72 = scmp.ne.s32.totalorder %s67, %s69
    %p73 = scmp.eq.s32.totalorder %s12, 0
    %p74 = por %p72, %p73
    %p75 = scmp.ne.s32.totalorder %s67, %s69
    %p76 = scmp.eq.s32.totalorder %s17, 1
    %p77 = por %p75, %p76
    %p78 = scmp.ne.s32.totalorder %s69, %s70
    %p79 = scmp.eq.s32.totalorder %s17, 0
    %p80 = por %p78, %p79
    %p81 = scmp.ne.s32.totalorder %s69, %s70
    %p82 = scmp.eq.s32.totalorder %s18, 1
    %p83 = por %p81, %p82
    %p85 = scmp.ne.s32.totalorder %s70, %s84
    %p86 = scmp.eq.s32.totalorder %s18, 0
    %p87 = por %p85, %p86
    %s89 = sadd.s32 %s88, 1
    %p92 = scmp.eq.s32.totalorder %s12, 1
    %p93 = scmp.ne.s32.totalorder %s88, %s90
    %p94 = scmp.eq.s32.totalorder %s12, 0
    %p95 = por %p93, %p94
    %p96 = scmp.ne.s32.totalorder %s88, %s90
    %p97 = scmp.eq.s32.totalorder %s17, 1
    %p98 = por %p96, %p97
    %p99 = scmp.ne.s32.totalorder %s90, %s91
    %p100 = scmp.eq.s32.totalorder %s17, 0
    %p101 = por %p99, %p100
    %p102 = scmp.ne.s32.totalorder %s90, %s91
    %p103 = scmp.eq.s32.totalorder %s18, 1
    %p104 = por %p102, %p103
    %p106 = scmp.ne.s32.totalorder %s91, %s105
    %p107 = scmp.eq.s32.totalorder %s18, 0
    %p108 = por %p106, %p107
    %s109 = ssub.s32 %s12, %s19
    %p110 = scmp.eq.s32.totalorder %s109, 0
    %s112 = sadd.s32 %s111, 1
    %s113 = scalar_select %p110, %s111, %s112
    %p116 = pneg %p110
    %p117 = scmp.eq.s32.totalorder %s12, 1
    %p118 = por %p116, %p117
    %p119 = scmp.ne.s32.totalorder %s111, %s114
    %p120 = scmp.eq.s32.totalorder %s12, 0
    %p121 = por %p119, %p120
    %p122 = scmp.ne.s32.totalorder %s111, %s114
    %p123 = scmp.eq.s32.totalorder %s17, 1
    %p124 = por %p122, %p123
    %p125 = scmp.ne.s32.totalorder %s114, %s115
    %p126 = scmp.eq.s32.totalorder %s17, 0
    %p127 = por %p125, %p126
    %p128 = scmp.ne.s32.totalorder %s114, %s115
    %p129 = scmp.eq.s32.totalorder %s18, 1
    %p130 = por %p128, %p129
    %p132 = scmp.ne.s32.totalorder %s115, %s131
    %p133 = scmp.eq.s32.totalorder %s18, 0
    %p134 = por %p132, %p133
    %s135 = ssub.s32 %s12, %s19
    %p136 = scmp.eq.s32.totalorder %s135, 0
    %s138 = sadd.s32 %s137, 1
    %s139 = scalar_select %p136, %s137, %s138
    %p142 = pneg %p136
    %p143 = scmp.eq.s32.totalorder %s12, 1
    %p144 = por %p142, %p143
    %p145 = scmp.ne.s32.totalorder %s137, %s140
    %p146 = scmp.eq.s32.totalorder %s12, 0
    %p147 = por %p145, %p146
    %p148 = scmp.ne.s32.totalorder %s137, %s140
    %p149 = scmp.eq.s32.totalorder %s17, 1
    %p150 = por %p148, %p149
    %p151 = scmp.ne.s32.totalorder %s140, %s141
    %p152 = scmp.eq.s32.totalorder %s17, 0
    %p153 = por %p151, %p152
    %p154 = scmp.ne.s32.totalorder %s140, %s141
    %p155 = scmp.eq.s32.totalorder %s18, 1
    %p156 = por %p154, %p155
    %p158 = scmp.ne.s32.totalorder %s141, %s157
    %p159 = scmp.eq.s32.totalorder %s18, 0
    %p160 = por %p158, %p159
    %p161 = scmp.le.s32.totalorder 1, %s12
    %p162 = scmp.lt.s32.totalorder %s12, 3
    %p163 = pnand %p161, %p162
    %p164 = pneg %p163
    // Predicated region
    $region9: #{bottleneck_forward_nhwc.5} parent=5 // pred_check
      _
    $region10: #{bottleneck_forward_nhwc.5} parent=5 // pred_check_branch
      %166 = sbr.rel (%p163) target = $region12
    $region11: #{bottleneck_forward_nhwc.5} parent=5 // pred_region
      %s167 = ssub.s32 %s12, 1
      // Predicated region
      $region13: #{bottleneck_forward_nhwc.5} parent=11 // pred_check
        %p168 = pneg %p59
      $region14: #{bottleneck_forward_nhwc.5} parent=11 // pred_check_branch
        %170 = sbr.rel (%p168) target = $region16
      $region15: #{bottleneck_forward_nhwc.5} parent=11 // pred_region
        _
      $region16: #{bottleneck_forward_nhwc.5} parent=11 // pred_fallthru
        _
      // Predicated region
      $region17: #{bottleneck_forward_nhwc.5} parent=11 // pred_check
        %p171 = pneg %p80
      $region18: #{bottleneck_forward_nhwc.5} parent=11 // pred_check_branch
        %173 = sbr.rel (%p171) target = $region20
      $region19: #{bottleneck_forward_nhwc.5} parent=11 // pred_region
        _
      $region20: #{bottleneck_forward_nhwc.5} parent=11 // pred_fallthru
        _
      // Predicated region
      $region21: #{bottleneck_forward_nhwc.5} parent=11 // pred_check
        %p174 = pneg %p101
      $region22: #{bottleneck_forward_nhwc.5} parent=11 // pred_check_branch
        %176 = sbr.rel (%p174) target = $region24
      $region23: #{bottleneck_forward_nhwc.5} parent=11 // pred_region
        _
      $region24: #{bottleneck_forward_nhwc.5} parent=11 // pred_fallthru
        _
    $region12: #{bottleneck_forward_nhwc.5} parent=5 // pred_fallthru
      _
    %p177 = scmp.lt.s32.totalorder %s12, 2
    // Predicated region
    $region25: #{bottleneck_forward_nhwc.5} parent=5 // pred_check
      %p178 = pneg %p177
    $region26: #{bottleneck_forward_nhwc.5} parent=5 // pred_check_branch
      %180 = sbr.rel (%p178) target = $region28
    $region27: #{bottleneck_forward_nhwc.5} parent=5 // pred_region
      // Predicated region
      $region29: #{bottleneck_forward_nhwc.5} parent=27 // pred_check
        %p181 = pneg %p32
      $region30: #{bottleneck_forward_nhwc.5} parent=27 // pred_check_branch
        %183 = sbr.rel (%p181) target = $region32
      $region31: #{bottleneck_forward_nhwc.5} parent=27 // pred_region
        %p184 = scmp.lt.s32.totalorder %s12, 1
        %s185 = scalar_select %p184, %s12, 1
        %s186 = smul.addr %s185, 32
        %s187 = smul.addr %s186, 8
        %s188 = scalar_lea.vmem %s0, %s187
      $region32: #{bottleneck_forward_nhwc.5} parent=27 // pred_fallthru
        _
    $region28: #{bottleneck_forward_nhwc.5} parent=5 // pred_fallthru
      _
    %p189 = scmp.le.s32.totalorder 1, %s12
    %p190 = scmp.lt.s32.totalorder %s12, 3
    %p191 = pnand %p189, %p190
    %p192 = pneg %p191
    // Predicated region
    $region33: #{bottleneck_forward_nhwc.5} parent=5 // pred_check
      _
    $region34: #{bottleneck_forward_nhwc.5} parent=5 // pred_check_branch
      %194 = sbr.rel (%p191) target = $region36
    $region35: #{bottleneck_forward_nhwc.5} parent=5 // pred_region
      %s195 = ssub.s32 %s12, 1
      %p196 = scmp.lt.s32.totalorder %s17, 1
      %s197 = scalar_select %p196, %s17, 1
      %s198 = smul.addr %s197, 32
      %s199 = smul.addr %s198, 8
      %s200 = scalar_lea.vmem %s0, %s199
      %p201 = pneg %p38
      %p202 = pneg %p35
      %p203 = pneg %p59
      %p204 = pneg %p56
      %p205 = pneg %p80
      %p206 = pneg %p77
      %p207 = pneg %p101
      %p208 = pneg %p98
      %p209 = pneg %p127
      %p210 = pneg %p124
      %p211 = scmp.lt.s32.totalorder %s17, 1
      %s212 = scalar_select %p211, %s17, 1
      %s213 = smul.addr %s212, 32
      %s214 = smul.addr %s213, 8
      %s215 = scalar_lea.vmem %s4, %s214
      %p216 = pneg %p153
      %p217 = pneg %p150
      %p218 = scmp.lt.s32.totalorder %s17, 1
      %s219 = scalar_select %p218, %s17, 1
      %s220 = smul.addr %s219, 2
      %s221 = scalar_lea.vmem %s5, %s220
      %p222 = scmp.lt.s32.totalorder %s17, 1
      %s223 = scalar_select %p222, %s17, 1
      %s224 = smul.addr %s223, 32
      %s225 = smul.addr %s224, 8
      %s226 = scalar_lea.vmem %s0, %s225
      %p227 = scmp.lt.s32.totalorder %s17, 1
      %s228 = scalar_select %p227, %s17, 1
      %s229 = smul.addr %s228, 32
      %s230 = smul.addr %s229, 8
      %s231 = scalar_lea.vmem %s4, %s230
      %p232 = scmp.lt.s32.totalorder %s17, 1
      %s233 = scalar_select %p232, %s17, 1
      %s234 = smul.addr %s233, 2
      %s235 = scalar_lea.vmem %s5, %s234
      %v237 = vld [vmem:[%s2] sm:$0x1]
      %v238 = vld [vmem:[%s3] sm:$0x1]
      %v239 = vld [vmem:[%s226] sm:$0xff]
      %v240 = vld [vmem:[%s226 + $0x8] sm:$0xff]
      %v241 = vld [vmem:[%s226 + $0x10] sm:$0xff]
      %v242 = vld [vmem:[%s226 + $0x18] sm:$0xff]
      %v243 = vld [vmem:[%s226 + $0x20] sm:$0xff]
      %v244 = vld [vmem:[%s226 + $0x28] sm:$0xff]
      %v245 = vld [vmem:[%s226 + $0x30] sm:$0xff]
      %v246 = vld [vmem:[%s226 + $0x38] sm:$0xff]
      %v247 = vld [vmem:[%s226 + $0x40] sm:$0xff]
      %v248 = vld [vmem:[%s226 + $0x48] sm:$0xff]
      %v249 = vld [vmem:[%s226 + $0x50] sm:$0xff]
      %v250 = vld [vmem:[%s226 + $0x58] sm:$0xff]
      %v251 = vld [vmem:[%s226 + $0x60] sm:$0xff]
      %v252 = vld [vmem:[%s226 + $0x68] sm:$0xff]
      %v253 = vld [vmem:[%s226 + $0x70] sm:$0xff]
      %v254 = vld [vmem:[%s226 + $0x78] sm:$0xff]
      %v255 = vld [vmem:[%s226 + $0x80] sm:$0xff]
      %v256 = vld [vmem:[%s226 + $0x88] sm:$0xff]
      %v257 = vld [vmem:[%s226 + $0x90] sm:$0xff]
      %v258 = vld [vmem:[%s226 + $0x98] sm:$0xff]
      %v259 = vld [vmem:[%s226 + $0xa0] sm:$0xff]
      %v260 = vld [vmem:[%s226 + $0xa8] sm:$0xff]
      %v261 = vld [vmem:[%s226 + $0xb0] sm:$0xff]
      %v262 = vld [vmem:[%s226 + $0xb8] sm:$0xff]
      %v263 = vld [vmem:[%s226 + $0xc0] sm:$0xff]
      %v264 = vld [vmem:[%s226 + $0xc8] sm:$0xff]
      %v265 = vld [vmem:[%s226 + $0xd0] sm:$0xff]
      %v266 = vld [vmem:[%s226 + $0xd8] sm:$0xff]
      %v267 = vld [vmem:[%s226 + $0xe0] sm:$0xff]
      %v268 = vld [vmem:[%s226 + $0xe8] sm:$0xff]
      %v269 = vld [vmem:[%s226 + $0xf0] sm:$0xff]
      %v270 = vld [vmem:[%s226 + $0xf8] sm:$0xff]
      %v272 = vlaneseq
      %v273 = vshrl.u32 %v272, 7
      %v274 = vsub.s32 0, %v273
      %v275 = vrot.slane %v237, %v274
      %v277 = vmul.f32 %v239, %v275
      %v278 = vmul.f32 %v240, %v275
      %v279 = vmul.f32 %v241, %v275
      %v280 = vmul.f32 %v242, %v275
      %v281 = vmul.f32 %v243, %v275
      %v282 = vmul.f32 %v244, %v275
      %v283 = vmul.f32 %v245, %v275
      %v284 = vmul.f32 %v246, %v275
      %v285 = vmul.f32 %v247, %v275
      %v286 = vmul.f32 %v248, %v275
      %v287 = vmul.f32 %v249, %v275
      %v288 = vmul.f32 %v250, %v275
      %v289 = vmul.f32 %v251, %v275
      %v290 = vmul.f32 %v252, %v275
      %v291 = vmul.f32 %v253, %v275
      %v292 = vmul.f32 %v254, %v275
      %v293 = vmul.f32 %v255, %v275
      %v294 = vmul.f32 %v256, %v275
      %v295 = vmul.f32 %v257, %v275
      %v296 = vmul.f32 %v258, %v275
      %v297 = vmul.f32 %v259, %v275
      %v298 = vmul.f32 %v260, %v275
      %v299 = vmul.f32 %v261, %v275
      %v300 = vmul.f32 %v262, %v275
      %v301 = vmul.f32 %v263, %v275
      %v302 = vmul.f32 %v264, %v275
      %v303 = vmul.f32 %v265, %v275
      %v304 = vmul.f32 %v266, %v275
      %v305 = vmul.f32 %v267, %v275
      %v306 = vmul.f32 %v268, %v275
      %v307 = vmul.f32 %v269, %v275
      %v308 = vmul.f32 %v270, %v275
      %v310 = vlaneseq
      %v311 = vshrl.u32 %v310, 7
      %v312 = vsub.s32 0, %v311
      %v313 = vrot.slane %v238, %v312
      %v315 = vadd.f32 %v277, %v313
      %v316 = vadd.f32 %v278, %v313
      %v317 = vadd.f32 %v279, %v313
      %v318 = vadd.f32 %v280, %v313
      %v319 = vadd.f32 %v281, %v313
      %v320 = vadd.f32 %v282, %v313
      %v321 = vadd.f32 %v283, %v313
      %v322 = vadd.f32 %v284, %v313
      %v323 = vadd.f32 %v285, %v313
      %v324 = vadd.f32 %v286, %v313
      %v325 = vadd.f32 %v287, %v313
      %v326 = vadd.f32 %v288, %v313
      %v327 = vadd.f32 %v289, %v313
      %v328 = vadd.f32 %v290, %v313
      %v329 = vadd.f32 %v291, %v313
      %v330 = vadd.f32 %v292, %v313
      %v331 = vadd.f32 %v293, %v313
      %v332 = vadd.f32 %v294, %v313
      %v333 = vadd.f32 %v295, %v313
      %v334 = vadd.f32 %v296, %v313
      %v335 = vadd.f32 %v297, %v313
      %v336 = vadd.f32 %v298, %v313
      %v337 = vadd.f32 %v299, %v313
      %v338 = vadd.f32 %v300, %v313
      %v339 = vadd.f32 %v301, %v313
      %v340 = vadd.f32 %v302, %v313
      %v341 = vadd.f32 %v303, %v313
      %v342 = vadd.f32 %v304, %v313
      %v343 = vadd.f32 %v305, %v313
      %v344 = vadd.f32 %v306, %v313
      %v345 = vadd.f32 %v307, %v313
      %v346 = vadd.f32 %v308, %v313
      %v347 = vmax.f32 %v315, 0.0
      %v348 = vmax.f32 %v316, 0.0
      %v349 = vmax.f32 %v317, 0.0
      %v350 = vmax.f32 %v318, 0.0
      %v351 = vmax.f32 %v319, 0.0
      %v352 = vmax.f32 %v320, 0.0
      %v353 = vmax.f32 %v321, 0.0
      %v354 = vmax.f32 %v322, 0.0
      %v355 = vmax.f32 %v323, 0.0
      %v356 = vmax.f32 %v324, 0.0
      %v357 = vmax.f32 %v325, 0.0
      %v358 = vmax.f32 %v326, 0.0
      %v359 = vmax.f32 %v327, 0.0
      %v360 = vmax.f32 %v328, 0.0
      %v361 = vmax.f32 %v329, 0.0
      %v362 = vmax.f32 %v330, 0.0
      %v363 = vmax.f32 %v331, 0.0
      %v364 = vmax.f32 %v332, 0.0
      %v365 = vmax.f32 %v333, 0.0
      %v366 = vmax.f32 %v334, 0.0
      %v367 = vmax.f32 %v335, 0.0
      %v368 = vmax.f32 %v336, 0.0
      %v369 = vmax.f32 %v337, 0.0
      %v370 = vmax.f32 %v338, 0.0
      %v371 = vmax.f32 %v339, 0.0
      %v372 = vmax.f32 %v340, 0.0
      %v373 = vmax.f32 %v341, 0.0
      %v374 = vmax.f32 %v342, 0.0
      %v375 = vmax.f32 %v343, 0.0
      %v376 = vmax.f32 %v344, 0.0
      %v377 = vmax.f32 %v345, 0.0
      %v378 = vmax.f32 %v346, 0.0
      %v379 = vpack.c.bf16 %v348, %v347
      %v380 = vpack.c.bf16 %v350, %v349
      %v381 = vpack.c.bf16 %v352, %v351
      %v382 = vpack.c.bf16 %v354, %v353
      %v383 = vpack.c.bf16 %v356, %v355
      %v384 = vpack.c.bf16 %v358, %v357
      %v385 = vpack.c.bf16 %v360, %v359
      %v386 = vpack.c.bf16 %v362, %v361
      %v387 = vpack.c.bf16 %v364, %v363
      %v388 = vpack.c.bf16 %v366, %v365
      %v389 = vpack.c.bf16 %v368, %v367
      %v390 = vpack.c.bf16 %v370, %v369
      %v391 = vpack.c.bf16 %v372, %v371
      %v392 = vpack.c.bf16 %v374, %v373
      %v393 = vpack.c.bf16 %v376, %v375
      %v394 = vpack.c.bf16 %v378, %v377
      %v396 = vshrl.u32 0, 16
      %v398 = vrot.slane %v396, 7
      %v399 = vshll.u32 0, 16
      %v401 = vor.u32 %v398, %v399
      %v403 = vshrl.u32 %v379, 16
      %v405 = vrot.slane %v403, 7
      %v406 = vshll.u32 %v379, 16
      %v408 = vor.u32 %v405, %v406
      %v410 = vshrl.u32 %v380, 16
      %v412 = vrot.slane %v410, 7
      %v413 = vshll.u32 %v380, 16
      %v415 = vor.u32 %v412, %v413
      %v417 = vshrl.u32 %v381, 16
      %v419 = vrot.slane %v417, 7
      %v420 = vshll.u32 %v381, 16
      %v422 = vor.u32 %v419, %v420
      %v424 = vshrl.u32 %v382, 16
      %v426 = vrot.slane %v424, 7
      %v427 = vshll.u32 %v382, 16
      %v429 = vor.u32 %v426, %v427
      %v431 = vshrl.u32 %v383, 16
      %v433 = vrot.slane %v431, 7
      %v434 = vshll.u32 %v383, 16
      %v436 = vor.u32 %v433, %v434
      %v438 = vshrl.u32 %v384, 16
      %v440 = vrot.slane %v438, 7
      %v441 = vshll.u32 %v384, 16
      %v443 = vor.u32 %v440, %v441
      %v445 = vshrl.u32 %v385, 16
      %v447 = vrot.slane %v445, 7
      %v448 = vshll.u32 %v385, 16
      %v450 = vor.u32 %v447, %v448
      %v452 = vshrl.u32 %v386, 16
      %v454 = vrot.slane %v452, 7
      %v455 = vshll.u32 %v386, 16
      %v457 = vor.u32 %v454, %v455
      %v459 = vshrl.u32 %v387, 16
      %v461 = vrot.slane %v459, 7
      %v462 = vshll.u32 %v387, 16
      %v464 = vor.u32 %v461, %v462
      %v466 = vshrl.u32 %v388, 16
      %v468 = vrot.slane %v466, 7
      %v469 = vshll.u32 %v388, 16
      %v471 = vor.u32 %v468, %v469
      %v473 = vshrl.u32 %v389, 16
      %v475 = vrot.slane %v473, 7
      %v476 = vshll.u32 %v389, 16
      %v478 = vor.u32 %v475, %v476
      %v480 = vshrl.u32 %v390, 16
      %v482 = vrot.slane %v480, 7
      %v483 = vshll.u32 %v390, 16
      %v485 = vor.u32 %v482, %v483
      %v487 = vshrl.u32 %v391, 16
      %v489 = vrot.slane %v487, 7
      %v490 = vshll.u32 %v391, 16
      %v492 = vor.u32 %v489, %v490
      %v494 = vshrl.u32 %v392, 16
      %v496 = vrot.slane %v494, 7
      %v497 = vshll.u32 %v392, 16
      %v499 = vor.u32 %v496, %v497
      %v501 = vshrl.u32 %v393, 16
      %v503 = vrot.slane %v501, 7
      %v504 = vshll.u32 %v393, 16
      %v506 = vor.u32 %v503, %v504
      %vm523 = vcmask 1040384
      %vm524 = vsmask.f32 256
      %vm525 = vmand %vm523, %vm524
      %v526 = vsel %vm525, 0, %v401
      %v527 = vsel %vm525, 0, %v408
      %v528 = vsel %vm525, 0, %v415
      %v529 = vsel %vm525, 0, %v422
      %v530 = vsel %vm525, 0, %v429
      %v531 = vsel %vm525, 0, %v436
      %v532 = vsel %vm525, 0, %v443
      %v533 = vsel %vm525, 0, %v450
      %v534 = vsel %vm525, 0, %v457
      %v535 = vsel %vm525, 0, %v464
      %v536 = vsel %vm525, 0, %v471
      %v537 = vsel %vm525, 0, %v478
      %v538 = vsel %vm525, 0, %v485
      %v539 = vsel %vm525, 0, %v492
      %v540 = vsel %vm525, 0, %v499
      %v541 = vsel %vm525, 0, %v506
      %v542 = vrot.slane %v399, 1
      %v543 = vor.u32 %v396, %v542
      %v544 = vrot.slane %v406, 1
      %v545 = vor.u32 %v403, %v544
      %v546 = vrot.slane %v413, 1
      %v547 = vor.u32 %v410, %v546
      %v548 = vrot.slane %v420, 1
      %v549 = vor.u32 %v417, %v548
      %v550 = vrot.slane %v427, 1
      %v551 = vor.u32 %v424, %v550
      %v552 = vrot.slane %v434, 1
      %v553 = vor.u32 %v431, %v552
      %v554 = vrot.slane %v441, 1
      %v555 = vor.u32 %v438, %v554
      %v556 = vrot.slane %v448, 1
      %v557 = vor.u32 %v445, %v556
      %v558 = vrot.slane %v455, 1
      %v559 = vor.u32 %v452, %v558
      %v560 = vrot.slane %v462, 1
      %v561 = vor.u32 %v459, %v560
      %v562 = vrot.slane %v469, 1
      %v563 = vor.u32 %v466, %v562
      %v564 = vrot.slane %v476, 1
      %v565 = vor.u32 %v473, %v564
      %v566 = vrot.slane %v483, 1
      %v567 = vor.u32 %v480, %v566
      %v568 = vrot.slane %v490, 1
      %v569 = vor.u32 %v487, %v568
      %v570 = vrot.slane %v497, 1
      %v571 = vor.u32 %v494, %v570
      %v572 = vrot.slane %v504, 1
      %v573 = vor.u32 %v501, %v572
      %vm590 = vcmask 1047552
      %vm591 = vsmask.f32 7424
      %vm592 = vmand %vm590, %vm591
      %v593 = vsel %vm592, %v543, 0
      %v594 = vsel %vm592, %v545, 0
      %v595 = vsel %vm592, %v547, 0
      %v596 = vsel %vm592, %v549, 0
      %v597 = vsel %vm592, %v551, 0
      %v598 = vsel %vm592, %v553, 0
      %v599 = vsel %vm592, %v555, 0
      %v600 = vsel %vm592, %v557, 0
      %v601 = vsel %vm592, %v559, 0
      %v602 = vsel %vm592, %v561, 0
      %v603 = vsel %vm592, %v563, 0
      %v604 = vsel %vm592, %v565, 0
      %v605 = vsel %vm592, %v567, 0
      %v606 = vsel %vm592, %v569, 0
      %v607 = vsel %vm592, %v571, 0
      %v608 = vsel %vm592, %v573, 0
      %v610 = vshrl.u32 %v394, 16
      %v612 = vrot.slane %v610, 7
      %v613 = vshll.u32 %v394, 16
      %v615 = vor.u32 %v612, %v613
      %v617 = vsel %vm525, 0, %v615
      %v618 = vrot.slane %v613, 1
      %v619 = vor.u32 %v610, %v618
      %v621 = vsel %vm592, %v619, 0
      %638 = vrot.lane.b32.xlu0 0, 4
      %v639 = vpop.permute.xlu0 %638
      %640 = vrot.lane.b32.xlu0 %v379, 4
      %v641 = vpop.permute.xlu0 %640
      %642 = vrot.lane.b32.xlu0 %v380, 4
      %v643 = vpop.permute.xlu0 %642
      %644 = vrot.lane.b32.xlu0 %v381, 4
      %v645 = vpop.permute.xlu0 %644
      %646 = vrot.lane.b32.xlu0 %v382, 4
      %v647 = vpop.permute.xlu0 %646
      %648 = vrot.lane.b32.xlu0 %v383, 4
      %v649 = vpop.permute.xlu0 %648
      %650 = vrot.lane.b32.xlu0 %v384, 4
      %v651 = vpop.permute.xlu0 %650
      %652 = vrot.lane.b32.xlu0 %v385, 4
      %v653 = vpop.permute.xlu0 %652
      %654 = vrot.lane.b32.xlu0 %v386, 4
      %v655 = vpop.permute.xlu0 %654
      %656 = vrot.lane.b32.xlu0 %v387, 4
      %v657 = vpop.permute.xlu0 %656
      %658 = vrot.lane.b32.xlu0 %v388, 4
      %v659 = vpop.permute.xlu0 %658
      %660 = vrot.lane.b32.xlu0 %v389, 4
      %v661 = vpop.permute.xlu0 %660
      %662 = vrot.lane.b32.xlu0 %v390, 4
      %v663 = vpop.permute.xlu0 %662
      %664 = vrot.lane.b32.xlu0 %v391, 4
      %v665 = vpop.permute.xlu0 %664
      %666 = vrot.lane.b32.xlu0 %v392, 4
      %v667 = vpop.permute.xlu0 %666
      %668 = vrot.lane.b32.xlu0 %v393, 4
      %v669 = vpop.permute.xlu0 %668
      %686 = vrot.lane.b32.xlu0 %v593, 8
      %v687 = vpop.permute.xlu0 %686
      %688 = vrot.lane.b32.xlu0 %v594, 8
      %v689 = vpop.permute.xlu0 %688
      %690 = vrot.lane.b32.xlu0 %v595, 8
      %v691 = vpop.permute.xlu0 %690
      %692 = vrot.lane.b32.xlu0 %v596, 8
      %v693 = vpop.permute.xlu0 %692
      %694 = vrot.lane.b32.xlu0 %v597, 8
      %v695 = vpop.permute.xlu0 %694
      %696 = vrot.lane.b32.xlu0 %v598, 8
      %v697 = vpop.permute.xlu0 %696
      %698 = vrot.lane.b32.xlu0 %v599, 8
      %v699 = vpop.permute.xlu0 %698
      %700 = vrot.lane.b32.xlu0 %v600, 8
      %v701 = vpop.permute.xlu0 %700
      %702 = vrot.lane.b32.xlu0 %v601, 8
      %v703 = vpop.permute.xlu0 %702
      %704 = vrot.lane.b32.xlu0 %v602, 8
      %v705 = vpop.permute.xlu0 %704
      %706 = vrot.lane.b32.xlu0 %v603, 8
      %v707 = vpop.permute.xlu0 %706
      %708 = vrot.lane.b32.xlu0 %v604, 8
      %v709 = vpop.permute.xlu0 %708
      %710 = vrot.lane.b32.xlu0 %v605, 8
      %v711 = vpop.permute.xlu0 %710
      %712 = vrot.lane.b32.xlu0 %v606, 8
      %v713 = vpop.permute.xlu0 %712
      %714 = vrot.lane.b32.xlu0 %v607, 8
      %v715 = vpop.permute.xlu0 %714
      %716 = vrot.lane.b32.xlu0 %v608, 8
      %v717 = vpop.permute.xlu0 %716
      %734 = vrot.lane.b32.xlu0 %v527, 12
      %v735 = vpop.permute.xlu0 %734
      %736 = vrot.lane.b32.xlu0 %v528, 12
      %v737 = vpop.permute.xlu0 %736
      %738 = vrot.lane.b32.xlu0 %v529, 12
      %v739 = vpop.permute.xlu0 %738
      %740 = vrot.lane.b32.xlu0 %v530, 12
      %v741 = vpop.permute.xlu0 %740
      %742 = vrot.lane.b32.xlu0 %v531, 12
      %v743 = vpop.permute.xlu0 %742
      %744 = vrot.lane.b32.xlu0 %v532, 12
      %v745 = vpop.permute.xlu0 %744
      %746 = vrot.lane.b32.xlu0 %v533, 12
      %v747 = vpop.permute.xlu0 %746
      %748 = vrot.lane.b32.xlu0 %v534, 12
      %v749 = vpop.permute.xlu0 %748
      %750 = vrot.lane.b32.xlu0 %v535, 12
      %v751 = vpop.permute.xlu0 %750
      %752 = vrot.lane.b32.xlu0 %v536, 12
      %v753 = vpop.permute.xlu0 %752
      %754 = vrot.lane.b32.xlu0 %v537, 12
      %v755 = vpop.permute.xlu0 %754
      %756 = vrot.lane.b32.xlu0 %v538, 12
      %v757 = vpop.permute.xlu0 %756
      %758 = vrot.lane.b32.xlu0 %v539, 12
      %v759 = vpop.permute.xlu0 %758
      %760 = vrot.lane.b32.xlu0 %v540, 12
      %v761 = vpop.permute.xlu0 %760
      %762 = vrot.lane.b32.xlu0 %v541, 12
      %v763 = vpop.permute.xlu0 %762
      %764 = vrot.lane.b32.xlu0 %v617, 12
      %v765 = vpop.permute.xlu0 %764
      %767 = vrot.lane.b32.xlu0 %v379, 16
      %v768 = vpop.permute.xlu0 %767
      %769 = vrot.lane.b32.xlu0 %v380, 16
      %v770 = vpop.permute.xlu0 %769
      %771 = vrot.lane.b32.xlu0 %v381, 16
      %v772 = vpop.permute.xlu0 %771
      %773 = vrot.lane.b32.xlu0 %v382, 16
      %v774 = vpop.permute.xlu0 %773
      %775 = vrot.lane.b32.xlu0 %v383, 16
      %v776 = vpop.permute.xlu0 %775
      %777 = vrot.lane.b32.xlu0 %v384, 16
      %v778 = vpop.permute.xlu0 %777
      %779 = vrot.lane.b32.xlu0 %v385, 16
      %v780 = vpop.permute.xlu0 %779
      %781 = vrot.lane.b32.xlu0 %v386, 16
      %v782 = vpop.permute.xlu0 %781
      %783 = vrot.lane.b32.xlu0 %v387, 16
      %v784 = vpop.permute.xlu0 %783
      %785 = vrot.lane.b32.xlu0 %v388, 16
      %v786 = vpop.permute.xlu0 %785
      %787 = vrot.lane.b32.xlu0 %v389, 16
      %v788 = vpop.permute.xlu0 %787
      %789 = vrot.lane.b32.xlu0 %v390, 16
      %v790 = vpop.permute.xlu0 %789
      %791 = vrot.lane.b32.xlu0 %v391, 16
      %v792 = vpop.permute.xlu0 %791
      %793 = vrot.lane.b32.xlu0 %v392, 16
      %v794 = vpop.permute.xlu0 %793
      %795 = vrot.lane.b32.xlu0 %v393, 16
      %v796 = vpop.permute.xlu0 %795
      %797 = vrot.lane.b32.xlu0 %v394, 16
      %v798 = vpop.permute.xlu0 %797
      %800 = vrot.lane.b32.xlu0 %v594, 20
      %v801 = vpop.permute.xlu0 %800
      %802 = vrot.lane.b32.xlu0 %v595, 20
      %v803 = vpop.permute.xlu0 %802
      %804 = vrot.lane.b32.xlu0 %v596, 20
      %v805 = vpop.permute.xlu0 %804
      %806 = vrot.lane.b32.xlu0 %v597, 20
      %v807 = vpop.permute.xlu0 %806
      %808 = vrot.lane.b32.xlu0 %v598, 20
      %v809 = vpop.permute.xlu0 %808
      %810 = vrot.lane.b32.xlu0 %v599, 20
      %v811 = vpop.permute.xlu0 %810
      %812 = vrot.lane.b32.xlu0 %v600, 20
      %v813 = vpop.permute.xlu0 %812
      %814 = vrot.lane.b32.xlu0 %v601, 20
      %v815 = vpop.permute.xlu0 %814
      %816 = vrot.lane.b32.xlu0 %v602, 20
      %v817 = vpop.permute.xlu0 %816
      %818 = vrot.lane.b32.xlu0 %v603, 20
      %v819 = vpop.permute.xlu0 %818
      %820 = vrot.lane.b32.xlu0 %v604, 20
      %v821 = vpop.permute.xlu0 %820
      %822 = vrot.lane.b32.xlu0 %v605, 20
      %v823 = vpop.permute.xlu0 %822
      %824 = vrot.lane.b32.xlu0 %v606, 20
      %v825 = vpop.permute.xlu0 %824
      %826 = vrot.lane.b32.xlu0 %v607, 20
      %v827 = vpop.permute.xlu0 %826
      %828 = vrot.lane.b32.xlu0 %v608, 20
      %v829 = vpop.permute.xlu0 %828
      %830 = vrot.lane.b32.xlu0 %v621, 20
      %v831 = vpop.permute.xlu0 %830
      %833 = vrot.lane.b32.xlu0 %v528, 24
      %v834 = vpop.permute.xlu0 %833
      %835 = vrot.lane.b32.xlu0 %v529, 24
      %v836 = vpop.permute.xlu0 %835
      %837 = vrot.lane.b32.xlu0 %v530, 24
      %v838 = vpop.permute.xlu0 %837
      %839 = vrot.lane.b32.xlu0 %v531, 24
      %v840 = vpop.permute.xlu0 %839
      %841 = vrot.lane.b32.xlu0 %v532, 24
      %v842 = vpop.permute.xlu0 %841
      %843 = vrot.lane.b32.xlu0 %v533, 24
      %v844 = vpop.permute.xlu0 %843
      %845 = vrot.lane.b32.xlu0 %v534, 24
      %v846 = vpop.permute.xlu0 %845
      %847 = vrot.lane.b32.xlu0 %v535, 24
      %v848 = vpop.permute.xlu0 %847
      %849 = vrot.lane.b32.xlu0 %v536, 24
      %v850 = vpop.permute.xlu0 %849
      %851 = vrot.lane.b32.xlu0 %v537, 24
      %v852 = vpop.permute.xlu0 %851
      %853 = vrot.lane.b32.xlu0 %v538, 24
      %v854 = vpop.permute.xlu0 %853
      %855 = vrot.lane.b32.xlu0 %v539, 24
      %v856 = vpop.permute.xlu0 %855
      %857 = vrot.lane.b32.xlu0 %v540, 24
      %v858 = vpop.permute.xlu0 %857
      %859 = vrot.lane.b32.xlu0 %v541, 24
      %v860 = vpop.permute.xlu0 %859
      %861 = vrot.lane.b32.xlu0 %v617, 24
      %v862 = vpop.permute.xlu0 %861
      %863 = vrot.lane.b32.xlu0 %v526, 24
      %v864 = vpop.permute.xlu0 %863
      %865 = vrot.lane.b32.xlu0 %v380, 28
      %v866 = vpop.permute.xlu0 %865
      %867 = vrot.lane.b32.xlu0 %v381, 28
      %v868 = vpop.permute.xlu0 %867
      %869 = vrot.lane.b32.xlu0 %v382, 28
      %v870 = vpop.permute.xlu0 %869
      %871 = vrot.lane.b32.xlu0 %v383, 28
      %v872 = vpop.permute.xlu0 %871
      %873 = vrot.lane.b32.xlu0 %v384, 28
      %v874 = vpop.permute.xlu0 %873
      %875 = vrot.lane.b32.xlu0 %v385, 28
      %v876 = vpop.permute.xlu0 %875
      %877 = vrot.lane.b32.xlu0 %v386, 28
      %v878 = vpop.permute.xlu0 %877
      %879 = vrot.lane.b32.xlu0 %v387, 28
      %v880 = vpop.permute.xlu0 %879
      %881 = vrot.lane.b32.xlu0 %v388, 28
      %v882 = vpop.permute.xlu0 %881
      %883 = vrot.lane.b32.xlu0 %v389, 28
      %v884 = vpop.permute.xlu0 %883
      %885 = vrot.lane.b32.xlu0 %v390, 28
      %v886 = vpop.permute.xlu0 %885
      %887 = vrot.lane.b32.xlu0 %v391, 28
      %v888 = vpop.permute.xlu0 %887
      %889 = vrot.lane.b32.xlu0 %v392, 28
      %v890 = vpop.permute.xlu0 %889
      %891 = vrot.lane.b32.xlu0 %v393, 28
      %v892 = vpop.permute.xlu0 %891
      %893 = vrot.lane.b32.xlu0 %v394, 28
      %v894 = vpop.permute.xlu0 %893
      %895 = vrot.lane.b32.xlu0 0, 28
      %v896 = vpop.permute.xlu0 %895
      %897 = vrot.lane.b32.xlu0 %v595, 32
      %v898 = vpop.permute.xlu0 %897
      %899 = vrot.lane.b32.xlu0 %v596, 32
      %v900 = vpop.permute.xlu0 %899
      %901 = vrot.lane.b32.xlu0 %v597, 32
      %v902 = vpop.permute.xlu0 %901
      %903 = vrot.lane.b32.xlu0 %v598, 32
      %v904 = vpop.permute.xlu0 %903
      %905 = vrot.lane.b32.xlu0 %v599, 32
      %v906 = vpop.permute.xlu0 %905
      %907 = vrot.lane.b32.xlu0 %v600, 32
      %v908 = vpop.permute.xlu0 %907
      %909 = vrot.lane.b32.xlu0 %v601, 32
      %v910 = vpop.permute.xlu0 %909
      %911 = vrot.lane.b32.xlu0 %v602, 32
      %v912 = vpop.permute.xlu0 %911
      %913 = vrot.lane.b32.xlu0 %v603, 32
      %v914 = vpop.permute.xlu0 %913
      %915 = vrot.lane.b32.xlu0 %v604, 32
      %v916 = vpop.permute.xlu0 %915
      %917 = vrot.lane.b32.xlu0 %v605, 32
      %v918 = vpop.permute.xlu0 %917
      %919 = vrot.lane.b32.xlu0 %v606, 32
      %v920 = vpop.permute.xlu0 %919
      %921 = vrot.lane.b32.xlu0 %v607, 32
      %v922 = vpop.permute.xlu0 %921
      %923 = vrot.lane.b32.xlu0 %v608, 32
      %v924 = vpop.permute.xlu0 %923
      %925 = vrot.lane.b32.xlu0 %v621, 32
      %v926 = vpop.permute.xlu0 %925
      %927 = vrot.lane.b32.xlu0 %v593, 32
      %v928 = vpop.permute.xlu0 %927
      %vm929 = vcmask 31744
      %v932 = vsel %vm929, %v526, %v639
      %v935 = vsel %vm929, %v527, %v641
      %v938 = vsel %vm929, %v528, %v643
      %v941 = vsel %vm929, %v529, %v645
      %v944 = vsel %vm929, %v530, %v647
      %v947 = vsel %vm929, %v531, %v649
      %v950 = vsel %vm929, %v532, %v651
      %v953 = vsel %vm929, %v533, %v653
      %v956 = vsel %vm929, %v534, %v655
      %v959 = vsel %vm929, %v535, %v657
      %v962 = vsel %vm929, %v536, %v659
      %v965 = vsel %vm929, %v537, %v661
      %v968 = vsel %vm929, %v538, %v663
      %v971 = vsel %vm929, %v539, %v665
      %v974 = vsel %vm929, %v540, %v667
      %v977 = vsel %vm929, %v541, %v669
      %vm978 = vcmask 64512
      %v980 = vsel %vm978, %v932, %v687
      %v982 = vsel %vm978, %v935, %v689
      %v984 = vsel %vm978, %v938, %v691
      %v986 = vsel %vm978, %v941, %v693
      %v988 = vsel %vm978, %v944, %v695
      %v990 = vsel %vm978, %v947, %v697
      %v992 = vsel %vm978, %v950, %v699
      %v994 = vsel %vm978, %v953, %v701
      %v996 = vsel %vm978, %v956, %v703
      %v998 = vsel %vm978, %v959, %v705
      %v1000 = vsel %vm978, %v962, %v707
      %v1002 = vsel %vm978, %v965, %v709
      %v1004 = vsel %vm978, %v968, %v711
      %v1006 = vsel %vm978, %v971, %v713
      %v1008 = vsel %vm978, %v974, %v715
      %v1010 = vsel %vm978, %v977, %v717
      %vm1011 = vcmask 97280
      %v1013 = vsel %vm1011, %v980, %v735
      %v1015 = vsel %vm1011, %v982, %v737
      %v1017 = vsel %vm1011, %v984, %v739
      %v1019 = vsel %vm1011, %v986, %v741
      %v1021 = vsel %vm1011, %v988, %v743
      %v1023 = vsel %vm1011, %v990, %v745
      %v1025 = vsel %vm1011, %v992, %v747
      %v1027 = vsel %vm1011, %v994, %v749
      %v1029 = vsel %vm1011, %v996, %v751
      %v1031 = vsel %vm1011, %v998, %v753
      %v1033 = vsel %vm1011, %v1000, %v755
      %v1035 = vsel %vm1011, %v1002, %v757
      %v1037 = vsel %vm1011, %v1004, %v759
      %v1039 = vsel %vm1011, %v1006, %v761
      %v1041 = vsel %vm1011, %v1008, %v763
      %v1043 = vsel %vm1011, %v1010, %v765
      %vm1044 = vcmask 130048
      %v1046 = vsel %vm1044, %v1013, %v768
      %v1048 = vsel %vm1044, %v1015, %v770
      %v1050 = vsel %vm1044, %v1017, %v772
      %v1052 = vsel %vm1044, %v1019, %v774
      %v1054 = vsel %vm1044, %v1021, %v776
      %v1056 = vsel %vm1044, %v1023, %v778
      %v1058 = vsel %vm1044, %v1025, %v780
      %v1060 = vsel %vm1044, %v1027, %v782
      %v1062 = vsel %vm1044, %v1029, %v784
      %v1064 = vsel %vm1044, %v1031, %v786
      %v1066 = vsel %vm1044, %v1033, %v788
      %v1068 = vsel %vm1044, %v1035, %v790
      %v1070 = vsel %vm1044, %v1037, %v792
      %v1072 = vsel %vm1044, %v1039, %v794
      %v1074 = vsel %vm1044, %v1041, %v796
      %v1076 = vsel %vm1044, %v1043, %v798
      %vm1077 = vcmask 162816
      %v1079 = vsel %vm1077, %v1046, %v801
      %v1081 = vsel %vm1077, %v1048, %v803
      %v1083 = vsel %vm1077, %v1050, %v805
      %v1085 = vsel %vm1077, %v1052, %v807
      %v1087 = vsel %vm1077, %v1054, %v809
      %v1089 = vsel %vm1077, %v1056, %v811
      %v1091 = vsel %vm1077, %v1058, %v813
      %v1093 = vsel %vm1077, %v1060, %v815
      %v1095 = vsel %vm1077, %v1062, %v817
      %v1097 = vsel %vm1077, %v1064, %v819
      %v1099 = vsel %vm1077, %v1066, %v821
      %v1101 = vsel %vm1077, %v1068, %v823
      %v1103 = vsel %vm1077, %v1070, %v825
      %v1105 = vsel %vm1077, %v1072, %v827
      %v1107 = vsel %vm1077, %v1074, %v829
      %v1109 = vsel %vm1077, %v1076, %v831
      %vm1110 = vcmask 195584
      %v1112 = vsel %vm1110, %v1079, %v834
      %v1114 = vsel %vm1110, %v1081, %v836
      %v1116 = vsel %vm1110, %v1083, %v838
      %v1118 = vsel %vm1110, %v1085, %v840
      %v1120 = vsel %vm1110, %v1087, %v842
      %v1122 = vsel %vm1110, %v1089, %v844
      %v1124 = vsel %vm1110, %v1091, %v846
      %v1126 = vsel %vm1110, %v1093, %v848
      %v1128 = vsel %vm1110, %v1095, %v850
      %v1130 = vsel %vm1110, %v1097, %v852
      %v1132 = vsel %vm1110, %v1099, %v854
      %v1134 = vsel %vm1110, %v1101, %v856
      %v1136 = vsel %vm1110, %v1103, %v858
      %v1138 = vsel %vm1110, %v1105, %v860
      %v1140 = vsel %vm1110, %v1107, %v862
      %v1142 = vsel %vm1110, %v1109, %v864
      %vm1143 = vcmask 228352
      %v1145 = vsel %vm1143, %v1112, %v866
      %v1147 = vsel %vm1143, %v1114, %v868
      %v1149 = vsel %vm1143, %v1116, %v870
      %v1151 = vsel %vm1143, %v1118, %v872
      %v1153 = vsel %vm1143, %v1120, %v874
      %v1155 = vsel %vm1143, %v1122, %v876
      %v1157 = vsel %vm1143, %v1124, %v878
      %v1159 = vsel %vm1143, %v1126, %v880
      %v1161 = vsel %vm1143, %v1128, %v882
      %v1163 = vsel %vm1143, %v1130, %v884
      %v1165 = vsel %vm1143, %v1132, %v886
      %v1167 = vsel %vm1143, %v1134, %v888
      %v1169 = vsel %vm1143, %v1136, %v890
      %v1171 = vsel %vm1143, %v1138, %v892
      %v1173 = vsel %vm1143, %v1140, %v894
      %v1175 = vsel %vm1143, %v1142, %v896
      %vm1176 = vcmask 261120
      %v1178 = vsel %vm1176, %v1145, %v898
      %v1180 = vsel %vm1176, %v1147, %v900
      %v1182 = vsel %vm1176, %v1149, %v902
      %v1184 = vsel %vm1176, %v1151, %v904
      %v1186 = vsel %vm1176, %v1153, %v906
      %v1188 = vsel %vm1176, %v1155, %v908
      %v1190 = vsel %vm1176, %v1157, %v910
      %v1192 = vsel %vm1176, %v1159, %v912
      %v1194 = vsel %vm1176, %v1161, %v914
      %v1196 = vsel %vm1176, %v1163, %v916
      %v1198 = vsel %vm1176, %v1165, %v918
      %v1200 = vsel %vm1176, %v1167, %v920
      %v1202 = vsel %vm1176, %v1169, %v922
      %v1204 = vsel %vm1176, %v1171, %v924
      %v1206 = vsel %vm1176, %v1173, %v926
      %v1208 = vsel %vm1176, %v1175, %v928
      %v1209 = vld [vmem:[%s1] sm:$0xf]
      %v1210 = vld [vmem:[%s1 + $0x4] sm:$0xf]
      %v1211 = vld [vmem:[%s1 + $0x8] sm:$0xf]
      %v1212 = vld [vmem:[%s1 + $0xc] sm:$0xf]
      %v1213 = vld [vmem:[%s1 + $0x10] sm:$0x3]
      %v1219 = vunpack.c.l.b16 %v1209
      %v1220 = vunpack.c.l.b16 %v1210
      %v1221 = vunpack.c.l.b16 %v1211
      %v1222 = vunpack.c.l.b16 %v1212
      %v1223 = vunpack.c.l.b16 %v1213
      %v1224 = vpack.c.b16 %v1220, %v1219
      %v1225 = vpack.c.b16 %v1222, %v1221
      %v1226 = vpack.c.b16 %v1223, %v1223
      %vm1229 = vcmask 293888
      %v1230 = vsel %vm1229, %v1178, 0
      %v1232 = vsel %vm1229, %v1180, 0
      %v1234 = vsel %vm1229, %v1182, 0
      %v1236 = vsel %vm1229, %v1184, 0
      %v1238 = vsel %vm1229, %v1186, 0
      %v1240 = vsel %vm1229, %v1188, 0
      %v1242 = vsel %vm1229, %v1190, 0
      %v1244 = vsel %vm1229, %v1192, 0
      %v1246 = vsel %vm1229, %v1194, 0
      %v1248 = vsel %vm1229, %v1196, 0
      %v1250 = vsel %vm1229, %v1198, 0
      %v1252 = vsel %vm1229, %v1200, 0
      %v1254 = vsel %vm1229, %v1202, 0
      %v1256 = vsel %vm1229, %v1204, 0
      %v1258 = vsel %vm1229, %v1206, 0
      %v1260 = vsel %vm1229, %v1208, 0
      %vm1262 = vcmask 1041408
      %v1264 = vsel %vm1262, %v1226, 0
      %1266 = vmatprep.subr.bf16.mxu0 0
      %1267 = vmatpush1.bf16.msra.mxu0 %v1224
      %1268 = vmatprep.subr.bf16.mxu0 0
      %1269 = vmatpush1.bf16.msra.mxu0 %v1225
      %1270 = vmatprep.subr.bf16.mxu0 0
      %1271 = vmatpush1.bf16.msra.mxu0 %v1264
      %1272 = vmatprep.subr.bf16.mxu0 0
      %1273 = vmatpush1.bf16.msra.mxu0 0
      %1274 = vmatprep.subr.bf16.mxu0 0
      %1275 = vmatpush1.bf16.msra.mxu0 0
      %1276 = vmatprep.subr.bf16.mxu0 0
      %1277 = vmatpush1.bf16.msra.mxu0 0
      %1278 = vmatprep.subr.bf16.mxu0 0
      %1279 = vmatpush1.bf16.msra.mxu0 0
      %1280 = vmatprep.subr.bf16.mxu0 0
      %1281 = vmatpush1.bf16.msra.mxu0 0
      %1282 = vmatprep.subr.bf16.mxu0 0
      %1283 = vmatpush1.bf16.msra.mxu0 0
      %1284 = vmatprep.subr.bf16.mxu0 0
      %1285 = vmatpush1.bf16.msra.mxu0 0
      %1286 = vmatprep.subr.bf16.mxu0 0
      %1287 = vmatpush1.bf16.msra.mxu0 0
      %1288 = vmatprep.subr.bf16.mxu0 0
      %1289 = vmatpush1.bf16.msra.mxu0 0
      %1290 = vmatprep.subr.bf16.mxu0 0
      %1291 = vmatpush1.bf16.msra.mxu0 0
      %1292 = vmatprep.subr.bf16.mxu0 0
      %1293 = vmatpush1.bf16.msra.mxu0 0
      %1294 = vmatprep.subr.bf16.mxu0 0
      %1295 = vmatpush1.bf16.msra.mxu0 0
      %1296 = vmatprep.subr.bf16.mxu0 0
      %1297 = vmatpush1.bf16.msra.mxu0 0
      %1298 = vmatprep.mubr.bf16.mxu0 0
      %1299 = vmatmul.mubr.bf16.gmra.mrb[0].mxu0 %v1230
      %v1300 = vpop.f32.mrb[0].mxu0
      %v1301 = vadd.f32 0.0, %v1300
      %v1302 = vpop.f32.mrb[0].mxu0
      %v1303 = vpop.f32.mrb[0].mxu0
      %v1304 = vadd.f32 0.0, %v1303
      %v1305 = vpop.f32.mrb[0].mxu0
      %1306 = vmatprep.mubr.bf16.mxu0 0
      %1307 = vmatmul.mubr.bf16.gmra.mrb[0].mxu0 %v1232
      %v1308 = vpop.f32.mrb[0].mxu0
      %v1309 = vadd.f32 0.0, %v1308
      %v1310 = vpop.f32.mrb[0].mxu0
      %v1311 = vpop.f32.mrb[0].mxu0
      %v1312 = vadd.f32 0.0, %v1311
      %v1313 = vpop.f32.mrb[0].mxu0
      %1314 = vmatprep.mubr.bf16.mxu0 0
      %1315 = vmatmul.mubr.bf16.gmra.mrb[0].mxu0 %v1234
      %v1316 = vpop.f32.mrb[0].mxu0
      %v1317 = vadd.f32 0.0, %v1316
      %v1318 = vpop.f32.mrb[0].mxu0
      %v1319 = vpop.f32.mrb[0].mxu0
      %v1320 = vadd.f32 0.0, %v1319
      %v1321 = vpop.f32.mrb[0].mxu0
      %1322 = vmatprep.mubr.bf16.mxu0 0
      %1323 = vmatmul.mubr.bf16.gmra.mrb[0].mxu0 %v1236
      %v1324 = vpop.f32.mrb[0].mxu0
      %v1325 = vadd.f32 0.0, %v1324
      %v1326 = vpop.f32.mrb[0].mxu0
      %v1327 = vpop.f32.mrb[0].mxu0
      %v1328 = vadd.f32 0.0, %v1327
      %v1329 = vpop.f32.mrb[0].mxu0
      %1330 = vmatprep.mubr.bf16.mxu0 0
      %1331 = vmatmul.mubr.bf16.gmra.mrb[0].mxu0 %v1238
      %v1332 = vpop.f32.mrb[0].mxu0
      %v1333 = vadd.f32 0.0, %v1332
      %v1334 = vpop.f32.mrb[0].mxu0
      %v1335 = vpop.f32.mrb[0].mxu0
      %v1336 = vadd.f32 0.0, %v1335
      %v1337 = vpop.f32.mrb[0].mxu0
      %1338 = vmatprep.mubr.bf16.mxu0 0
      %1339 = vmatmul.mubr.bf16.gmra.mrb[0].mxu0 %v1240
      %v1340 = vpop.f32.mrb[0].mxu0
      %v1341 = vadd.f32 0.0, %v1340
      %v1342 = vpop.f32.mrb[0].mxu0
      %v1343 = vpop.f32.mrb[0].mxu0
      %v1344 = vadd.f32 0.0, %v1343
      %v1345 = vpop.f32.mrb[0].mxu0
      %1346 = vmatprep.mubr.bf16.mxu0 0
      %1347 = vmatmul.mubr.bf16.gmra.mrb[0].mxu0 %v1242
      %v1348 = vpop.f32.mrb[0].mxu0
      %v1349 = vadd.f32 0.0, %v1348
      %v1350 = vpop.f32.mrb[0].mxu0
      %v1351 = vpop.f32.mrb[0].mxu0
      %v1352 = vadd.f32 0.0, %v1351
      %v1353 = vpop.f32.mrb[0].mxu0
      %1354 = vmatprep.mubr.bf16.mxu0 0
      %1355 = vmatmul.mubr.bf16.gmra.mrb[0].mxu0 %v1244
      %v1356 = vpop.f32.mrb[0].mxu0
      %v1357 = vadd.f32 0.0, %v1356
      %v1358 = vpop.f32.mrb[0].mxu0
      %v1359 = vpop.f32.mrb[0].mxu0
      %v1360 = vadd.f32 0.0, %v1359
      %v1361 = vpop.f32.mrb[0].mxu0
      %1362 = vmatprep.mubr.bf16.mxu0 0
      %1363 = vmatmul.mubr.bf16.gmra.mrb[0].mxu0 %v1246
      %v1364 = vpop.f32.mrb[0].mxu0
      %v1365 = vadd.f32 0.0, %v1364
      %v1366 = vpop.f32.mrb[0].mxu0
      %v1367 = vpop.f32.mrb[0].mxu0
      %v1368 = vadd.f32 0.0, %v1367
      %v1369 = vpop.f32.mrb[0].mxu0
      %1370 = vmatprep.mubr.bf16.mxu0 0
      %1371 = vmatmul.mubr.bf16.gmra.mrb[0].mxu0 %v1248
      %v1372 = vpop.f32.mrb[0].mxu0
      %v1373 = vadd.f32 0.0, %v1372
      %v1374 = vpop.f32.mrb[0].mxu0
      %v1375 = vpop.f32.mrb[0].mxu0
      %v1376 = vadd.f32 0.0, %v1375
      %v1377 = vpop.f32.mrb[0].mxu0
      %1378 = vmatprep.mubr.bf16.mxu0 0
      %1379 = vmatmul.mubr.bf16.gmra.mrb[0].mxu0 %v1250
      %v1380 = vpop.f32.mrb[0].mxu0
      %v1381 = vadd.f32 0.0, %v1380
      %v1382 = vpop.f32.mrb[0].mxu0
      %v1383 = vpop.f32.mrb[0].mxu0
      %v1384 = vadd.f32 0.0, %v1383
      %v1385 = vpop.f32.mrb[0].mxu0
      %1386 = vmatprep.mubr.bf16.mxu0 0
      %1387 = vmatmul.mubr.bf16.gmra.mrb[0].mxu0 %v1252
      %v1388 = vpop.f32.mrb[0].mxu0
      %v1389 = vadd.f32 0.0, %v1388
      %v1390 = vpop.f32.mrb[0].mxu0
      %v1391 = vpop.f32.mrb[0].mxu0
      %v1392 = vadd.f32 0.0, %v1391
      %v1393 = vpop.f32.mrb[0].mxu0
      %1394 = vmatprep.mubr.bf16.mxu0 0
      %1395 = vmatmul.mubr.bf16.gmra.mrb[0].mxu0 %v1254
      %v1396 = vpop.f32.mrb[0].mxu0
      %v1397 = vadd.f32 0.0, %v1396
      %v1398 = vpop.f32.mrb[0].mxu0
      %v1399 = vpop.f32.mrb[0].mxu0
      %v1400 = vadd.f32 0.0, %v1399
      %v1401 = vpop.f32.mrb[0].mxu0
      %1402 = vmatprep.mubr.bf16.mxu0 0
      %1403 = vmatmul.mubr.bf16.gmra.mrb[0].mxu0 %v1256
      %v1404 = vpop.f32.mrb[0].mxu0
      %v1405 = vadd.f32 0.0, %v1404
      %v1406 = vpop.f32.mrb[0].mxu0
      %v1407 = vpop.f32.mrb[0].mxu0
      %v1408 = vadd.f32 0.0, %v1407
      %v1409 = vpop.f32.mrb[0].mxu0
      %1410 = vmatprep.mubr.bf16.mxu0 0
      %1411 = vmatmul.mubr.bf16.gmra.mrb[0].mxu0 %v1258
      %v1412 = vpop.f32.mrb[0].mxu0
      %v1413 = vadd.f32 0.0, %v1412
      %v1414 = vpop.f32.mrb[0].mxu0
      %v1415 = vpop.f32.mrb[0].mxu0
      %v1416 = vadd.f32 0.0, %v1415
      %v1417 = vpop.f32.mrb[0].mxu0
      %1418 = vmatprep.mubr.bf16.mxu0 0
      %1419 = vmatmul.mubr.bf16.gmra.mrb[0].mxu0 %v1260
      %v1420 = vpop.f32.mrb[0].mxu0
      %v1421 = vadd.f32 0.0, %v1420
      %v1422 = vpop.f32.mrb[0].mxu0
      %v1423 = vpop.f32.mrb[0].mxu0
      %v1424 = vadd.f32 0.0, %v1423
      %v1425 = vpop.f32.mrb[0].mxu0
      %1426 = vdwg.mxu0
      %1427 = vst.msk [vmem:[%s231] sm:$0xff] %vm929, %v1301
      %1428 = vst.msk [vmem:[%s231 + $0x8] sm:$0xff] %vm929, %v1304
      %1429 = vst.msk [vmem:[%s231 + $0x10] sm:$0xff] %vm929, %v1309
      %1430 = vst.msk [vmem:[%s231 + $0x18] sm:$0xff] %vm929, %v1312
      %1431 = vst.msk [vmem:[%s231 + $0x20] sm:$0xff] %vm929, %v1317
      %1432 = vst.msk [vmem:[%s231 + $0x28] sm:$0xff] %vm929, %v1320
      %1433 = vst.msk [vmem:[%s231 + $0x30] sm:$0xff] %vm929, %v1325
      %1434 = vst.msk [vmem:[%s231 + $0x38] sm:$0xff] %vm929, %v1328
      %1435 = vst.msk [vmem:[%s231 + $0x40] sm:$0xff] %vm929, %v1333
      %1436 = vst.msk [vmem:[%s231 + $0x48] sm:$0xff] %vm929, %v1336
      %1437 = vst.msk [vmem:[%s231 + $0x50] sm:$0xff] %vm929, %v1341
      %1438 = vst.msk [vmem:[%s231 + $0x58] sm:$0xff] %vm929, %v1344
      %1439 = vst.msk [vmem:[%s231 + $0x60] sm:$0xff] %vm929, %v1349
      %1440 = vst.msk [vmem:[%s231 + $0x68] sm:$0xff] %vm929, %v1352
      %1441 = vst.msk [vmem:[%s231 + $0x70] sm:$0xff] %vm929, %v1357
      %1442 = vst.msk [vmem:[%s231 + $0x78] sm:$0xff] %vm929, %v1360
      %1443 = vst.msk [vmem:[%s231 + $0x80] sm:$0xff] %vm929, %v1365
      %1444 = vst.msk [vmem:[%s231 + $0x88] sm:$0xff] %vm929, %v1368
      %1445 = vst.msk [vmem:[%s231 + $0x90] sm:$0xff] %vm929, %v1373
      %1446 = vst.msk [vmem:[%s231 + $0x98] sm:$0xff] %vm929, %v1376
      %1447 = vst.msk [vmem:[%s231 + $0xa0] sm:$0xff] %vm929, %v1381
      %1448 = vst.msk [vmem:[%s231 + $0xa8] sm:$0xff] %vm929, %v1384
      %1449 = vst.msk [vmem:[%s231 + $0xb0] sm:$0xff] %vm929, %v1389
      %1450 = vst.msk [vmem:[%s231 + $0xb8] sm:$0xff] %vm929, %v1392
      %1451 = vst.msk [vmem:[%s231 + $0xc0] sm:$0xff] %vm929, %v1397
      %1452 = vst.msk [vmem:[%s231 + $0xc8] sm:$0xff] %vm929, %v1400
      %1453 = vst.msk [vmem:[%s231 + $0xd0] sm:$0xff] %vm929, %v1405
      %1454 = vst.msk [vmem:[%s231 + $0xd8] sm:$0xff] %vm929, %v1408
      %1455 = vst.msk [vmem:[%s231 + $0xe0] sm:$0xff] %vm929, %v1413
      %1456 = vst.msk [vmem:[%s231 + $0xe8] sm:$0xff] %vm929, %v1416
      %1457 = vst.msk [vmem:[%s231 + $0xf0] sm:$0xff] %vm929, %v1421
      %1458 = vst.msk [vmem:[%s231 + $0xf8] sm:$0xff] %vm929, %v1424
      %v1459 = vsel %vm929, %v1301, 0.0
      %v1460 = vsel %vm929, %v1304, 0.0
      %v1461 = vadd.f32 %v1459, %v1460
      %v1462 = vsel %vm929, %v1309, 0.0
      %v1463 = vadd.f32 %v1461, %v1462
      %v1464 = vsel %vm929, %v1312, 0.0
      %v1465 = vadd.f32 %v1463, %v1464
      %v1466 = vsel %vm929, %v1317, 0.0
      %v1467 = vadd.f32 %v1465, %v1466
      %v1468 = vsel %vm929, %v1320, 0.0
      %v1469 = vadd.f32 %v1467, %v1468
      %v1470 = vsel %vm929, %v1325, 0.0
      %v1471 = vadd.f32 %v1469, %v1470
      %v1472 = vsel %vm929, %v1328, 0.0
      %v1473 = vadd.f32 %v1471, %v1472
      %v1474 = vsel %vm929, %v1333, 0.0
      %v1475 = vadd.f32 %v1473, %v1474
      %v1476 = vsel %vm929, %v1336, 0.0
      %v1477 = vadd.f32 %v1475, %v1476
      %v1478 = vsel %vm929, %v1341, 0.0
      %v1479 = vadd.f32 %v1477, %v1478
      %v1480 = vsel %vm929, %v1344, 0.0
      %v1481 = vadd.f32 %v1479, %v1480
      %v1482 = vsel %vm929, %v1349, 0.0
      %v1483 = vadd.f32 %v1481, %v1482
      %v1484 = vsel %vm929, %v1352, 0.0
      %v1485 = vadd.f32 %v1483, %v1484
      %v1486 = vsel %vm929, %v1357, 0.0
      %v1487 = vadd.f32 %v1485, %v1486
      %v1488 = vsel %vm929, %v1360, 0.0
      %v1489 = vadd.f32 %v1487, %v1488
      %v1490 = vsel %vm929, %v1365, 0.0
      %v1491 = vadd.f32 %v1489, %v1490
      %v1492 = vsel %vm929, %v1368, 0.0
      %v1493 = vadd.f32 %v1491, %v1492
      %v1494 = vsel %vm929, %v1373, 0.0
      %v1495 = vadd.f32 %v1493, %v1494
      %v1496 = vsel %vm929, %v1376, 0.0
      %v1497 = vadd.f32 %v1495, %v1496
      %v1498 = vsel %vm929, %v1381, 0.0
      %v1499 = vadd.f32 %v1497, %v1498
      %v1500 = vsel %vm929, %v1384, 0.0
      %v1501 = vadd.f32 %v1499, %v1500
      %v1502 = vsel %vm929, %v1389, 0.0
      %v1503 = vadd.f32 %v1501, %v1502
      %v1504 = vsel %vm929, %v1392, 0.0
      %v1505 = vadd.f32 %v1503, %v1504
      %v1506 = vsel %vm929, %v1397, 0.0
      %v1507 = vadd.f32 %v1505, %v1506
      %v1508 = vsel %vm929, %v1400, 0.0
      %v1509 = vadd.f32 %v1507, %v1508
      %v1510 = vsel %vm929, %v1405, 0.0
      %v1511 = vadd.f32 %v1509, %v1510
      %v1512 = vsel %vm929, %v1408, 0.0
      %v1513 = vadd.f32 %v1511, %v1512
      %v1514 = vsel %vm929, %v1413, 0.0
      %v1515 = vadd.f32 %v1513, %v1514
      %v1516 = vsel %vm929, %v1416, 0.0
      %v1517 = vadd.f32 %v1515, %v1516
      %v1518 = vsel %vm929, %v1421, 0.0
      %v1519 = vadd.f32 %v1517, %v1518
      %v1520 = vsel %vm929, %v1424, 0.0
      %v1521 = vadd.f32 %v1519, %v1520
      %v1522 = vrot.slane %v1521, 4
      %v1523 = vadd.f32 %v1521, %v1522
      %v1524 = vrot.slane %v1523, 2
      %v1525 = vadd.f32 %v1523, %v1524
      %v1526 = vrot.slane %v1525, 1
      %v1527 = vadd.f32 %v1525, %v1526
      %v1528 = vmul.f32 %v1301, %v1301
      %v1529 = vmul.f32 %v1304, %v1304
      %v1530 = vmul.f32 %v1309, %v1309
      %v1531 = vmul.f32 %v1312, %v1312
      %v1532 = vmul.f32 %v1317, %v1317
      %v1533 = vmul.f32 %v1320, %v1320
      %v1534 = vmul.f32 %v1325, %v1325
      %v1535 = vmul.f32 %v1328, %v1328
      %v1536 = vmul.f32 %v1333, %v1333
      %v1537 = vmul.f32 %v1336, %v1336
      %v1538 = vmul.f32 %v1341, %v1341
      %v1539 = vmul.f32 %v1344, %v1344
      %v1540 = vmul.f32 %v1349, %v1349
      %v1541 = vmul.f32 %v1352, %v1352
      %v1542 = vmul.f32 %v1357, %v1357
      %v1543 = vmul.f32 %v1360, %v1360
      %v1544 = vmul.f32 %v1365, %v1365
      %v1545 = vmul.f32 %v1368, %v1368
      %v1546 = vmul.f32 %v1373, %v1373
      %v1547 = vmul.f32 %v1376, %v1376
      %v1548 = vmul.f32 %v1381, %v1381
      %v1549 = vmul.f32 %v1384, %v1384
      %v1550 = vmul.f32 %v1389, %v1389
      %v1551 = vmul.f32 %v1392, %v1392
      %v1552 = vmul.f32 %v1397, %v1397
      %v1553 = vmul.f32 %v1400, %v1400
      %v1554 = vmul.f32 %v1405, %v1405
      %v1555 = vmul.f32 %v1408, %v1408
      %v1556 = vmul.f32 %v1413, %v1413
      %v1557 = vmul.f32 %v1416, %v1416
      %v1558 = vmul.f32 %v1421, %v1421
      %v1559 = vmul.f32 %v1424, %v1424
      %v1560 = vsel %vm929, %v1528, 0.0
      %v1561 = vsel %vm929, %v1529, 0.0
      %v1562 = vadd.f32 %v1560, %v1561
      %v1563 = vsel %vm929, %v1530, 0.0
      %v1564 = vadd.f32 %v1562, %v1563
      %v1565 = vsel %vm929, %v1531, 0.0
      %v1566 = vadd.f32 %v1564, %v1565
      %v1567 = vsel %vm929, %v1532, 0.0
      %v1568 = vadd.f32 %v1566, %v1567
      %v1569 = vsel %vm929, %v1533, 0.0
      %v1570 = vadd.f32 %v1568, %v1569
      %v1571 = vsel %vm929, %v1534, 0.0
      %v1572 = vadd.f32 %v1570, %v1571
      %v1573 = vsel %vm929, %v1535, 0.0
      %v1574 = vadd.f32 %v1572, %v1573
      %v1575 = vsel %vm929, %v1536, 0.0
      %v1576 = vadd.f32 %v1574, %v1575
      %v1577 = vsel %vm929, %v1537, 0.0
      %v1578 = vadd.f32 %v1576, %v1577
      %v1579 = vsel %vm929, %v1538, 0.0
      %v1580 = vadd.f32 %v1578, %v1579
      %v1581 = vsel %vm929, %v1539, 0.0
      %v1582 = vadd.f32 %v1580, %v1581
      %v1583 = vsel %vm929, %v1540, 0.0
      %v1584 = vadd.f32 %v1582, %v1583
      %v1585 = vsel %vm929, %v1541, 0.0
      %v1586 = vadd.f32 %v1584, %v1585
      %v1587 = vsel %vm929, %v1542, 0.0
      %v1588 = vadd.f32 %v1586, %v1587
      %v1589 = vsel %vm929, %v1543, 0.0
      %v1590 = vadd.f32 %v1588, %v1589
      %v1591 = vsel %vm929, %v1544, 0.0
      %v1592 = vadd.f32 %v1590, %v1591
      %v1593 = vsel %vm929, %v1545, 0.0
      %v1594 = vadd.f32 %v1592, %v1593
      %v1595 = vsel %vm929, %v1546, 0.0
      %v1596 = vadd.f32 %v1594, %v1595
      %v1597 = vsel %vm929, %v1547, 0.0
      %v1598 = vadd.f32 %v1596, %v1597
      %v1599 = vsel %vm929, %v1548, 0.0
      %v1600 = vadd.f32 %v1598, %v1599
      %v1601 = vsel %vm929, %v1549, 0.0
      %v1602 = vadd.f32 %v1600, %v1601
      %v1603 = vsel %vm929, %v1550, 0.0
      %v1604 = vadd.f32 %v1602, %v1603
      %v1605 = vsel %vm929, %v1551, 0.0
      %v1606 = vadd.f32 %v1604, %v1605
      %v1607 = vsel %vm929, %v1552, 0.0
      %v1608 = vadd.f32 %v1606, %v1607
      %v1609 = vsel %vm929, %v1553, 0.0
      %v1610 = vadd.f32 %v1608, %v1609
      %v1611 = vsel %vm929, %v1554, 0.0
      %v1612 = vadd.f32 %v1610, %v1611
      %v1613 = vsel %vm929, %v1555, 0.0
      %v1614 = vadd.f32 %v1612, %v1613
      %v1615 = vsel %vm929, %v1556, 0.0
      %v1616 = vadd.f32 %v1614, %v1615
      %v1617 = vsel %vm929, %v1557, 0.0
      %v1618 = vadd.f32 %v1616, %v1617
      %v1619 = vsel %vm929, %v1558, 0.0
      %v1620 = vadd.f32 %v1618, %v1619
      %v1621 = vsel %vm929, %v1559, 0.0
      %v1622 = vadd.f32 %v1620, %v1621
      %v1623 = vrot.slane %v1622, 4
      %v1624 = vadd.f32 %v1622, %v1623
      %v1625 = vrot.slane %v1624, 2
      %v1626 = vadd.f32 %v1624, %v1625
      %v1627 = vrot.slane %v1626, 1
      %v1628 = vadd.f32 %v1626, %v1627
      %vm1629 = vcmask 1040384
      %v1630 = vsel %vm1629, %v1527, %v1628
      %vm1631 = vcmask 25600
      %1632 = vst.msk [vmem:[%s235] sm:$0x3] %vm1631, %v1630
      %p1633 = scmp.lt.s32.totalorder %s17, 1
      %s1634 = scalar_select %p1633, %s17, 1
      %s1635 = smul.addr %s1634, 32
      %s1636 = smul.addr %s1635, 8
      %s1637 = scalar_lea.vmem %s4, %s1636
      %p1638 = scmp.lt.s32.totalorder %s17, 1
      %s1639 = scalar_select %p1638, %s17, 1
      %s1640 = smul.addr %s1639, 2
      %s1641 = scalar_lea.vmem %s5, %s1640
      // Predicated region
      $region37: #{bottleneck_forward_nhwc.5} parent=35 // pred_check
        %p1642 = pneg %p124
      $region38: #{bottleneck_forward_nhwc.5} parent=35 // pred_check_branch
        %1644 = sbr.rel (%p1642) target = $region40
      $region39: #{bottleneck_forward_nhwc.5} parent=35 // pred_region
        _
      $region40: #{bottleneck_forward_nhwc.5} parent=35 // pred_fallthru
        _
      // Predicated region
      $region41: #{bottleneck_forward_nhwc.5} parent=35 // pred_check
        %p1645 = pneg %p150
      $region42: #{bottleneck_forward_nhwc.5} parent=35 // pred_check_branch
        %1647 = sbr.rel (%p1645) target = $region44
      $region43: #{bottleneck_forward_nhwc.5} parent=35 // pred_region
        _
      $region44: #{bottleneck_forward_nhwc.5} parent=35 // pred_fallthru
        _
    $region36: #{bottleneck_forward_nhwc.5} parent=5 // pred_fallthru
      _
    %p1648 = scmp.le.s32.totalorder 2, %s12
    // Predicated region
    $region45: #{bottleneck_forward_nhwc.5} parent=5 // pred_check
      %p1649 = pneg %p1648
    $region46: #{bottleneck_forward_nhwc.5} parent=5 // pred_check_branch
      %1651 = sbr.rel (%p1649) target = $region48
    $region47: #{bottleneck_forward_nhwc.5} parent=5 // pred_region
      %s1652 = ssub.s32 %s12, 2
      // Predicated region
      $region49: #{bottleneck_forward_nhwc.5} parent=47 // pred_check
        %p1653 = pneg %p130
      $region50: #{bottleneck_forward_nhwc.5} parent=47 // pred_check_branch
        %1655 = sbr.rel (%p1653) target = $region52
      $region51: #{bottleneck_forward_nhwc.5} parent=47 // pred_region
        %p1656 = scmp.lt.s32.totalorder %s18, 1
        %s1657 = scalar_select %p1656, %s18, 1
        %s1658 = smul.addr %s1657, 32
        %s1659 = smul.addr %s1658, 8
        %s1660 = scalar_lea.vmem %s4, %s1659
      $region52: #{bottleneck_forward_nhwc.5} parent=47 // pred_fallthru
        _
      // Predicated region
      $region53: #{bottleneck_forward_nhwc.5} parent=47 // pred_check
        %p1661 = pneg %p156
      $region54: #{bottleneck_forward_nhwc.5} parent=47 // pred_check_branch
        %1663 = sbr.rel (%p1661) target = $region56
      $region55: #{bottleneck_forward_nhwc.5} parent=47 // pred_region
        %p1664 = scmp.lt.s32.totalorder %s18, 1
        %s1665 = scalar_select %p1664, %s18, 1
        %s1666 = smul.addr %s1665, 2
        %s1667 = scalar_lea.vmem %s5, %s1666
      $region56: #{bottleneck_forward_nhwc.5} parent=47 // pred_fallthru
        _
    $region48: #{bottleneck_forward_nhwc.5} parent=5 // pred_fallthru
      _
  $region6: #{bottleneck_forward_nhwc.5} parent=0 // loop_footer
    %s16 = sadd.s32 1, %s12
  $region7: #{bottleneck_forward_nhwc.5} parent=0 // loop_footer_branch
    %11 = sbr.rel target = $region3
  $region8: #{bottleneck_forward_nhwc.5} parent=0 // loop_exit
    _

</llo_original>
